<compile_context>
chip_gen: v6e
topology: v6e:2x2x1
jax: 0.10.0
libtpu: 0.0.40
codegen_flags: <defaults>
</compile_context>

<pallas_src>
import functools

import jax
import jax.numpy as jnp
import numpy as np
from jax.experimental import pallas as pl
from jax.experimental.pallas import tpu as pltpu


# ----------------------------------------------------------------------------
# Polyphase "source taps": on the 2x-upsampled grid the 3x3 conv reads, per
# axis, one of four (source_parity rp, low-res offset ah) combinations, each
# consumed by the listed output parities.  conv tap index kh = 2*ah + rp + 1 - ph
_TAPS = (
    (1, -1, (0,)),
    (0, 0, (0, 1)),
    (1, 0, (0, 1)),
    (0, 1, (1,)),
)


def _enumerate_windows():
    wins = []
    counters = {1: 0, 2: 0, 4: 0}
    for (rp, ah, phs) in _TAPS:
        for (cp, aw, pws) in _TAPS:
            m = len(phs) * len(pws)
            wins.append((rp, ah, phs, cp, aw, pws, m, counters[m]))
            counters[m] += 1
    return tuple(wins)


_WINDOWS = _enumerate_windows()                       # 16 windows, 36 taps total
_N_WIN = {m: sum(1 for w in _WINDOWS if w[6] == m) for m in (1, 2, 4)}  # 4/8/4


# ------------------------------ fused kernel --------------------------------

def _make_up_kernel(tH, W, C2, Cout, Cpad):
    """tH = low-res rows per grid step; W = low-res width; output rows = 2*tH."""

    def kernel(x1a_ref, x2r_ref, wf1_ref, wf2_ref, wf4_ref, b_ref,
               o_ref, z_ref, acc_ref):
        # x1a_ref : (1, H, W, C1aug)        bf16  [x1 | ones | zero-pad] channels
        # x2r_ref : (1, H, 2, W, 2*C2)      bf16  polyphase view of x2
        # wf*_ref : (n, Cpad, m*Cout)       bf16  folded weights per window group
        # b_ref   : (1, Cout)               f32   conv bias
        # o_ref   : (1, tH, 2, W, 2*Cout)   f32   polyphase output rows of tile
        # z_ref   : (2, 2, tH+2, W+2, Cpad) bf16  zero-halo polyphase feature map
        # acc_ref : (2, 2, tH*W, Cout)      f32   per-parity accumulators

        t = pl.program_id(1)
        n_tiles = pl.num_programs(1)
        row0 = pl.multiple_of(t * tH, tH)

        # ---- halo strips: zeroed EVERY step (megacore-safe); interior rows
        # ---- are fully overwritten below, so no full-scratch memset is needed.
        zrow = jnp.zeros((1, W + 2, Cpad), jnp.bfloat16)
        zcol = jnp.zeros((tH + 2, 1, Cpad), jnp.bfloat16)
        for rp in range(2):
            for cp in range(2):
                z_ref[rp, cp, 0:1, :, :] = zrow
                z_ref[rp, cp, tH + 1:tH + 2, :, :] = zrow
                z_ref[rp, cp, :, 0:1, :] = zcol
                z_ref[rp, cp, :, W + 1:W + 2, :] = zcol

        # ---- interior rows of this tile: [x2(rp,cp) | x1 | 1 | 0] -----------
        x1_rows = x1a_ref[0, pl.ds(row0, tH), :, :]            # (tH, W, C1aug) bf16
        for rp in range(2):
            for cp in range(2):
                z_ref[rp, cp, 1:tH + 1, 1:W + 1, :C2] = (
                    x2r_ref[0, pl.ds(row0, tH), rp, :, cp * C2:(cp + 1) * C2])
                z_ref[rp, cp, 1:tH + 1, 1:W + 1, C2:] = x1_rows

        # ---- row halos: real neighbour rows inside the image, zero at border.
        @pl.when(t > 0)
        def _top_halo():
            xr = x1a_ref[0, pl.ds(row0 - 1, 1), :, :]          # (1, W, C1aug)
            for rp in range(2):
                for cp in range(2):
                    z_ref[rp, cp, 0:1, 1:W + 1, :C2] = (
                        x2r_ref[0, pl.ds(row0 - 1, 1), rp, :,
                                cp * C2:(cp + 1) * C2])
                    z_ref[rp, cp, 0:1, 1:W + 1, C2:] = xr

        @pl.when(t < n_tiles - 1)
        def _bottom_halo():
            xr = x1a_ref[0, pl.ds(row0 + tH, 1), :, :]
            for rp in range(2):
                for cp in range(2):
                    z_ref[rp, cp, tH + 1:tH + 2, 1:W + 1, :C2] = (
                        x2r_ref[0, pl.ds(row0 + tH, 1), rp, :,
                                cp * C2:(cp + 1) * C2])
                    z_ref[rp, cp, tH + 1:tH + 2, 1:W + 1, C2:] = xr

        # ---- init accumulators with the conv bias (broadcast hoisted) -------
        bias_full = jnp.broadcast_to(b_ref[...], (tH * W, Cout)).astype(jnp.float32)
        for ph in range(2):
            for pw in range(2):
                acc_ref[ph, pw] = bias_full

        # ---- 16 shared windows x up-to-4 output parities (36 taps total) ----
        wf_refs = {1: wf1_ref, 2: wf2_ref, 4: wf4_ref}
        for (rp, ah, phs, cp, aw, pws, m, slot) in _WINDOWS:
            win = z_ref[rp, cp, 1 + ah:1 + ah + tH, 1 + aw:1 + aw + W, :]
            win2 = win.reshape(tH * W, Cpad)                   # bf16 (M, K)
            wblk = wf_refs[m][slot]                            # bf16 (K, m*Cout)
            res = jnp.dot(win2, wblk, preferred_element_type=jnp.float32)
            j = 0
            for ph in phs:
                for pw in pws:
                    acc_ref[ph, pw] += res[:, j * Cout:(j + 1) * Cout]
                    j += 1

        # ---- ReLU + store both column parities at once -----------------------
        for ph in range(2):
            a0 = jnp.maximum(acc_ref[ph, 0], 0.0).reshape(tH, W, Cout)
            a1 = jnp.maximum(acc_ref[ph, 1], 0.0).reshape(tH, W, Cout)
            o_ref[0, :, ph, :, :] = jnp.concatenate(
                [a0, a1], axis=-1).astype(o_ref.dtype)

    return kernel


# --------------------------- weight preprocessing ---------------------------

def _fold_weights(wt, bt, wc, C1, C2, Cout, Cpad):
    """Fold ConvTranspose2d(C1,C1,2,2) analytically into the 3x3 conv weights.

    Returns three f32 arrays, grouped by how many output parities share each of
    the 16 distinct polyphase windows:
        wf1: (4, Cpad, Cout), wf2: (8, Cpad, 2*Cout), wf4: (4, Cpad, 4*Cout)
    Rows multiply the z channels [x2 | x1 | 1 | zero-pad].  All folding math is
    f32; the caller casts to bf16 once at the end.
    """
    Caug = C2 + C1 + 1
    wc2 = wc[:, :C2]          # (Cout, C2, 3, 3)  skip-connection channels
    wc1 = wc[:, C2:]          # (Cout, C1, 3, 3)  upsampled-x1 channels
    wfs = {m: jnp.zeros((_N_WIN[m], Cpad, m * Cout), jnp.float32)
           for m in (1, 2, 4)}
    for (rp, ah, phs, cp, aw, pws, m, slot) in _WINDOWS:
        j = 0
        for ph in phs:
            kh = 2 * ah + rp + 1 - ph
            for pw in pws:
                kw = 2 * aw + cp + 1 - pw
                top = wc2[:, :, kh, kw].T                       # (C2, Cout)
                mid = wt[:, :, rp, cp] @ wc1[:, :, kh, kw].T    # (C1, Cout)
                bot = (bt @ wc1[:, :, kh, kw].T)[None, :]       # (1, Cout)
                col = jnp.concatenate([top, mid, bot], axis=0)  # (Caug, Cout)
                wfs[m] = wfs[m].at[slot, :Caug, j * Cout:(j + 1) * Cout].set(col)
                j += 1
    return wfs[1], wfs[2], wfs[4]


# ------------------------------ forward wrapper ------------------------------

def up_forward(x1_nchw, x2_nchw, wt, bt, wc, bc, *, row_tile=8):
    """Fused Up.forward: ReLU(Conv3x3(cat([x2, ConvT2x2s2(x1)], ch))). NCHW."""
    N, C1, H, W = x1_nchw.shape
    N2, C2, H2, W2 = x2_nchw.shape
    Cout = wc.shape[0]
    assert N2 == N and wc.shape[1] == C1 + C2
    # TODO(synk): general diffY/diffX padding when x2 is not exactly 2x x1.
    assert (H2, W2) == (2 * H, 2 * W)

    Caug = C2 + C1 + 1
    Cpad = -(-Caug // 8) * 8           # augmented channels, sublane-aligned
    C1aug = Cpad - C2                  # x1 + ones + zero-pad channels

    tH = min(row_tile, H)
    while H % tH:
        tH -= 1
    n_tiles = H // tH

    # NCHW (PyTorch boundary) -> NHWC (channels on lanes).
    # TODO(synk): in a fully NHWC model these transposes would be fused away.
    x1 = jnp.transpose(x1_nchw, (0, 2, 3, 1))                   # (N, H, W, C1)
    x2 = jnp.transpose(x2_nchw, (0, 2, 3, 1))                   # (N, 2H, 2W, C2)
    ones = jnp.ones((N, H, W, 1), x1.dtype)
    zpad = jnp.zeros((N, H, W, C1aug - C1 - 1), x1.dtype)
    x1a = jnp.concatenate([x1, ones, zpad], axis=-1).astype(jnp.bfloat16)
    # Polyphase view of x2 (free row-major reshape):
    #   x2r[n,h,rp,w,cp*C2+c] = x2[n,2h+rp,2w+cp,c]
    x2r = x2.astype(jnp.bfloat16).reshape(N, H, 2, W, 2 * C2)

    wf1, wf2, wf4 = _fold_weights(wt.astype(jnp.float32), bt.astype(jnp.float32),
                                  wc.astype(jnp.float32), C1, C2, Cout, Cpad)
    wf1 = wf1.astype(jnp.bfloat16)
    wf2 = wf2.astype(jnp.bfloat16)
    wf4 = wf4.astype(jnp.bfloat16)
    bc2 = bc.reshape(1, Cout).astype(jnp.float32)

    # ---- explicit VMEM budget (double-buffered blocks + scratch, headroom) --
    def vbytes(shape, dtype):
        it = np.dtype(dtype).itemsize
        sub = 32 // it
        lead = int(np.prod(shape[:-2])) if len(shape) > 2 else 1
        return lead * (-(-shape[-2] // sub) * sub) * (-(-shape[-1] // 128) * 128) * it

    blocks = (vbytes((1, H, W, C1aug), jnp.bfloat16)
              + vbytes((1, H, 2, W, 2 * C2), jnp.bfloat16)
              + vbytes(wf1.shape, jnp.bfloat16) + vbytes(wf2.shape, jnp.bfloat16)
              + vbytes(wf4.shape, jnp.bfloat16) + vbytes((1, Cout), jnp.float32)
              + vbytes((1, tH, 2, W, 2 * Cout), jnp.float32))
    scratch = (vbytes((2, 2, tH + 2, W + 2, Cpad), jnp.bfloat16)
               + vbytes((2, 2, tH * W, Cout), jnp.float32))
    vmem_limit = max(16 << 20, min(int(2.5 * blocks) + scratch + (2 << 20),
                                   100 << 20))

    flops = 2 * N * H * W * 36 * Cpad * Cout
    bytes_accessed = int(2 * (x1a.size + x2r.size + wf1.size + wf2.size + wf4.size)
                         + 4 * bc2.size + 4 * N * H * 2 * W * 2 * Cout)

    out_r = pl.pallas_call(
        _make_up_kernel(tH, W, C2, Cout, Cpad),
        out_shape=jax.ShapeDtypeStruct((N, H, 2, W, 2 * Cout), jnp.float32),
        grid_spec=pltpu.PrefetchScalarGridSpec(
            num_scalar_prefetch=0,
            grid=(N, n_tiles),
            in_specs=[
                # full-H per batch; index_map ignores the row-tile axis so the
                # block is DMA'd once per batch and the 1-row halo comes free.
                pl.BlockSpec((1, H, W, C1aug), lambda n, t: (n, 0, 0, 0)),
                pl.BlockSpec((1, H, 2, W, 2 * C2), lambda n, t: (n, 0, 0, 0, 0)),
                pl.BlockSpec(wf1.shape, lambda n, t: (0, 0, 0)),
                pl.BlockSpec(wf2.shape, lambda n, t: (0, 0, 0)),
                pl.BlockSpec(wf4.shape, lambda n, t: (0, 0, 0)),
                pl.BlockSpec((1, Cout), lambda n, t: (0, 0)),
            ],
            out_specs=pl.BlockSpec((1, tH, 2, W, 2 * Cout),
                                   lambda n, t: (n, t, 0, 0, 0)),
            scratch_shapes=[
                pltpu.VMEM((2, 2, tH + 2, W + 2, Cpad), jnp.bfloat16),
                pltpu.VMEM((2, 2, tH * W, Cout), jnp.float32),
            ],
        ),
        compiler_params=pltpu.CompilerParams(
            dimension_semantics=("parallel", "parallel"),
            vmem_limit_bytes=int(vmem_limit)),
        cost_estimate=pl.CostEstimate(flops=flops, transcendentals=0,
                                      bytes_accessed=bytes_accessed),
    )(x1a, x2r, wf1, wf2, wf4, bc2)

    # Undo the polyphase output layout (free reshape), back to NCHW.
    out = out_r.reshape(N, 2 * H, 2 * W, Cout)
    return jnp.transpose(out, (0, 3, 1, 2))


# --------------------- pure-JAX reference (PyTorch math) ---------------------

def ref_up_forward(x1, x2, wt, bt, wc, bc):
    N, C1, H, W = x1.shape
    Cout = wc.shape[0]
    # ConvTranspose2d(C1, C1, kernel=2, stride=2)
    y = jnp.zeros((N, C1, 2 * H, 2 * W), jnp.float32)
    for kh in range(2):
        for kw in range(2):
            contrib = jnp.einsum('nchw,cd->ndhw', x1, wt[:, :, kh, kw])
            y = y.at[:, :, kh::2, kw::2].add(contrib)
    y = y + bt[None, :, None, None]
    # cat([x2, up(x1)], dim=1) -> Conv2d(3x3, pad=1) -> ReLU
    cat = jnp.concatenate([x2, y], axis=1)
    catp = jnp.pad(cat, ((0, 0), (0, 0), (1, 1), (1, 1)))
    out = jnp.zeros((N, Cout, 2 * H, 2 * W), jnp.float32)
    for kh in range(3):
        for kw in range(3):
            out = out + jnp.einsum('nchw,dc->ndhw',
                                   catp[:, :, kh:kh + 2 * H, kw:kw + 2 * W],
                                   wc[:, :, kh, kw])
    out = out + bc[None, :, None, None]
    return jnp.maximum(out, 0.0)


# ---------------------------------- main -------------------------------------

if __name__ == "__main__":
    key = jax.random.PRNGKey(0)
    k1, k2, k3, k4, k5, k6 = jax.random.split(key, 6)

    N = 2
    in_channels, out_channels = 8, 8
    C1 = in_channels // 2              # channels of x1 / the transposed conv
    C2 = in_channels - C1              # channels of the skip connection x2
    H = W = 8                          # x1 spatial; x2 / output are 16x16

    x1 = jax.random.normal(k1, (N, C1, H, W), jnp.float32)
    x2 = jax.random.normal(k2, (N, C2, 2 * H, 2 * W), jnp.float32)
    # Parameter shapes as in nn.ConvTranspose2d / nn.Conv2d
    wt = 0.2 * jax.random.normal(k3, (C1, C1, 2, 2), jnp.float32)
    bt = 0.1 * jax.random.normal(k4, (C1,), jnp.float32)
    wc = 0.2 * jax.random.normal(k5, (out_channels, in_channels, 3, 3), jnp.float32)
    bc = 0.1 * jax.random.normal(k6, (out_channels,), jnp.float32)

    # Pre-round activations to bf16 so the f32 reference isolates the kernel's
    # remaining error to the (tiny) bf16 rounding of the folded weights.
    x1 = x1.astype(jnp.bfloat16).astype(jnp.float32)
    x2 = x2.astype(jnp.bfloat16).astype(jnp.float32)

    fwd = jax.jit(functools.partial(up_forward, row_tile=4))   # 2 row tiles
    got = jax.block_until_ready(fwd(x1, x2, wt, bt, wc, bc))

    ref = ref_up_forward(x1, x2, wt, bt, wc, bc)
    assert got.shape == (N, out_channels, 2 * H, 2 * W)
    np.testing.assert_allclose(np.asarray(got), np.asarray(ref),
                               atol=5e-2, rtol=5e-2)

    print("KERNEL_OK")
</pallas_src>

<mosaic_0001>
module attributes {stable_mosaic.version = 11 : i64} {
  func.func @kernel(%arg0: i32, %arg1: i32, %arg2: memref<1x8x8x12xbf16, #tpu.memory_space<vmem>>, %arg3: memref<1x8x2x8x8xbf16, #tpu.memory_space<vmem>>, %arg4: memref<4x16x8xbf16, #tpu.memory_space<vmem>>, %arg5: memref<8x16x16xbf16, #tpu.memory_space<vmem>>, %arg6: memref<4x16x32xbf16, #tpu.memory_space<vmem>>, %arg7: memref<1x8xf32, #tpu.memory_space<vmem>>, %arg8: memref<1x4x2x8x16xf32, #tpu.memory_space<vmem>>, %arg9: memref<2x2x6x10x16xbf16, #tpu.memory_space<vmem>>, %arg10: memref<2x2x32x8xf32, #tpu.memory_space<vmem>>) attributes {dimension_semantics = [#tpu.dimension_semantics<parallel>, #tpu.dimension_semantics<parallel>], iteration_bounds = array<i64: 2, 2>, scalar_prefetch = 0 : i64, scratch_operands = 2 : i64, tpu.core_type = #tpu.core_type<tc>, window_params = [{transform_indices = @transform_0, window_bounds = array<i64: 1, 8, 8, 12>}, {transform_indices = @transform_1, window_bounds = array<i64: 1, 8, 2, 8, 8>}, {pipeline_mode = #tpu.pipeline_mode<synchronous>, transform_indices = @transform_2, window_bounds = array<i64: 4, 16, 8>}, {pipeline_mode = #tpu.pipeline_mode<synchronous>, transform_indices = @transform_3, window_bounds = array<i64: 8, 16, 16>}, {pipeline_mode = #tpu.pipeline_mode<synchronous>, transform_indices = @transform_4, window_bounds = array<i64: 4, 16, 32>}, {pipeline_mode = #tpu.pipeline_mode<synchronous>, transform_indices = @transform_5, window_bounds = array<i64: 1, 8>}, {transform_indices = @transform_6, window_bounds = array<i64: 1, 4, 2, 8, 16>}]} {
    %c4_i32 = arith.constant 4 : i32
    %0 = arith.muli %arg1, %c4_i32 : i32
    %1 = tpu.assume_multiple %0, 4 : i32
    %cst = arith.constant 0.000000e+00 : bf16
    %2 = vector.broadcast %cst : bf16 to vector<1x10x16xbf16>
    %cst_0 = arith.constant 0.000000e+00 : bf16
    %3 = vector.broadcast %cst_0 : bf16 to vector<6x1x16xbf16>
    %c0 = arith.constant 0 : index
    %c0_1 = arith.constant 0 : index
    %c0_2 = arith.constant 0 : index
    %c0_3 = arith.constant 0 : index
    %c0_4 = arith.constant 0 : index
    %4 = vector.load %arg9[%c0, %c0_1, %c0_2, %c0_3, %c0_4] : memref<2x2x6x10x16xbf16, #tpu.memory_space<vmem>>, vector<1x1x1x10x16xbf16>
    %5 = vector.shape_cast %4 : vector<1x1x1x10x16xbf16> to vector<1x10x16xbf16>
    %6 = vector.shape_cast %2 : vector<1x10x16xbf16> to vector<1x1x1x10x16xbf16>
    tpu.vector_store %arg9[%c0, %c0_1, %c0_2, %c0_3, %c0_4], %6 {strides = array<i32>} : memref<2x2x6x10x16xbf16, #tpu.memory_space<vmem>>, vector<1x1x1x10x16xbf16>,
    %c0_5 = arith.constant 0 : index
    %c0_6 = arith.constant 0 : index
    %c5 = arith.constant 5 : index
    %c0_7 = arith.constant 0 : index
    %c0_8 = arith.constant 0 : index
    %7 = vector.load %arg9[%c0_5, %c0_6, %c5, %c0_7, %c0_8] : memref<2x2x6x10x16xbf16, #tpu.memory_space<vmem>>, vector<1x1x1x10x16xbf16>
    %8 = vector.shape_cast %7 : vector<1x1x1x10x16xbf16> to vector<1x10x16xbf16>
    %9 = vector.shape_cast %2 : vector<1x10x16xbf16> to vector<1x1x1x10x16xbf16>
    tpu.vector_store %arg9[%c0_5, %c0_6, %c5, %c0_7, %c0_8], %9 {strides = array<i32>} : memref<2x2x6x10x16xbf16, #tpu.memory_space<vmem>>, vector<1x1x1x10x16xbf16>,
    %c0_9 = arith.constant 0 : index
    %c0_10 = arith.constant 0 : index
    %c0_11 = arith.constant 0 : index
    %c0_12 = arith.constant 0 : index
    %c0_13 = arith.constant 0 : index
    %10 = vector.load %arg9[%c0_9, %c0_10, %c0_11, %c0_12, %c0_13] : memref<2x2x6x10x16xbf16, #tpu.memory_space<vmem>>, vector<1x1x6x1x16xbf16>
    %11 = vector.shape_cast %10 : vector<1x1x6x1x16xbf16> to vector<6x1x16xbf16>
    %12 = vector.shape_cast %3 : vector<6x1x16xbf16> to vector<1x1x6x1x16xbf16>
    tpu.vector_store %arg9[%c0_9, %c0_10, %c0_11, %c0_12, %c0_13], %12 {strides = array<i32>} : memref<2x2x6x10x16xbf16, #tpu.memory_space<vmem>>, vector<1x1x6x1x16xbf16>,
    %c0_14 = arith.constant 0 : index
    %c0_15 = arith.constant 0 : index
    %c0_16 = arith.constant 0 : index
    %c9 = arith.constant 9 : index
    %c0_17 = arith.constant 0 : index
    %13 = vector.load %arg9[%c0_14, %c0_15, %c0_16, %c9, %c0_17] : memref<2x2x6x10x16xbf16, #tpu.memory_space<vmem>>, vector<1x1x6x1x16xbf16>
    %14 = vector.shape_cast %13 : vector<1x1x6x1x16xbf16> to vector<6x1x16xbf16>
    %15 = vector.shape_cast %3 : vector<6x1x16xbf16> to vector<1x1x6x1x16xbf16>
    tpu.vector_store %arg9[%c0_14, %c0_15, %c0_16, %c9, %c0_17], %15 {strides = array<i32>} : memref<2x2x6x10x16xbf16, #tpu.memory_space<vmem>>, vector<1x1x6x1x16xbf16>,
    %c0_18 = arith.constant 0 : index
    %c1 = arith.constant 1 : index
    %c0_19 = arith.constant 0 : index
    %c0_20 = arith.constant 0 : index
    %c0_21 = arith.constant 0 : index
    %16 = vector.load %arg9[%c0_18, %c1, %c0_19, %c0_20, %c0_21] : memref<2x2x6x10x16xbf16, #tpu.memory_space<vmem>>, vector<1x1x1x10x16xbf16>
    %17 = vector.shape_cast %16 : vector<1x1x1x10x16xbf16> to vector<1x10x16xbf16>
    %18 = vector.shape_cast %2 : vector<1x10x16xbf16> to vector<1x1x1x10x16xbf16>
    tpu.vector_store %arg9[%c0_18, %c1, %c0_19, %c0_20, %c0_21], %18 {strides = array<i32>} : memref<2x2x6x10x16xbf16, #tpu.memory_space<vmem>>, vector<1x1x1x10x16xbf16>,
    %c0_22 = arith.constant 0 : index
    %c1_23 = arith.constant 1 : index
    %c5_24 = arith.constant 5 : index
    %c0_25 = arith.constant 0 : index
    %c0_26 = arith.constant 0 : index
    %19 = vector.load %arg9[%c0_22, %c1_23, %c5_24, %c0_25, %c0_26] : memref<2x2x6x10x16xbf16, #tpu.memory_space<vmem>>, vector<1x1x1x10x16xbf16>
    %20 = vector.shape_cast %19 : vector<1x1x1x10x16xbf16> to vector<1x10x16xbf16>
    %21 = vector.shape_cast %2 : vector<1x10x16xbf16> to vector<1x1x1x10x16xbf16>
    tpu.vector_store %arg9[%c0_22, %c1_23, %c5_24, %c0_25, %c0_26], %21 {strides = array<i32>} : memref<2x2x6x10x16xbf16, #tpu.memory_space<vmem>>, vector<1x1x1x10x16xbf16>,
    %c0_27 = arith.constant 0 : index
    %c1_28 = arith.constant 1 : index
    %c0_29 = arith.constant 0 : index
    %c0_30 = arith.constant 0 : index
    %c0_31 = arith.constant 0 : index
    %22 = vector.load %arg9[%c0_27, %c1_28, %c0_29, %c0_30, %c0_31] : memref<2x2x6x10x16xbf16, #tpu.memory_space<vmem>>, vector<1x1x6x1x16xbf16>
    %23 = vector.shape_cast %22 : vector<1x1x6x1x16xbf16> to vector<6x1x16xbf16>
    %24 = vector.shape_cast %3 : vector<6x1x16xbf16> to vector<1x1x6x1x16xbf16>
    tpu.vector_store %arg9[%c0_27, %c1_28, %c0_29, %c0_30, %c0_31], %24 {strides = array<i32>} : memref<2x2x6x10x16xbf16, #tpu.memory_space<vmem>>, vector<1x1x6x1x16xbf16>,
    %c0_32 = arith.constant 0 : index
    %c1_33 = arith.constant 1 : index
    %c0_34 = arith.constant 0 : index
    %c9_35 = arith.constant 9 : index
    %c0_36 = arith.constant 0 : index
    %25 = vector.load %arg9[%c0_32, %c1_33, %c0_34, %c9_35, %c0_36] : memref<2x2x6x10x16xbf16, #tpu.memory_space<vmem>>, vector<1x1x6x1x16xbf16>
    %26 = vector.shape_cast %25 : vector<1x1x6x1x16xbf16> to vector<6x1x16xbf16>
    %27 = vector.shape_cast %3 : vector<6x1x16xbf16> to vector<1x1x6x1x16xbf16>
    tpu.vector_store %arg9[%c0_32, %c1_33, %c0_34, %c9_35, %c0_36], %27 {strides = array<i32>} : memref<2x2x6x10x16xbf16, #tpu.memory_space<vmem>>, vector<1x1x6x1x16xbf16>,
    %c1_37 = arith.constant 1 : index
    %c0_38 = arith.constant 0 : index
    %c0_39 = arith.constant 0 : index
    %c0_40 = arith.constant 0 : index
    %c0_41 = arith.constant 0 : index
    %28 = vector.load %arg9[%c1_37, %c0_38, %c0_39, %c0_40, %c0_41] : memref<2x2x6x10x16xbf16, #tpu.memory_space<vmem>>, vector<1x1x1x10x16xbf16>
    %29 = vector.shape_cast %28 : vector<1x1x1x10x16xbf16> to vector<1x10x16xbf16>
    %30 = vector.shape_cast %2 : vector<1x10x16xbf16> to vector<1x1x1x10x16xbf16>
    tpu.vector_store %arg9[%c1_37, %c0_38, %c0_39, %c0_40, %c0_41], %30 {strides = array<i32>} : memref<2x2x6x10x16xbf16, #tpu.memory_space<vmem>>, vector<1x1x1x10x16xbf16>,
    %c1_42 = arith.constant 1 : index
    %c0_43 = arith.constant 0 : index
    %c5_44 = arith.constant 5 : index
    %c0_45 = arith.constant 0 : index
    %c0_46 = arith.constant 0 : index
    %31 = vector.load %arg9[%c1_42, %c0_43, %c5_44, %c0_45, %c0_46] : memref<2x2x6x10x16xbf16, #tpu.memory_space<vmem>>, vector<1x1x1x10x16xbf16>
    %32 = vector.shape_cast %31 : vector<1x1x1x10x16xbf16> to vector<1x10x16xbf16>
    %33 = vector.shape_cast %2 : vector<1x10x16xbf16> to vector<1x1x1x10x16xbf16>
    tpu.vector_store %arg9[%c1_42, %c0_43, %c5_44, %c0_45, %c0_46], %33 {strides = array<i32>} : memref<2x2x6x10x16xbf16, #tpu.memory_space<vmem>>, vector<1x1x1x10x16xbf16>,
    %c1_47 = arith.constant 1 : index
    %c0_48 = arith.constant 0 : index
    %c0_49 = arith.constant 0 : index
    %c0_50 = arith.constant 0 : index
    %c0_51 = arith.constant 0 : index
    %34 = vector.load %arg9[%c1_47, %c0_48, %c0_49, %c0_50, %c0_51] : memref<2x2x6x10x16xbf16, #tpu.memory_space<vmem>>, vector<1x1x6x1x16xbf16>
    %35 = vector.shape_cast %34 : vector<1x1x6x1x16xbf16> to vector<6x1x16xbf16>
    %36 = vector.shape_cast %3 : vector<6x1x16xbf16> to vector<1x1x6x1x16xbf16>
    tpu.vector_store %arg9[%c1_47, %c0_48, %c0_49, %c0_50, %c0_51], %36 {strides = array<i32>} : memref<2x2x6x10x16xbf16, #tpu.memory_space<vmem>>, vector<1x1x6x1x16xbf16>,
    %c1_52 = arith.constant 1 : index
    %c0_53 = arith.constant 0 : index
    %c0_54 = arith.constant 0 : index
    %c9_55 = arith.constant 9 : index
    %c0_56 = arith.constant 0 : index
    %37 = vector.load %arg9[%c1_52, %c0_53, %c0_54, %c9_55, %c0_56] : memref<2x2x6x10x16xbf16, #tpu.memory_space<vmem>>, vector<1x1x6x1x16xbf16>
    %38 = vector.shape_cast %37 : vector<1x1x6x1x16xbf16> to vector<6x1x16xbf16>
    %39 = vector.shape_cast %3 : vector<6x1x16xbf16> to vector<1x1x6x1x16xbf16>
    tpu.vector_store %arg9[%c1_52, %c0_53, %c0_54, %c9_55, %c0_56], %39 {strides = array<i32>} : memref<2x2x6x10x16xbf16, #tpu.memory_space<vmem>>, vector<1x1x6x1x16xbf16>,
    %c1_57 = arith.constant 1 : index
    %c1_58 = arith.constant 1 : index
    %c0_59 = arith.constant 0 : index
    %c0_60 = arith.constant 0 : index
    %c0_61 = arith.constant 0 : index
    %40 = vector.load %arg9[%c1_57, %c1_58, %c0_59, %c0_60, %c0_61] : memref<2x2x6x10x16xbf16, #tpu.memory_space<vmem>>, vector<1x1x1x10x16xbf16>
    %41 = vector.shape_cast %40 : vector<1x1x1x10x16xbf16> to vector<1x10x16xbf16>
    %42 = vector.shape_cast %2 : vector<1x10x16xbf16> to vector<1x1x1x10x16xbf16>
    tpu.vector_store %arg9[%c1_57, %c1_58, %c0_59, %c0_60, %c0_61], %42 {strides = array<i32>} : memref<2x2x6x10x16xbf16, #tpu.memory_space<vmem>>, vector<1x1x1x10x16xbf16>,
    %c1_62 = arith.constant 1 : index
    %c1_63 = arith.constant 1 : index
    %c5_64 = arith.constant 5 : index
    %c0_65 = arith.constant 0 : index
    %c0_66 = arith.constant 0 : index
    %43 = vector.load %arg9[%c1_62, %c1_63, %c5_64, %c0_65, %c0_66] : memref<2x2x6x10x16xbf16, #tpu.memory_space<vmem>>, vector<1x1x1x10x16xbf16>
    %44 = vector.shape_cast %43 : vector<1x1x1x10x16xbf16> to vector<1x10x16xbf16>
    %45 = vector.shape_cast %2 : vector<1x10x16xbf16> to vector<1x1x1x10x16xbf16>
    tpu.vector_store %arg9[%c1_62, %c1_63, %c5_64, %c0_65, %c0_66], %45 {strides = array<i32>} : memref<2x2x6x10x16xbf16, #tpu.memory_space<vmem>>, vector<1x1x1x10x16xbf16>,
    %c1_67 = arith.constant 1 : index
    %c1_68 = arith.constant 1 : index
    %c0_69 = arith.constant 0 : index
    %c0_70 = arith.constant 0 : index
    %c0_71 = arith.constant 0 : index
    %46 = vector.load %arg9[%c1_67, %c1_68, %c0_69, %c0_70, %c0_71] : memref<2x2x6x10x16xbf16, #tpu.memory_space<vmem>>, vector<1x1x6x1x16xbf16>
    %47 = vector.shape_cast %46 : vector<1x1x6x1x16xbf16> to vector<6x1x16xbf16>
    %48 = vector.shape_cast %3 : vector<6x1x16xbf16> to vector<1x1x6x1x16xbf16>
    tpu.vector_store %arg9[%c1_67, %c1_68, %c0_69, %c0_70, %c0_71], %48 {strides = array<i32>} : memref<2x2x6x10x16xbf16, #tpu.memory_space<vmem>>, vector<1x1x6x1x16xbf16>,
    %c1_72 = arith.constant 1 : index
    %c1_73 = arith.constant 1 : index
    %c0_74 = arith.constant 0 : index
    %c9_75 = arith.constant 9 : index
    %c0_76 = arith.constant 0 : index
    %49 = vector.load %arg9[%c1_72, %c1_73, %c0_74, %c9_75, %c0_76] : memref<2x2x6x10x16xbf16, #tpu.memory_space<vmem>>, vector<1x1x6x1x16xbf16>
    %50 = vector.shape_cast %49 : vector<1x1x6x1x16xbf16> to vector<6x1x16xbf16>
    %51 = vector.shape_cast %3 : vector<6x1x16xbf16> to vector<1x1x6x1x16xbf16>
    tpu.vector_store %arg9[%c1_72, %c1_73, %c0_74, %c9_75, %c0_76], %51 {strides = array<i32>} : memref<2x2x6x10x16xbf16, #tpu.memory_space<vmem>>, vector<1x1x6x1x16xbf16>,
    %c0_77 = arith.constant 0 : index
    %52 = arith.index_cast %1 : i32 to index
    %c0_78 = arith.constant 0 : index
    %c0_79 = arith.constant 0 : index
    %53 = vector.load %arg2[%c0_77, %52, %c0_78, %c0_79] : memref<1x8x8x12xbf16, #tpu.memory_space<vmem>>, vector<1x4x8x12xbf16>
    %54 = vector.shape_cast %53 : vector<1x4x8x12xbf16> to vector<4x8x12xbf16>
    %c0_80 = arith.constant 0 : index
    %55 = arith.index_cast %1 : i32 to index
    %c0_81 = arith.constant 0 : index
    %c0_82 = arith.constant 0 : index
    %c0_83 = arith.constant 0 : index
    %56 = vector.load %arg3[%c0_80, %55, %c0_81, %c0_82, %c0_83] : memref<1x8x2x8x8xbf16, #tpu.memory_space<vmem>>, vector<1x4x1x8x4xbf16>
    %57 = vector.shape_cast %56 : vector<1x4x1x8x4xbf16> to vector<4x8x4xbf16>
    %c0_84 = arith.constant 0 : index
    %c0_85 = arith.constant 0 : index
    %c1_86 = arith.constant 1 : index
    %c1_87 = arith.constant 1 : index
    %c0_88 = arith.constant 0 : index
    %58 = vector.load %arg9[%c0_84, %c0_85, %c1_86, %c1_87, %c0_88] : memref<2x2x6x10x16xbf16, #tpu.memory_space<vmem>>, vector<1x1x4x8x4xbf16>
    %59 = vector.shape_cast %58 : vector<1x1x4x8x4xbf16> to vector<4x8x4xbf16>
    %60 = vector.shape_cast %57 : vector<4x8x4xbf16> to vector<1x1x4x8x4xbf16>
    tpu.vector_store %arg9[%c0_84, %c0_85, %c1_86, %c1_87, %c0_88], %60 {strides = array<i32>} : memref<2x2x6x10x16xbf16, #tpu.memory_space<vmem>>, vector<1x1x4x8x4xbf16>,
    %c0_89 = arith.constant 0 : index
    %c0_90 = arith.constant 0 : index
    %c1_91 = arith.constant 1 : index
    %c1_92 = arith.constant 1 : index
    %c4 = arith.constant 4 : index
    %61 = vector.load %arg9[%c0_89, %c0_90, %c1_91, %c1_92, %c4] : memref<2x2x6x10x16xbf16, #tpu.memory_space<vmem>>, vector<1x1x4x8x12xbf16>
    %62 = vector.shape_cast %61 : vector<1x1x4x8x12xbf16> to vector<4x8x12xbf16>
    %63 = vector.shape_cast %54 : vector<4x8x12xbf16> to vector<1x1x4x8x12xbf16>
    tpu.vector_store %arg9[%c0_89, %c0_90, %c1_91, %c1_92, %c4], %63 {strides = array<i32>} : memref<2x2x6x10x16xbf16, #tpu.memory_space<vmem>>, vector<1x1x4x8x12xbf16>,
    %c0_93 = arith.constant 0 : index
    %64 = arith.index_cast %1 : i32 to index
    %c0_94 = arith.constant 0 : index
    %c0_95 = arith.constant 0 : index
    %c4_96 = arith.constant 4 : index
    %65 = vector.load %arg3[%c0_93, %64, %c0_94, %c0_95, %c4_96] : memref<1x8x2x8x8xbf16, #tpu.memory_space<vmem>>, vector<1x4x1x8x4xbf16>
    %66 = vector.shape_cast %65 : vector<1x4x1x8x4xbf16> to vector<4x8x4xbf16>
    %c0_97 = arith.constant 0 : index
    %c1_98 = arith.constant 1 : index
    %c1_99 = arith.constant 1 : index
    %c1_100 = arith.constant 1 : index
    %c0_101 = arith.constant 0 : index
    %67 = vector.load %arg9[%c0_97, %c1_98, %c1_99, %c1_100, %c0_101] : memref<2x2x6x10x16xbf16, #tpu.memory_space<vmem>>, vector<1x1x4x8x4xbf16>
    %68 = vector.shape_cast %67 : vector<1x1x4x8x4xbf16> to vector<4x8x4xbf16>
    %69 = vector.shape_cast %66 : vector<4x8x4xbf16> to vector<1x1x4x8x4xbf16>
    tpu.vector_store %arg9[%c0_97, %c1_98, %c1_99, %c1_100, %c0_101], %69 {strides = array<i32>} : memref<2x2x6x10x16xbf16, #tpu.memory_space<vmem>>, vector<1x1x4x8x4xbf16>,
    %c0_102 = arith.constant 0 : index
    %c1_103 = arith.constant 1 : index
    %c1_104 = arith.constant 1 : index
    %c1_105 = arith.constant 1 : index
    %c4_106 = arith.constant 4 : index
    %70 = vector.load %arg9[%c0_102, %c1_103, %c1_104, %c1_105, %c4_106] : memref<2x2x6x10x16xbf16, #tpu.memory_space<vmem>>, vector<1x1x4x8x12xbf16>
    %71 = vector.shape_cast %70 : vector<1x1x4x8x12xbf16> to vector<4x8x12xbf16>
    %72 = vector.shape_cast %54 : vector<4x8x12xbf16> to vector<1x1x4x8x12xbf16>
    tpu.vector_store %arg9[%c0_102, %c1_103, %c1_104, %c1_105, %c4_106], %72 {strides = array<i32>} : memref<2x2x6x10x16xbf16, #tpu.memory_space<vmem>>, vector<1x1x4x8x12xbf16>,
    %c0_107 = arith.constant 0 : index
    %73 = arith.index_cast %1 : i32 to index
    %c1_108 = arith.constant 1 : index
    %c0_109 = arith.constant 0 : index
    %c0_110 = arith.constant 0 : index
    %74 = vector.load %arg3[%c0_107, %73, %c1_108, %c0_109, %c0_110] : memref<1x8x2x8x8xbf16, #tpu.memory_space<vmem>>, vector<1x4x1x8x4xbf16>
    %75 = vector.shape_cast %74 : vector<1x4x1x8x4xbf16> to vector<4x8x4xbf16>
    %c1_111 = arith.constant 1 : index
    %c0_112 = arith.constant 0 : index
    %c1_113 = arith.constant 1 : index
    %c1_114 = arith.constant 1 : index
    %c0_115 = arith.constant 0 : index
    %76 = vector.load %arg9[%c1_111, %c0_112, %c1_113, %c1_114, %c0_115] : memref<2x2x6x10x16xbf16, #tpu.memory_space<vmem>>, vector<1x1x4x8x4xbf16>
    %77 = vector.shape_cast %76 : vector<1x1x4x8x4xbf16> to vector<4x8x4xbf16>
    %78 = vector.shape_cast %75 : vector<4x8x4xbf16> to vector<1x1x4x8x4xbf16>
    tpu.vector_store %arg9[%c1_111, %c0_112, %c1_113, %c1_114, %c0_115], %78 {strides = array<i32>} : memref<2x2x6x10x16xbf16, #tpu.memory_space<vmem>>, vector<1x1x4x8x4xbf16>,
    %c1_116 = arith.constant 1 : index
    %c0_117 = arith.constant 0 : index
    %c1_118 = arith.constant 1 : index
    %c1_119 = arith.constant 1 : index
    %c4_120 = arith.constant 4 : index
    %79 = vector.load %arg9[%c1_116, %c0_117, %c1_118, %c1_119, %c4_120] : memref<2x2x6x10x16xbf16, #tpu.memory_space<vmem>>, vector<1x1x4x8x12xbf16>
    %80 = vector.shape_cast %79 : vector<1x1x4x8x12xbf16> to vector<4x8x12xbf16>
    %81 = vector.shape_cast %54 : vector<4x8x12xbf16> to vector<1x1x4x8x12xbf16>
    tpu.vector_store %arg9[%c1_116, %c0_117, %c1_118, %c1_119, %c4_120], %81 {strides = array<i32>} : memref<2x2x6x10x16xbf16, #tpu.memory_space<vmem>>, vector<1x1x4x8x12xbf16>,
    %c0_121 = arith.constant 0 : index
    %82 = arith.index_cast %1 : i32 to index
    %c1_122 = arith.constant 1 : index
    %c0_123 = arith.constant 0 : index
    %c4_124 = arith.constant 4 : index
    %83 = vector.load %arg3[%c0_121, %82, %c1_122, %c0_123, %c4_124] : memref<1x8x2x8x8xbf16, #tpu.memory_space<vmem>>, vector<1x4x1x8x4xbf16>
    %84 = vector.shape_cast %83 : vector<1x4x1x8x4xbf16> to vector<4x8x4xbf16>
    %c1_125 = arith.constant 1 : index
    %c1_126 = arith.constant 1 : index
    %c1_127 = arith.constant 1 : index
    %c1_128 = arith.constant 1 : index
    %c0_129 = arith.constant 0 : index
    %85 = vector.load %arg9[%c1_125, %c1_126, %c1_127, %c1_128, %c0_129] : memref<2x2x6x10x16xbf16, #tpu.memory_space<vmem>>, vector<1x1x4x8x4xbf16>
    %86 = vector.shape_cast %85 : vector<1x1x4x8x4xbf16> to vector<4x8x4xbf16>
    %87 = vector.shape_cast %84 : vector<4x8x4xbf16> to vector<1x1x4x8x4xbf16>
    tpu.vector_store %arg9[%c1_125, %c1_126, %c1_127, %c1_128, %c0_129], %87 {strides = array<i32>} : memref<2x2x6x10x16xbf16, #tpu.memory_space<vmem>>, vector<1x1x4x8x4xbf16>,
    %c1_130 = arith.constant 1 : index
    %c1_131 = arith.constant 1 : index
    %c1_132 = arith.constant 1 : index
    %c1_133 = arith.constant 1 : index
    %c4_134 = arith.constant 4 : index
    %88 = vector.load %arg9[%c1_130, %c1_131, %c1_132, %c1_133, %c4_134] : memref<2x2x6x10x16xbf16, #tpu.memory_space<vmem>>, vector<1x1x4x8x12xbf16>
    %89 = vector.shape_cast %88 : vector<1x1x4x8x12xbf16> to vector<4x8x12xbf16>
    %90 = vector.shape_cast %54 : vector<4x8x12xbf16> to vector<1x1x4x8x12xbf16>
    tpu.vector_store %arg9[%c1_130, %c1_131, %c1_132, %c1_133, %c4_134], %90 {strides = array<i32>} : memref<2x2x6x10x16xbf16, #tpu.memory_space<vmem>>, vector<1x1x4x8x12xbf16>,
    %c0_i32 = arith.constant 0 : i32
    %91 = arith.cmpi sgt, %arg1, %c0_i32 : i32
    %92 = arith.extui %91 : i1 to i32
    %c0_i32_135 = arith.constant 0 : i32
    %93 = arith.cmpi ne, %92, %c0_i32_135 : i32
    scf.if %93 {
      %c1_i32_613 = arith.constant 1 : i32
      %484 = arith.subi %1, %c1_i32_613 : i32
      %c0_614 = arith.constant 0 : index
      %485 = arith.index_cast %484 : i32 to index
      %c0_615 = arith.constant 0 : index
      %c0_616 = arith.constant 0 : index
      %486 = vector.load %arg2[%c0_614, %485, %c0_615, %c0_616] : memref<1x8x8x12xbf16, #tpu.memory_space<vmem>>, vector<1x1x8x12xbf16>
      %487 = vector.shape_cast %486 : vector<1x1x8x12xbf16> to vector<1x8x12xbf16>
      %c1_i32_617 = arith.constant 1 : i32
      %488 = arith.subi %1, %c1_i32_617 : i32
      %c0_618 = arith.constant 0 : index
      %489 = arith.index_cast %488 : i32 to index
      %c0_619 = arith.constant 0 : index
      %c0_620 = arith.constant 0 : index
      %c0_621 = arith.constant 0 : index
      %490 = vector.load %arg3[%c0_618, %489, %c0_619, %c0_620, %c0_621] : memref<1x8x2x8x8xbf16, #tpu.memory_space<vmem>>, vector<1x1x1x8x4xbf16>
      %491 = vector.shape_cast %490 : vector<1x1x1x8x4xbf16> to vector<1x8x4xbf16>
      %c0_622 = arith.constant 0 : index
      %c0_623 = arith.constant 0 : index
      %c0_624 = arith.constant 0 : index
      %c1_625 = arith.constant 1 : index
      %c0_626 = arith.constant 0 : index
      %492 = vector.load %arg9[%c0_622, %c0_623, %c0_624, %c1_625, %c0_626] : memref<2x2x6x10x16xbf16, #tpu.memory_space<vmem>>, vector<1x1x1x8x4xbf16>
      %493 = vector.shape_cast %492 : vector<1x1x1x8x4xbf16> to vector<1x8x4xbf16>
      %494 = vector.shape_cast %491 : vector<1x8x4xbf16> to vector<1x1x1x8x4xbf16>
      tpu.vector_store %arg9[%c0_622, %c0_623, %c0_624, %c1_625, %c0_626], %494 {strides = array<i32>} : memref<2x2x6x10x16xbf16, #tpu.memory_space<vmem>>, vector<1x1x1x8x4xbf16>,
      %c0_627 = arith.constant 0 : index
      %c0_628 = arith.constant 0 : index
      %c0_629 = arith.constant 0 : index
      %c1_630 = arith.constant 1 : index
      %c4_631 = arith.constant 4 : index
      %495 = vector.load %arg9[%c0_627, %c0_628, %c0_629, %c1_630, %c4_631] : memref<2x2x6x10x16xbf16, #tpu.memory_space<vmem>>, vector<1x1x1x8x12xbf16>
      %496 = vector.shape_cast %495 : vector<1x1x1x8x12xbf16> to vector<1x8x12xbf16>
      %497 = vector.shape_cast %487 : vector<1x8x12xbf16> to vector<1x1x1x8x12xbf16>
      tpu.vector_store %arg9[%c0_627, %c0_628, %c0_629, %c1_630, %c4_631], %497 {strides = array<i32>} : memref<2x2x6x10x16xbf16, #tpu.memory_space<vmem>>, vector<1x1x1x8x12xbf16>,
      %c1_i32_632 = arith.constant 1 : i32
      %498 = arith.subi %1, %c1_i32_632 : i32
      %c0_633 = arith.constant 0 : index
      %499 = arith.index_cast %498 : i32 to index
      %c0_634 = arith.constant 0 : index
      %c0_635 = arith.constant 0 : index
      %c4_636 = arith.constant 4 : index
      %500 = vector.load %arg3[%c0_633, %499, %c0_634, %c0_635, %c4_636] : memref<1x8x2x8x8xbf16, #tpu.memory_space<vmem>>, vector<1x1x1x8x4xbf16>
      %501 = vector.shape_cast %500 : vector<1x1x1x8x4xbf16> to vector<1x8x4xbf16>
      %c0_637 = arith.constant 0 : index
      %c1_638 = arith.constant 1 : index
      %c0_639 = arith.constant 0 : index
      %c1_640 = arith.constant 1 : index
      %c0_641 = arith.constant 0 : index
      %502 = vector.load %arg9[%c0_637, %c1_638, %c0_639, %c1_640, %c0_641] : memref<2x2x6x10x16xbf16, #tpu.memory_space<vmem>>, vector<1x1x1x8x4xbf16>
      %503 = vector.shape_cast %502 : vector<1x1x1x8x4xbf16> to vector<1x8x4xbf16>
      %504 = vector.shape_cast %501 : vector<1x8x4xbf16> to vector<1x1x1x8x4xbf16>
      tpu.vector_store %arg9[%c0_637, %c1_638, %c0_639, %c1_640, %c0_641], %504 {strides = array<i32>} : memref<2x2x6x10x16xbf16, #tpu.memory_space<vmem>>, vector<1x1x1x8x4xbf16>,
      %c0_642 = arith.constant 0 : index
      %c1_643 = arith.constant 1 : index
      %c0_644 = arith.constant 0 : index
      %c1_645 = arith.constant 1 : index
      %c4_646 = arith.constant 4 : index
      %505 = vector.load %arg9[%c0_642, %c1_643, %c0_644, %c1_645, %c4_646] : memref<2x2x6x10x16xbf16, #tpu.memory_space<vmem>>, vector<1x1x1x8x12xbf16>
      %506 = vector.shape_cast %505 : vector<1x1x1x8x12xbf16> to vector<1x8x12xbf16>
      %507 = vector.shape_cast %487 : vector<1x8x12xbf16> to vector<1x1x1x8x12xbf16>
      tpu.vector_store %arg9[%c0_642, %c1_643, %c0_644, %c1_645, %c4_646], %507 {strides = array<i32>} : memref<2x2x6x10x16xbf16, #tpu.memory_space<vmem>>, vector<1x1x1x8x12xbf16>,
      %c1_i32_647 = arith.constant 1 : i32
      %508 = arith.subi %1, %c1_i32_647 : i32
      %c0_648 = arith.constant 0 : index
      %509 = arith.index_cast %508 : i32 to index
      %c1_649 = arith.constant 1 : index
      %c0_650 = arith.constant 0 : index
      %c0_651 = arith.constant 0 : index
      %510 = vector.load %arg3[%c0_648, %509, %c1_649, %c0_650, %c0_651] : memref<1x8x2x8x8xbf16, #tpu.memory_space<vmem>>, vector<1x1x1x8x4xbf16>
      %511 = vector.shape_cast %510 : vector<1x1x1x8x4xbf16> to vector<1x8x4xbf16>
      %c1_652 = arith.constant 1 : index
      %c0_653 = arith.constant 0 : index
      %c0_654 = arith.constant 0 : index
      %c1_655 = arith.constant 1 : index
      %c0_656 = arith.constant 0 : index
      %512 = vector.load %arg9[%c1_652, %c0_653, %c0_654, %c1_655, %c0_656] : memref<2x2x6x10x16xbf16, #tpu.memory_space<vmem>>, vector<1x1x1x8x4xbf16>
      %513 = vector.shape_cast %512 : vector<1x1x1x8x4xbf16> to vector<1x8x4xbf16>
      %514 = vector.shape_cast %511 : vector<1x8x4xbf16> to vector<1x1x1x8x4xbf16>
      tpu.vector_store %arg9[%c1_652, %c0_653, %c0_654, %c1_655, %c0_656], %514 {strides = array<i32>} : memref<2x2x6x10x16xbf16, #tpu.memory_space<vmem>>, vector<1x1x1x8x4xbf16>,
      %c1_657 = arith.constant 1 : index
      %c0_658 = arith.constant 0 : index
      %c0_659 = arith.constant 0 : index
      %c1_660 = arith.constant 1 : index
      %c4_661 = arith.constant 4 : index
      %515 = vector.load %arg9[%c1_657, %c0_658, %c0_659, %c1_660, %c4_661] : memref<2x2x6x10x16xbf16, #tpu.memory_space<vmem>>, vector<1x1x1x8x12xbf16>
      %516 = vector.shape_cast %515 : vector<1x1x1x8x12xbf16> to vector<1x8x12xbf16>
      %517 = vector.shape_cast %487 : vector<1x8x12xbf16> to vector<1x1x1x8x12xbf16>
      tpu.vector_store %arg9[%c1_657, %c0_658, %c0_659, %c1_660, %c4_661], %517 {strides = array<i32>} : memref<2x2x6x10x16xbf16, #tpu.memory_space<vmem>>, vector<1x1x1x8x12xbf16>,
      %c1_i32_662 = arith.constant 1 : i32
      %518 = arith.subi %1, %c1_i32_662 : i32
      %c0_663 = arith.constant 0 : index
      %519 = arith.index_cast %518 : i32 to index
      %c1_664 = arith.constant 1 : index
      %c0_665 = arith.constant 0 : index
      %c4_666 = arith.constant 4 : index
      %520 = vector.load %arg3[%c0_663, %519, %c1_664, %c0_665, %c4_666] : memref<1x8x2x8x8xbf16, #tpu.memory_space<vmem>>, vector<1x1x1x8x4xbf16>
      %521 = vector.shape_cast %520 : vector<1x1x1x8x4xbf16> to vector<1x8x4xbf16>
      %c1_667 = arith.constant 1 : index
      %c1_668 = arith.constant 1 : index
      %c0_669 = arith.constant 0 : index
      %c1_670 = arith.constant 1 : index
      %c0_671 = arith.constant 0 : index
      %522 = vector.load %arg9[%c1_667, %c1_668, %c0_669, %c1_670, %c0_671] : memref<2x2x6x10x16xbf16, #tpu.memory_space<vmem>>, vector<1x1x1x8x4xbf16>
      %523 = vector.shape_cast %522 : vector<1x1x1x8x4xbf16> to vector<1x8x4xbf16>
      %524 = vector.shape_cast %521 : vector<1x8x4xbf16> to vector<1x1x1x8x4xbf16>
      tpu.vector_store %arg9[%c1_667, %c1_668, %c0_669, %c1_670, %c0_671], %524 {strides = array<i32>} : memref<2x2x6x10x16xbf16, #tpu.memory_space<vmem>>, vector<1x1x1x8x4xbf16>,
      %c1_672 = arith.constant 1 : index
      %c1_673 = arith.constant 1 : index
      %c0_674 = arith.constant 0 : index
      %c1_675 = arith.constant 1 : index
      %c4_676 = arith.constant 4 : index
      %525 = vector.load %arg9[%c1_672, %c1_673, %c0_674, %c1_675, %c4_676] : memref<2x2x6x10x16xbf16, #tpu.memory_space<vmem>>, vector<1x1x1x8x12xbf16>
      %526 = vector.shape_cast %525 : vector<1x1x1x8x12xbf16> to vector<1x8x12xbf16>
      %527 = vector.shape_cast %487 : vector<1x8x12xbf16> to vector<1x1x1x8x12xbf16>
      tpu.vector_store %arg9[%c1_672, %c1_673, %c0_674, %c1_675, %c4_676], %527 {strides = array<i32>} : memref<2x2x6x10x16xbf16, #tpu.memory_space<vmem>>, vector<1x1x1x8x12xbf16>,
    } else {
    }
    %c1_i32 = arith.constant 1 : i32
    %94 = arith.cmpi slt, %arg1, %c1_i32 : i32
    %95 = arith.extui %94 : i1 to i32
    %c0_i32_136 = arith.constant 0 : i32
    %96 = arith.cmpi ne, %95, %c0_i32_136 : i32
    scf.if %96 {
      %c4_i32_613 = arith.constant 4 : i32
      %484 = arith.addi %1, %c4_i32_613 : i32
      %c0_614 = arith.constant 0 : index
      %485 = arith.index_cast %484 : i32 to index
      %c0_615 = arith.constant 0 : index
      %c0_616 = arith.constant 0 : index
      %486 = vector.load %arg2[%c0_614, %485, %c0_615, %c0_616] : memref<1x8x8x12xbf16, #tpu.memory_space<vmem>>, vector<1x1x8x12xbf16>
      %487 = vector.shape_cast %486 : vector<1x1x8x12xbf16> to vector<1x8x12xbf16>
      %c4_i32_617 = arith.constant 4 : i32
      %488 = arith.addi %1, %c4_i32_617 : i32
      %c0_618 = arith.constant 0 : index
      %489 = arith.index_cast %488 : i32 to index
      %c0_619 = arith.constant 0 : index
      %c0_620 = arith.constant 0 : index
      %c0_621 = arith.constant 0 : index
      %490 = vector.load %arg3[%c0_618, %489, %c0_619, %c0_620, %c0_621] : memref<1x8x2x8x8xbf16, #tpu.memory_space<vmem>>, vector<1x1x1x8x4xbf16>
      %491 = vector.shape_cast %490 : vector<1x1x1x8x4xbf16> to vector<1x8x4xbf16>
      %c0_622 = arith.constant 0 : index
      %c0_623 = arith.constant 0 : index
      %c5_624 = arith.constant 5 : index
      %c1_625 = arith.constant 1 : index
      %c0_626 = arith.constant 0 : index
      %492 = vector.load %arg9[%c0_622, %c0_623, %c5_624, %c1_625, %c0_626] : memref<2x2x6x10x16xbf16, #tpu.memory_space<vmem>>, vector<1x1x1x8x4xbf16>
      %493 = vector.shape_cast %492 : vector<1x1x1x8x4xbf16> to vector<1x8x4xbf16>
      %494 = vector.shape_cast %491 : vector<1x8x4xbf16> to vector<1x1x1x8x4xbf16>
      tpu.vector_store %arg9[%c0_622, %c0_623, %c5_624, %c1_625, %c0_626], %494 {strides = array<i32>} : memref<2x2x6x10x16xbf16, #tpu.memory_space<vmem>>, vector<1x1x1x8x4xbf16>,
      %c0_627 = arith.constant 0 : index
      %c0_628 = arith.constant 0 : index
      %c5_629 = arith.constant 5 : index
      %c1_630 = arith.constant 1 : index
      %c4_631 = arith.constant 4 : index
      %495 = vector.load %arg9[%c0_627, %c0_628, %c5_629, %c1_630, %c4_631] : memref<2x2x6x10x16xbf16, #tpu.memory_space<vmem>>, vector<1x1x1x8x12xbf16>
      %496 = vector.shape_cast %495 : vector<1x1x1x8x12xbf16> to vector<1x8x12xbf16>
      %497 = vector.shape_cast %487 : vector<1x8x12xbf16> to vector<1x1x1x8x12xbf16>
      tpu.vector_store %arg9[%c0_627, %c0_628, %c5_629, %c1_630, %c4_631], %497 {strides = array<i32>} : memref<2x2x6x10x16xbf16, #tpu.memory_space<vmem>>, vector<1x1x1x8x12xbf16>,
      %c4_i32_632 = arith.constant 4 : i32
      %498 = arith.addi %1, %c4_i32_632 : i32
      %c0_633 = arith.constant 0 : index
      %499 = arith.index_cast %498 : i32 to index
      %c0_634 = arith.constant 0 : index
      %c0_635 = arith.constant 0 : index
      %c4_636 = arith.constant 4 : index
      %500 = vector.load %arg3[%c0_633, %499, %c0_634, %c0_635, %c4_636] : memref<1x8x2x8x8xbf16, #tpu.memory_space<vmem>>, vector<1x1x1x8x4xbf16>
      %501 = vector.shape_cast %500 : vector<1x1x1x8x4xbf16> to vector<1x8x4xbf16>
      %c0_637 = arith.constant 0 : index
      %c1_638 = arith.constant 1 : index
      %c5_639 = arith.constant 5 : index
      %c1_640 = arith.constant 1 : index
      %c0_641 = arith.constant 0 : index
      %502 = vector.load %arg9[%c0_637, %c1_638, %c5_639, %c1_640, %c0_641] : memref<2x2x6x10x16xbf16, #tpu.memory_space<vmem>>, vector<1x1x1x8x4xbf16>
      %503 = vector.shape_cast %502 : vector<1x1x1x8x4xbf16> to vector<1x8x4xbf16>
      %504 = vector.shape_cast %501 : vector<1x8x4xbf16> to vector<1x1x1x8x4xbf16>
      tpu.vector_store %arg9[%c0_637, %c1_638, %c5_639, %c1_640, %c0_641], %504 {strides = array<i32>} : memref<2x2x6x10x16xbf16, #tpu.memory_space<vmem>>, vector<1x1x1x8x4xbf16>,
      %c0_642 = arith.constant 0 : index
      %c1_643 = arith.constant 1 : index
      %c5_644 = arith.constant 5 : index
      %c1_645 = arith.constant 1 : index
      %c4_646 = arith.constant 4 : index
      %505 = vector.load %arg9[%c0_642, %c1_643, %c5_644, %c1_645, %c4_646] : memref<2x2x6x10x16xbf16, #tpu.memory_space<vmem>>, vector<1x1x1x8x12xbf16>
      %506 = vector.shape_cast %505 : vector<1x1x1x8x12xbf16> to vector<1x8x12xbf16>
      %507 = vector.shape_cast %487 : vector<1x8x12xbf16> to vector<1x1x1x8x12xbf16>
      tpu.vector_store %arg9[%c0_642, %c1_643, %c5_644, %c1_645, %c4_646], %507 {strides = array<i32>} : memref<2x2x6x10x16xbf16, #tpu.memory_space<vmem>>, vector<1x1x1x8x12xbf16>,
      %c4_i32_647 = arith.constant 4 : i32
      %508 = arith.addi %1, %c4_i32_647 : i32
      %c0_648 = arith.constant 0 : index
      %509 = arith.index_cast %508 : i32 to index
      %c1_649 = arith.constant 1 : index
      %c0_650 = arith.constant 0 : index
      %c0_651 = arith.constant 0 : index
      %510 = vector.load %arg3[%c0_648, %509, %c1_649, %c0_650, %c0_651] : memref<1x8x2x8x8xbf16, #tpu.memory_space<vmem>>, vector<1x1x1x8x4xbf16>
      %511 = vector.shape_cast %510 : vector<1x1x1x8x4xbf16> to vector<1x8x4xbf16>
      %c1_652 = arith.constant 1 : index
      %c0_653 = arith.constant 0 : index
      %c5_654 = arith.constant 5 : index
      %c1_655 = arith.constant 1 : index
      %c0_656 = arith.constant 0 : index
      %512 = vector.load %arg9[%c1_652, %c0_653, %c5_654, %c1_655, %c0_656] : memref<2x2x6x10x16xbf16, #tpu.memory_space<vmem>>, vector<1x1x1x8x4xbf16>
      %513 = vector.shape_cast %512 : vector<1x1x1x8x4xbf16> to vector<1x8x4xbf16>
      %514 = vector.shape_cast %511 : vector<1x8x4xbf16> to vector<1x1x1x8x4xbf16>
      tpu.vector_store %arg9[%c1_652, %c0_653, %c5_654, %c1_655, %c0_656], %514 {strides = array<i32>} : memref<2x2x6x10x16xbf16, #tpu.memory_space<vmem>>, vector<1x1x1x8x4xbf16>,
      %c1_657 = arith.constant 1 : index
      %c0_658 = arith.constant 0 : index
      %c5_659 = arith.constant 5 : index
      %c1_660 = arith.constant 1 : index
      %c4_661 = arith.constant 4 : index
      %515 = vector.load %arg9[%c1_657, %c0_658, %c5_659, %c1_660, %c4_661] : memref<2x2x6x10x16xbf16, #tpu.memory_space<vmem>>, vector<1x1x1x8x12xbf16>
      %516 = vector.shape_cast %515 : vector<1x1x1x8x12xbf16> to vector<1x8x12xbf16>
      %517 = vector.shape_cast %487 : vector<1x8x12xbf16> to vector<1x1x1x8x12xbf16>
      tpu.vector_store %arg9[%c1_657, %c0_658, %c5_659, %c1_660, %c4_661], %517 {strides = array<i32>} : memref<2x2x6x10x16xbf16, #tpu.memory_space<vmem>>, vector<1x1x1x8x12xbf16>,
      %c4_i32_662 = arith.constant 4 : i32
      %518 = arith.addi %1, %c4_i32_662 : i32
      %c0_663 = arith.constant 0 : index
      %519 = arith.index_cast %518 : i32 to index
      %c1_664 = arith.constant 1 : index
      %c0_665 = arith.constant 0 : index
      %c4_666 = arith.constant 4 : index
      %520 = vector.load %arg3[%c0_663, %519, %c1_664, %c0_665, %c4_666] : memref<1x8x2x8x8xbf16, #tpu.memory_space<vmem>>, vector<1x1x1x8x4xbf16>
      %521 = vector.shape_cast %520 : vector<1x1x1x8x4xbf16> to vector<1x8x4xbf16>
      %c1_667 = arith.constant 1 : index
      %c1_668 = arith.constant 1 : index
      %c5_669 = arith.constant 5 : index
      %c1_670 = arith.constant 1 : index
      %c0_671 = arith.constant 0 : index
      %522 = vector.load %arg9[%c1_667, %c1_668, %c5_669, %c1_670, %c0_671] : memref<2x2x6x10x16xbf16, #tpu.memory_space<vmem>>, vector<1x1x1x8x4xbf16>
      %523 = vector.shape_cast %522 : vector<1x1x1x8x4xbf16> to vector<1x8x4xbf16>
      %524 = vector.shape_cast %521 : vector<1x8x4xbf16> to vector<1x1x1x8x4xbf16>
      tpu.vector_store %arg9[%c1_667, %c1_668, %c5_669, %c1_670, %c0_671], %524 {strides = array<i32>} : memref<2x2x6x10x16xbf16, #tpu.memory_space<vmem>>, vector<1x1x1x8x4xbf16>,
      %c1_672 = arith.constant 1 : index
      %c1_673 = arith.constant 1 : index
      %c5_674 = arith.constant 5 : index
      %c1_675 = arith.constant 1 : index
      %c4_676 = arith.constant 4 : index
      %525 = vector.load %arg9[%c1_672, %c1_673, %c5_674, %c1_675, %c4_676] : memref<2x2x6x10x16xbf16, #tpu.memory_space<vmem>>, vector<1x1x1x8x12xbf16>
      %526 = vector.shape_cast %525 : vector<1x1x1x8x12xbf16> to vector<1x8x12xbf16>
      %527 = vector.shape_cast %487 : vector<1x8x12xbf16> to vector<1x1x1x8x12xbf16>
      tpu.vector_store %arg9[%c1_672, %c1_673, %c5_674, %c1_675, %c4_676], %527 {strides = array<i32>} : memref<2x2x6x10x16xbf16, #tpu.memory_space<vmem>>, vector<1x1x1x8x12xbf16>,
    } else {
    }
    %c0_137 = arith.constant 0 : index
    %c0_138 = arith.constant 0 : index
    %97 = vector.load %arg7[%c0_137, %c0_138] : memref<1x8xf32, #tpu.memory_space<vmem>>, vector<1x8xf32>
    %98 = vector.shape_cast %97 : vector<1x8xf32> to vector<1x8xf32>
    %99 = vector.broadcast %98 : vector<1x8xf32> to vector<32x8xf32>
    %c0_139 = arith.constant 0 : index
    %c0_140 = arith.constant 0 : index
    %c0_141 = arith.constant 0 : index
    %c0_142 = arith.constant 0 : index
    %100 = vector.load %arg10[%c0_139, %c0_140, %c0_141, %c0_142] : memref<2x2x32x8xf32, #tpu.memory_space<vmem>>, vector<1x1x32x8xf32>
    %101 = vector.shape_cast %100 : vector<1x1x32x8xf32> to vector<32x8xf32>
    %102 = vector.shape_cast %99 : vector<32x8xf32> to vector<1x1x32x8xf32>
    tpu.vector_store %arg10[%c0_139, %c0_140, %c0_141, %c0_142], %102 {strides = array<i32>} : memref<2x2x32x8xf32, #tpu.memory_space<vmem>>, vector<1x1x32x8xf32>,
    %c0_143 = arith.constant 0 : index
    %c1_144 = arith.constant 1 : index
    %c0_145 = arith.constant 0 : index
    %c0_146 = arith.constant 0 : index
    %103 = vector.load %arg10[%c0_143, %c1_144, %c0_145, %c0_146] : memref<2x2x32x8xf32, #tpu.memory_space<vmem>>, vector<1x1x32x8xf32>
    %104 = vector.shape_cast %103 : vector<1x1x32x8xf32> to vector<32x8xf32>
    %105 = vector.shape_cast %99 : vector<32x8xf32> to vector<1x1x32x8xf32>
    tpu.vector_store %arg10[%c0_143, %c1_144, %c0_145, %c0_146], %105 {strides = array<i32>} : memref<2x2x32x8xf32, #tpu.memory_space<vmem>>, vector<1x1x32x8xf32>,
    %c1_147 = arith.constant 1 : index
    %c0_148 = arith.constant 0 : index
    %c0_149 = arith.constant 0 : index
    %c0_150 = arith.constant 0 : index
    %106 = vector.load %arg10[%c1_147, %c0_148, %c0_149, %c0_150] : memref<2x2x32x8xf32, #tpu.memory_space<vmem>>, vector<1x1x32x8xf32>
    %107 = vector.shape_cast %106 : vector<1x1x32x8xf32> to vector<32x8xf32>
    %108 = vector.shape_cast %99 : vector<32x8xf32> to vector<1x1x32x8xf32>
    tpu.vector_store %arg10[%c1_147, %c0_148, %c0_149, %c0_150], %108 {strides = array<i32>} : memref<2x2x32x8xf32, #tpu.memory_space<vmem>>, vector<1x1x32x8xf32>,
    %c1_151 = arith.constant 1 : index
    %c1_152 = arith.constant 1 : index
    %c0_153 = arith.constant 0 : index
    %c0_154 = arith.constant 0 : index
    %109 = vector.load %arg10[%c1_151, %c1_152, %c0_153, %c0_154] : memref<2x2x32x8xf32, #tpu.memory_space<vmem>>, vector<1x1x32x8xf32>
    %110 = vector.shape_cast %109 : vector<1x1x32x8xf32> to vector<32x8xf32>
    %111 = vector.shape_cast %99 : vector<32x8xf32> to vector<1x1x32x8xf32>
    tpu.vector_store %arg10[%c1_151, %c1_152, %c0_153, %c0_154], %111 {strides = array<i32>} : memref<2x2x32x8xf32, #tpu.memory_space<vmem>>, vector<1x1x32x8xf32>,
    %c1_155 = arith.constant 1 : index
    %c1_156 = arith.constant 1 : index
    %c0_157 = arith.constant 0 : index
    %c0_158 = arith.constant 0 : index
    %c0_159 = arith.constant 0 : index
    %112 = vector.load %arg9[%c1_155, %c1_156, %c0_157, %c0_158, %c0_159] : memref<2x2x6x10x16xbf16, #tpu.memory_space<vmem>>, vector<1x1x4x8x16xbf16>
    %113 = vector.shape_cast %112 : vector<1x1x4x8x16xbf16> to vector<4x8x16xbf16>
    %114 = vector.shape_cast %113 : vector<4x8x16xbf16> to vector<32x16xbf16>
    %c0_160 = arith.constant 0 : index
    %c0_161 = arith.constant 0 : index
    %c0_162 = arith.constant 0 : index
    %115 = vector.load %arg4[%c0_160, %c0_161, %c0_162] : memref<4x16x8xbf16, #tpu.memory_space<vmem>>, vector<1x16x8xbf16>
    %116 = vector.shape_cast %115 : vector<1x16x8xbf16> to vector<16x8xbf16>
    %cst_163 = arith.constant dense<0.000000e+00> : vector<32x8xf32>
    %117 = tpu.matmul %114, %116, %cst_163 {dimension_numbers = #tpu.dot_dimension_numbers<[1], [0], [0], [1], [0, 0, 1, 1], [], []>} : vector<32x16xbf16>, vector<16x8xbf16>, vector<32x8xf32> -> vector<32x8xf32>
    %c0_164 = arith.constant 0 : index
    %c0_165 = arith.constant 0 : index
    %c0_166 = arith.constant 0 : index
    %c0_167 = arith.constant 0 : index
    %118 = vector.load %arg10[%c0_164, %c0_165, %c0_166, %c0_167] : memref<2x2x32x8xf32, #tpu.memory_space<vmem>>, vector<1x1x32x8xf32>
    %119 = vector.shape_cast %118 : vector<1x1x32x8xf32> to vector<32x8xf32>
    %120 = arith.addf %119, %117 : vector<32x8xf32>
    %c0_168 = arith.constant 0 : index
    %c0_169 = arith.constant 0 : index
    %c0_170 = arith.constant 0 : index
    %c0_171 = arith.constant 0 : index
    %121 = vector.load %arg10[%c0_168, %c0_169, %c0_170, %c0_171] : memref<2x2x32x8xf32, #tpu.memory_space<vmem>>, vector<1x1x32x8xf32>
    %122 = vector.shape_cast %121 : vector<1x1x32x8xf32> to vector<32x8xf32>
    %123 = vector.shape_cast %120 : vector<32x8xf32> to vector<1x1x32x8xf32>
    tpu.vector_store %arg10[%c0_168, %c0_169, %c0_170, %c0_171], %123 {strides = array<i32>} : memref<2x2x32x8xf32, #tpu.memory_space<vmem>>, vector<1x1x32x8xf32>,
    %c1_172 = arith.constant 1 : index
    %c0_173 = arith.constant 0 : index
    %c0_174 = arith.constant 0 : index
    %c1_175 = arith.constant 1 : index
    %c0_176 = arith.constant 0 : index
    %124 = vector.load %arg9[%c1_172, %c0_173, %c0_174, %c1_175, %c0_176] : memref<2x2x6x10x16xbf16, #tpu.memory_space<vmem>>, vector<1x1x4x8x16xbf16>
    %125 = vector.shape_cast %124 : vector<1x1x4x8x16xbf16> to vector<4x8x16xbf16>
    %126 = vector.shape_cast %125 : vector<4x8x16xbf16> to vector<32x16xbf16>
    %c0_177 = arith.constant 0 : index
    %c0_178 = arith.constant 0 : index
    %c0_179 = arith.constant 0 : index
    %127 = vector.load %arg5[%c0_177, %c0_178, %c0_179] : memref<8x16x16xbf16, #tpu.memory_space<vmem>>, vector<1x16x16xbf16>
    %128 = vector.shape_cast %127 : vector<1x16x16xbf16> to vector<16x16xbf16>
    %cst_180 = arith.constant dense<0.000000e+00> : vector<32x16xf32>
    %129 = tpu.matmul %126, %128, %cst_180 {dimension_numbers = #tpu.dot_dimension_numbers<[1], [0], [0], [1], [0, 0, 1, 1], [], []>} : vector<32x16xbf16>, vector<16x16xbf16>, vector<32x16xf32> -> vector<32x16xf32>
    %c0_181 = arith.constant 0 : index
    %c0_182 = arith.constant 0 : index
    %c0_183 = arith.constant 0 : index
    %c0_184 = arith.constant 0 : index
    %130 = vector.load %arg10[%c0_181, %c0_182, %c0_183, %c0_184] : memref<2x2x32x8xf32, #tpu.memory_space<vmem>>, vector<1x1x32x8xf32>
    %131 = vector.shape_cast %130 : vector<1x1x32x8xf32> to vector<32x8xf32>
    %132 = vector.extract_strided_slice %129 {offsets = [0, 0], sizes = [32, 8], strides = [1, 1]} : vector<32x16xf32> to vector<32x8xf32>
    %133 = arith.addf %131, %132 : vector<32x8xf32>
    %c0_185 = arith.constant 0 : index
    %c0_186 = arith.constant 0 : index
    %c0_187 = arith.constant 0 : index
    %c0_188 = arith.constant 0 : index
    %134 = vector.load %arg10[%c0_185, %c0_186, %c0_187, %c0_188] : memref<2x2x32x8xf32, #tpu.memory_space<vmem>>, vector<1x1x32x8xf32>
    %135 = vector.shape_cast %134 : vector<1x1x32x8xf32> to vector<32x8xf32>
    %136 = vector.shape_cast %133 : vector<32x8xf32> to vector<1x1x32x8xf32>
    tpu.vector_store %arg10[%c0_185, %c0_186, %c0_187, %c0_188], %136 {strides = array<i32>} : memref<2x2x32x8xf32, #tpu.memory_space<vmem>>, vector<1x1x32x8xf32>,
    %c0_189 = arith.constant 0 : index
    %c1_190 = arith.constant 1 : index
    %c0_191 = arith.constant 0 : index
    %c0_192 = arith.constant 0 : index
    %137 = vector.load %arg10[%c0_189, %c1_190, %c0_191, %c0_192] : memref<2x2x32x8xf32, #tpu.memory_space<vmem>>, vector<1x1x32x8xf32>
    %138 = vector.shape_cast %137 : vector<1x1x32x8xf32> to vector<32x8xf32>
    %139 = vector.extract_strided_slice %129 {offsets = [0, 8], sizes = [32, 8], strides = [1, 1]} : vector<32x16xf32> to vector<32x8xf32>
    %140 = arith.addf %138, %139 : vector<32x8xf32>
    %c0_193 = arith.constant 0 : index
    %c1_194 = arith.constant 1 : index
    %c0_195 = arith.constant 0 : index
    %c0_196 = arith.constant 0 : index
    %141 = vector.load %arg10[%c0_193, %c1_194, %c0_195, %c0_196] : memref<2x2x32x8xf32, #tpu.memory_space<vmem>>, vector<1x1x32x8xf32>
    %142 = vector.shape_cast %141 : vector<1x1x32x8xf32> to vector<32x8xf32>
    %143 = vector.shape_cast %140 : vector<32x8xf32> to vector<1x1x32x8xf32>
    tpu.vector_store %arg10[%c0_193, %c1_194, %c0_195, %c0_196], %143 {strides = array<i32>} : memref<2x2x32x8xf32, #tpu.memory_space<vmem>>, vector<1x1x32x8xf32>,
    %c1_197 = arith.constant 1 : index
    %c1_198 = arith.constant 1 : index
    %c0_199 = arith.constant 0 : index
    %c1_200 = arith.constant 1 : index
    %c0_201 = arith.constant 0 : index
    %144 = vector.load %arg9[%c1_197, %c1_198, %c0_199, %c1_200, %c0_201] : memref<2x2x6x10x16xbf16, #tpu.memory_space<vmem>>, vector<1x1x4x8x16xbf16>
    %145 = vector.shape_cast %144 : vector<1x1x4x8x16xbf16> to vector<4x8x16xbf16>
    %146 = vector.shape_cast %145 : vector<4x8x16xbf16> to vector<32x16xbf16>
    %c1_202 = arith.constant 1 : index
    %c0_203 = arith.constant 0 : index
    %c0_204 = arith.constant 0 : index
    %147 = vector.load %arg5[%c1_202, %c0_203, %c0_204] : memref<8x16x16xbf16, #tpu.memory_space<vmem>>, vector<1x16x16xbf16>
    %148 = vector.shape_cast %147 : vector<1x16x16xbf16> to vector<16x16xbf16>
    %cst_205 = arith.constant dense<0.000000e+00> : vector<32x16xf32>
    %149 = tpu.matmul %146, %148, %cst_205 {dimension_numbers = #tpu.dot_dimension_numbers<[1], [0], [0], [1], [0, 0, 1, 1], [], []>} : vector<32x16xbf16>, vector<16x16xbf16>, vector<32x16xf32> -> vector<32x16xf32>
    %c0_206 = arith.constant 0 : index
    %c0_207 = arith.constant 0 : index
    %c0_208 = arith.constant 0 : index
    %c0_209 = arith.constant 0 : index
    %150 = vector.load %arg10[%c0_206, %c0_207, %c0_208, %c0_209] : memref<2x2x32x8xf32, #tpu.memory_space<vmem>>, vector<1x1x32x8xf32>
    %151 = vector.shape_cast %150 : vector<1x1x32x8xf32> to vector<32x8xf32>
    %152 = vector.extract_strided_slice %149 {offsets = [0, 0], sizes = [32, 8], strides = [1, 1]} : vector<32x16xf32> to vector<32x8xf32>
    %153 = arith.addf %151, %152 : vector<32x8xf32>
    %c0_210 = arith.constant 0 : index
    %c0_211 = arith.constant 0 : index
    %c0_212 = arith.constant 0 : index
    %c0_213 = arith.constant 0 : index
    %154 = vector.load %arg10[%c0_210, %c0_211, %c0_212, %c0_213] : memref<2x2x32x8xf32, #tpu.memory_space<vmem>>, vector<1x1x32x8xf32>
    %155 = vector.shape_cast %154 : vector<1x1x32x8xf32> to vector<32x8xf32>
    %156 = vector.shape_cast %153 : vector<32x8xf32> to vector<1x1x32x8xf32>
    tpu.vector_store %arg10[%c0_210, %c0_211, %c0_212, %c0_213], %156 {strides = array<i32>} : memref<2x2x32x8xf32, #tpu.memory_space<vmem>>, vector<1x1x32x8xf32>,
    %c0_214 = arith.constant 0 : index
    %c1_215 = arith.constant 1 : index
    %c0_216 = arith.constant 0 : index
    %c0_217 = arith.constant 0 : index
    %157 = vector.load %arg10[%c0_214, %c1_215, %c0_216, %c0_217] : memref<2x2x32x8xf32, #tpu.memory_space<vmem>>, vector<1x1x32x8xf32>
    %158 = vector.shape_cast %157 : vector<1x1x32x8xf32> to vector<32x8xf32>
    %159 = vector.extract_strided_slice %149 {offsets = [0, 8], sizes = [32, 8], strides = [1, 1]} : vector<32x16xf32> to vector<32x8xf32>
    %160 = arith.addf %158, %159 : vector<32x8xf32>
    %c0_218 = arith.constant 0 : index
    %c1_219 = arith.constant 1 : index
    %c0_220 = arith.constant 0 : index
    %c0_221 = arith.constant 0 : index
    %161 = vector.load %arg10[%c0_218, %c1_219, %c0_220, %c0_221] : memref<2x2x32x8xf32, #tpu.memory_space<vmem>>, vector<1x1x32x8xf32>
    %162 = vector.shape_cast %161 : vector<1x1x32x8xf32> to vector<32x8xf32>
    %163 = vector.shape_cast %160 : vector<32x8xf32> to vector<1x1x32x8xf32>
    tpu.vector_store %arg10[%c0_218, %c1_219, %c0_220, %c0_221], %163 {strides = array<i32>} : memref<2x2x32x8xf32, #tpu.memory_space<vmem>>, vector<1x1x32x8xf32>,
    %c1_222 = arith.constant 1 : index
    %c0_223 = arith.constant 0 : index
    %c0_224 = arith.constant 0 : index
    %c2 = arith.constant 2 : index
    %c0_225 = arith.constant 0 : index
    %164 = vector.load %arg9[%c1_222, %c0_223, %c0_224, %c2, %c0_225] : memref<2x2x6x10x16xbf16, #tpu.memory_space<vmem>>, vector<1x1x4x8x16xbf16>
    %165 = vector.shape_cast %164 : vector<1x1x4x8x16xbf16> to vector<4x8x16xbf16>
    %166 = vector.shape_cast %165 : vector<4x8x16xbf16> to vector<32x16xbf16>
    %c1_226 = arith.constant 1 : index
    %c0_227 = arith.constant 0 : index
    %c0_228 = arith.constant 0 : index
    %167 = vector.load %arg4[%c1_226, %c0_227, %c0_228] : memref<4x16x8xbf16, #tpu.memory_space<vmem>>, vector<1x16x8xbf16>
    %168 = vector.shape_cast %167 : vector<1x16x8xbf16> to vector<16x8xbf16>
    %cst_229 = arith.constant dense<0.000000e+00> : vector<32x8xf32>
    %169 = tpu.matmul %166, %168, %cst_229 {dimension_numbers = #tpu.dot_dimension_numbers<[1], [0], [0], [1], [0, 0, 1, 1], [], []>} : vector<32x16xbf16>, vector<16x8xbf16>, vector<32x8xf32> -> vector<32x8xf32>
    %c0_230 = arith.constant 0 : index
    %c1_231 = arith.constant 1 : index
    %c0_232 = arith.constant 0 : index
    %c0_233 = arith.constant 0 : index
    %170 = vector.load %arg10[%c0_230, %c1_231, %c0_232, %c0_233] : memref<2x2x32x8xf32, #tpu.memory_space<vmem>>, vector<1x1x32x8xf32>
    %171 = vector.shape_cast %170 : vector<1x1x32x8xf32> to vector<32x8xf32>
    %172 = arith.addf %171, %169 : vector<32x8xf32>
    %c0_234 = arith.constant 0 : index
    %c1_235 = arith.constant 1 : index
    %c0_236 = arith.constant 0 : index
    %c0_237 = arith.constant 0 : index
    %173 = vector.load %arg10[%c0_234, %c1_235, %c0_236, %c0_237] : memref<2x2x32x8xf32, #tpu.memory_space<vmem>>, vector<1x1x32x8xf32>
    %174 = vector.shape_cast %173 : vector<1x1x32x8xf32> to vector<32x8xf32>
    %175 = vector.shape_cast %172 : vector<32x8xf32> to vector<1x1x32x8xf32>
    tpu.vector_store %arg10[%c0_234, %c1_235, %c0_236, %c0_237], %175 {strides = array<i32>} : memref<2x2x32x8xf32, #tpu.memory_space<vmem>>, vector<1x1x32x8xf32>,
    %c0_238 = arith.constant 0 : index
    %c1_239 = arith.constant 1 : index
    %c1_240 = arith.constant 1 : index
    %c0_241 = arith.constant 0 : index
    %c0_242 = arith.constant 0 : index
    %176 = vector.load %arg9[%c0_238, %c1_239, %c1_240, %c0_241, %c0_242] : memref<2x2x6x10x16xbf16, #tpu.memory_space<vmem>>, vector<1x1x4x8x16xbf16>
    %177 = vector.shape_cast %176 : vector<1x1x4x8x16xbf16> to vector<4x8x16xbf16>
    %178 = vector.shape_cast %177 : vector<4x8x16xbf16> to vector<32x16xbf16>
    %c2_243 = arith.constant 2 : index
    %c0_244 = arith.constant 0 : index
    %c0_245 = arith.constant 0 : index
    %179 = vector.load %arg5[%c2_243, %c0_244, %c0_245] : memref<8x16x16xbf16, #tpu.memory_space<vmem>>, vector<1x16x16xbf16>
    %180 = vector.shape_cast %179 : vector<1x16x16xbf16> to vector<16x16xbf16>
    %cst_246 = arith.constant dense<0.000000e+00> : vector<32x16xf32>
    %181 = tpu.matmul %178, %180, %cst_246 {dimension_numbers = #tpu.dot_dimension_numbers<[1], [0], [0], [1], [0, 0, 1, 1], [], []>} : vector<32x16xbf16>, vector<16x16xbf16>, vector<32x16xf32> -> vector<32x16xf32>
    %c0_247 = arith.constant 0 : index
    %c0_248 = arith.constant 0 : index
    %c0_249 = arith.constant 0 : index
    %c0_250 = arith.constant 0 : index
    %182 = vector.load %arg10[%c0_247, %c0_248, %c0_249, %c0_250] : memref<2x2x32x8xf32, #tpu.memory_space<vmem>>, vector<1x1x32x8xf32>
    %183 = vector.shape_cast %182 : vector<1x1x32x8xf32> to vector<32x8xf32>
    %184 = vector.extract_strided_slice %181 {offsets = [0, 0], sizes = [32, 8], strides = [1, 1]} : vector<32x16xf32> to vector<32x8xf32>
    %185 = arith.addf %183, %184 : vector<32x8xf32>
    %c0_251 = arith.constant 0 : index
    %c0_252 = arith.constant 0 : index
    %c0_253 = arith.constant 0 : index
    %c0_254 = arith.constant 0 : index
    %186 = vector.load %arg10[%c0_251, %c0_252, %c0_253, %c0_254] : memref<2x2x32x8xf32, #tpu.memory_space<vmem>>, vector<1x1x32x8xf32>
    %187 = vector.shape_cast %186 : vector<1x1x32x8xf32> to vector<32x8xf32>
    %188 = vector.shape_cast %185 : vector<32x8xf32> to vector<1x1x32x8xf32>
    tpu.vector_store %arg10[%c0_251, %c0_252, %c0_253, %c0_254], %188 {strides = array<i32>} : memref<2x2x32x8xf32, #tpu.memory_space<vmem>>, vector<1x1x32x8xf32>,
    %c1_255 = arith.constant 1 : index
    %c0_256 = arith.constant 0 : index
    %c0_257 = arith.constant 0 : index
    %c0_258 = arith.constant 0 : index
    %189 = vector.load %arg10[%c1_255, %c0_256, %c0_257, %c0_258] : memref<2x2x32x8xf32, #tpu.memory_space<vmem>>, vector<1x1x32x8xf32>
    %190 = vector.shape_cast %189 : vector<1x1x32x8xf32> to vector<32x8xf32>
    %191 = vector.extract_strided_slice %181 {offsets = [0, 8], sizes = [32, 8], strides = [1, 1]} : vector<32x16xf32> to vector<32x8xf32>
    %192 = arith.addf %190, %191 : vector<32x8xf32>
    %c1_259 = arith.constant 1 : index
    %c0_260 = arith.constant 0 : index
    %c0_261 = arith.constant 0 : index
    %c0_262 = arith.constant 0 : index
    %193 = vector.load %arg10[%c1_259, %c0_260, %c0_261, %c0_262] : memref<2x2x32x8xf32, #tpu.memory_space<vmem>>, vector<1x1x32x8xf32>
    %194 = vector.shape_cast %193 : vector<1x1x32x8xf32> to vector<32x8xf32>
    %195 = vector.shape_cast %192 : vector<32x8xf32> to vector<1x1x32x8xf32>
    tpu.vector_store %arg10[%c1_259, %c0_260, %c0_261, %c0_262], %195 {strides = array<i32>} : memref<2x2x32x8xf32, #tpu.memory_space<vmem>>, vector<1x1x32x8xf32>,
    %c0_263 = arith.constant 0 : index
    %c0_264 = arith.constant 0 : index
    %c1_265 = arith.constant 1 : index
    %c1_266 = arith.constant 1 : index
    %c0_267 = arith.constant 0 : index
    %196 = vector.load %arg9[%c0_263, %c0_264, %c1_265, %c1_266, %c0_267] : memref<2x2x6x10x16xbf16, #tpu.memory_space<vmem>>, vector<1x1x4x8x16xbf16>
    %197 = vector.shape_cast %196 : vector<1x1x4x8x16xbf16> to vector<4x8x16xbf16>
    %198 = vector.shape_cast %197 : vector<4x8x16xbf16> to vector<32x16xbf16>
    %c0_268 = arith.constant 0 : index
    %c0_269 = arith.constant 0 : index
    %c0_270 = arith.constant 0 : index
    %199 = vector.load %arg6[%c0_268, %c0_269, %c0_270] : memref<4x16x32xbf16, #tpu.memory_space<vmem>>, vector<1x16x32xbf16>
    %200 = vector.shape_cast %199 : vector<1x16x32xbf16> to vector<16x32xbf16>
    %cst_271 = arith.constant dense<0.000000e+00> : vector<32x32xf32>
    %201 = tpu.matmul %198, %200, %cst_271 {dimension_numbers = #tpu.dot_dimension_numbers<[1], [0], [0], [1], [0, 0, 1, 1], [], []>} : vector<32x16xbf16>, vector<16x32xbf16>, vector<32x32xf32> -> vector<32x32xf32>
    %c0_272 = arith.constant 0 : index
    %c0_273 = arith.constant 0 : index
    %c0_274 = arith.constant 0 : index
    %c0_275 = arith.constant 0 : index
    %202 = vector.load %arg10[%c0_272, %c0_273, %c0_274, %c0_275] : memref<2x2x32x8xf32, #tpu.memory_space<vmem>>, vector<1x1x32x8xf32>
    %203 = vector.shape_cast %202 : vector<1x1x32x8xf32> to vector<32x8xf32>
    %204 = vector.extract_strided_slice %201 {offsets = [0, 0], sizes = [32, 8], strides = [1, 1]} : vector<32x32xf32> to vector<32x8xf32>
    %205 = arith.addf %203, %204 : vector<32x8xf32>
    %c0_276 = arith.constant 0 : index
    %c0_277 = arith.constant 0 : index
    %c0_278 = arith.constant 0 : index
    %c0_279 = arith.constant 0 : index
    %206 = vector.load %arg10[%c0_276, %c0_277, %c0_278, %c0_279] : memref<2x2x32x8xf32, #tpu.memory_space<vmem>>, vector<1x1x32x8xf32>
    %207 = vector.shape_cast %206 : vector<1x1x32x8xf32> to vector<32x8xf32>
    %208 = vector.shape_cast %205 : vector<32x8xf32> to vector<1x1x32x8xf32>
    tpu.vector_store %arg10[%c0_276, %c0_277, %c0_278, %c0_279], %208 {strides = array<i32>} : memref<2x2x32x8xf32, #tpu.memory_space<vmem>>, vector<1x1x32x8xf32>,
    %c0_280 = arith.constant 0 : index
    %c1_281 = arith.constant 1 : index
    %c0_282 = arith.constant 0 : index
    %c0_283 = arith.constant 0 : index
    %209 = vector.load %arg10[%c0_280, %c1_281, %c0_282, %c0_283] : memref<2x2x32x8xf32, #tpu.memory_space<vmem>>, vector<1x1x32x8xf32>
    %210 = vector.shape_cast %209 : vector<1x1x32x8xf32> to vector<32x8xf32>
    %211 = vector.extract_strided_slice %201 {offsets = [0, 8], sizes = [32, 8], strides = [1, 1]} : vector<32x32xf32> to vector<32x8xf32>
    %212 = arith.addf %210, %211 : vector<32x8xf32>
    %c0_284 = arith.constant 0 : index
    %c1_285 = arith.constant 1 : index
    %c0_286 = arith.constant 0 : index
    %c0_287 = arith.constant 0 : index
    %213 = vector.load %arg10[%c0_284, %c1_285, %c0_286, %c0_287] : memref<2x2x32x8xf32, #tpu.memory_space<vmem>>, vector<1x1x32x8xf32>
    %214 = vector.shape_cast %213 : vector<1x1x32x8xf32> to vector<32x8xf32>
    %215 = vector.shape_cast %212 : vector<32x8xf32> to vector<1x1x32x8xf32>
    tpu.vector_store %arg10[%c0_284, %c1_285, %c0_286, %c0_287], %215 {strides = array<i32>} : memref<2x2x32x8xf32, #tpu.memory_space<vmem>>, vector<1x1x32x8xf32>,
    %c1_288 = arith.constant 1 : index
    %c0_289 = arith.constant 0 : index
    %c0_290 = arith.constant 0 : index
    %c0_291 = arith.constant 0 : index
    %216 = vector.load %arg10[%c1_288, %c0_289, %c0_290, %c0_291] : memref<2x2x32x8xf32, #tpu.memory_space<vmem>>, vector<1x1x32x8xf32>
    %217 = vector.shape_cast %216 : vector<1x1x32x8xf32> to vector<32x8xf32>
    %218 = vector.extract_strided_slice %201 {offsets = [0, 16], sizes = [32, 8], strides = [1, 1]} : vector<32x32xf32> to vector<32x8xf32>
    %219 = arith.addf %217, %218 : vector<32x8xf32>
    %c1_292 = arith.constant 1 : index
    %c0_293 = arith.constant 0 : index
    %c0_294 = arith.constant 0 : index
    %c0_295 = arith.constant 0 : index
    %220 = vector.load %arg10[%c1_292, %c0_293, %c0_294, %c0_295] : memref<2x2x32x8xf32, #tpu.memory_space<vmem>>, vector<1x1x32x8xf32>
    %221 = vector.shape_cast %220 : vector<1x1x32x8xf32> to vector<32x8xf32>
    %222 = vector.shape_cast %219 : vector<32x8xf32> to vector<1x1x32x8xf32>
    tpu.vector_store %arg10[%c1_292, %c0_293, %c0_294, %c0_295], %222 {strides = array<i32>} : memref<2x2x32x8xf32, #tpu.memory_space<vmem>>, vector<1x1x32x8xf32>,
    %c1_296 = arith.constant 1 : index
    %c1_297 = arith.constant 1 : index
    %c0_298 = arith.constant 0 : index
    %c0_299 = arith.constant 0 : index
    %223 = vector.load %arg10[%c1_296, %c1_297, %c0_298, %c0_299] : memref<2x2x32x8xf32, #tpu.memory_space<vmem>>, vector<1x1x32x8xf32>
    %224 = vector.shape_cast %223 : vector<1x1x32x8xf32> to vector<32x8xf32>
    %225 = vector.extract_strided_slice %201 {offsets = [0, 24], sizes = [32, 8], strides = [1, 1]} : vector<32x32xf32> to vector<32x8xf32>
    %226 = arith.addf %224, %225 : vector<32x8xf32>
    %c1_300 = arith.constant 1 : index
    %c1_301 = arith.constant 1 : index
    %c0_302 = arith.constant 0 : index
    %c0_303 = arith.constant 0 : index
    %227 = vector.load %arg10[%c1_300, %c1_301, %c0_302, %c0_303] : memref<2x2x32x8xf32, #tpu.memory_space<vmem>>, vector<1x1x32x8xf32>
    %228 = vector.shape_cast %227 : vector<1x1x32x8xf32> to vector<32x8xf32>
    %229 = vector.shape_cast %226 : vector<32x8xf32> to vector<1x1x32x8xf32>
    tpu.vector_store %arg10[%c1_300, %c1_301, %c0_302, %c0_303], %229 {strides = array<i32>} : memref<2x2x32x8xf32, #tpu.memory_space<vmem>>, vector<1x1x32x8xf32>,
    %c0_304 = arith.constant 0 : index
    %c1_305 = arith.constant 1 : index
    %c1_306 = arith.constant 1 : index
    %c1_307 = arith.constant 1 : index
    %c0_308 = arith.constant 0 : index
    %230 = vector.load %arg9[%c0_304, %c1_305, %c1_306, %c1_307, %c0_308] : memref<2x2x6x10x16xbf16, #tpu.memory_space<vmem>>, vector<1x1x4x8x16xbf16>
    %231 = vector.shape_cast %230 : vector<1x1x4x8x16xbf16> to vector<4x8x16xbf16>
    %232 = vector.shape_cast %231 : vector<4x8x16xbf16> to vector<32x16xbf16>
    %c1_309 = arith.constant 1 : index
    %c0_310 = arith.constant 0 : index
    %c0_311 = arith.constant 0 : index
    %233 = vector.load %arg6[%c1_309, %c0_310, %c0_311] : memref<4x16x32xbf16, #tpu.memory_space<vmem>>, vector<1x16x32xbf16>
    %234 = vector.shape_cast %233 : vector<1x16x32xbf16> to vector<16x32xbf16>
    %cst_312 = arith.constant dense<0.000000e+00> : vector<32x32xf32>
    %235 = tpu.matmul %232, %234, %cst_312 {dimension_numbers = #tpu.dot_dimension_numbers<[1], [0], [0], [1], [0, 0, 1, 1], [], []>} : vector<32x16xbf16>, vector<16x32xbf16>, vector<32x32xf32> -> vector<32x32xf32>
    %c0_313 = arith.constant 0 : index
    %c0_314 = arith.constant 0 : index
    %c0_315 = arith.constant 0 : index
    %c0_316 = arith.constant 0 : index
    %236 = vector.load %arg10[%c0_313, %c0_314, %c0_315, %c0_316] : memref<2x2x32x8xf32, #tpu.memory_space<vmem>>, vector<1x1x32x8xf32>
    %237 = vector.shape_cast %236 : vector<1x1x32x8xf32> to vector<32x8xf32>
    %238 = vector.extract_strided_slice %235 {offsets = [0, 0], sizes = [32, 8], strides = [1, 1]} : vector<32x32xf32> to vector<32x8xf32>
    %239 = arith.addf %237, %238 : vector<32x8xf32>
    %c0_317 = arith.constant 0 : index
    %c0_318 = arith.constant 0 : index
    %c0_319 = arith.constant 0 : index
    %c0_320 = arith.constant 0 : index
    %240 = vector.load %arg10[%c0_317, %c0_318, %c0_319, %c0_320] : memref<2x2x32x8xf32, #tpu.memory_space<vmem>>, vector<1x1x32x8xf32>
    %241 = vector.shape_cast %240 : vector<1x1x32x8xf32> to vector<32x8xf32>
    %242 = vector.shape_cast %239 : vector<32x8xf32> to vector<1x1x32x8xf32>
    tpu.vector_store %arg10[%c0_317, %c0_318, %c0_319, %c0_320], %242 {strides = array<i32>} : memref<2x2x32x8xf32, #tpu.memory_space<vmem>>, vector<1x1x32x8xf32>,
    %c0_321 = arith.constant 0 : index
    %c1_322 = arith.constant 1 : index
    %c0_323 = arith.constant 0 : index
    %c0_324 = arith.constant 0 : index
    %243 = vector.load %arg10[%c0_321, %c1_322, %c0_323, %c0_324] : memref<2x2x32x8xf32, #tpu.memory_space<vmem>>, vector<1x1x32x8xf32>
    %244 = vector.shape_cast %243 : vector<1x1x32x8xf32> to vector<32x8xf32>
    %245 = vector.extract_strided_slice %235 {offsets = [0, 8], sizes = [32, 8], strides = [1, 1]} : vector<32x32xf32> to vector<32x8xf32>
    %246 = arith.addf %244, %245 : vector<32x8xf32>
    %c0_325 = arith.constant 0 : index
    %c1_326 = arith.constant 1 : index
    %c0_327 = arith.constant 0 : index
    %c0_328 = arith.constant 0 : index
    %247 = vector.load %arg10[%c0_325, %c1_326, %c0_327, %c0_328] : memref<2x2x32x8xf32, #tpu.memory_space<vmem>>, vector<1x1x32x8xf32>
    %248 = vector.shape_cast %247 : vector<1x1x32x8xf32> to vector<32x8xf32>
    %249 = vector.shape_cast %246 : vector<32x8xf32> to vector<1x1x32x8xf32>
    tpu.vector_store %arg10[%c0_325, %c1_326, %c0_327, %c0_328], %249 {strides = array<i32>} : memref<2x2x32x8xf32, #tpu.memory_space<vmem>>, vector<1x1x32x8xf32>,
    %c1_329 = arith.constant 1 : index
    %c0_330 = arith.constant 0 : index
    %c0_331 = arith.constant 0 : index
    %c0_332 = arith.constant 0 : index
    %250 = vector.load %arg10[%c1_329, %c0_330, %c0_331, %c0_332] : memref<2x2x32x8xf32, #tpu.memory_space<vmem>>, vector<1x1x32x8xf32>
    %251 = vector.shape_cast %250 : vector<1x1x32x8xf32> to vector<32x8xf32>
    %252 = vector.extract_strided_slice %235 {offsets = [0, 16], sizes = [32, 8], strides = [1, 1]} : vector<32x32xf32> to vector<32x8xf32>
    %253 = arith.addf %251, %252 : vector<32x8xf32>
    %c1_333 = arith.constant 1 : index
    %c0_334 = arith.constant 0 : index
    %c0_335 = arith.constant 0 : index
    %c0_336 = arith.constant 0 : index
    %254 = vector.load %arg10[%c1_333, %c0_334, %c0_335, %c0_336] : memref<2x2x32x8xf32, #tpu.memory_space<vmem>>, vector<1x1x32x8xf32>
    %255 = vector.shape_cast %254 : vector<1x1x32x8xf32> to vector<32x8xf32>
    %256 = vector.shape_cast %253 : vector<32x8xf32> to vector<1x1x32x8xf32>
    tpu.vector_store %arg10[%c1_333, %c0_334, %c0_335, %c0_336], %256 {strides = array<i32>} : memref<2x2x32x8xf32, #tpu.memory_space<vmem>>, vector<1x1x32x8xf32>,
    %c1_337 = arith.constant 1 : index
    %c1_338 = arith.constant 1 : index
    %c0_339 = arith.constant 0 : index
    %c0_340 = arith.constant 0 : index
    %257 = vector.load %arg10[%c1_337, %c1_338, %c0_339, %c0_340] : memref<2x2x32x8xf32, #tpu.memory_space<vmem>>, vector<1x1x32x8xf32>
    %258 = vector.shape_cast %257 : vector<1x1x32x8xf32> to vector<32x8xf32>
    %259 = vector.extract_strided_slice %235 {offsets = [0, 24], sizes = [32, 8], strides = [1, 1]} : vector<32x32xf32> to vector<32x8xf32>
    %260 = arith.addf %258, %259 : vector<32x8xf32>
    %c1_341 = arith.constant 1 : index
    %c1_342 = arith.constant 1 : index
    %c0_343 = arith.constant 0 : index
    %c0_344 = arith.constant 0 : index
    %261 = vector.load %arg10[%c1_341, %c1_342, %c0_343, %c0_344] : memref<2x2x32x8xf32, #tpu.memory_space<vmem>>, vector<1x1x32x8xf32>
    %262 = vector.shape_cast %261 : vector<1x1x32x8xf32> to vector<32x8xf32>
    %263 = vector.shape_cast %260 : vector<32x8xf32> to vector<1x1x32x8xf32>
    tpu.vector_store %arg10[%c1_341, %c1_342, %c0_343, %c0_344], %263 {strides = array<i32>} : memref<2x2x32x8xf32, #tpu.memory_space<vmem>>, vector<1x1x32x8xf32>,
    %c0_345 = arith.constant 0 : index
    %c0_346 = arith.constant 0 : index
    %c1_347 = arith.constant 1 : index
    %c2_348 = arith.constant 2 : index
    %c0_349 = arith.constant 0 : index
    %264 = vector.load %arg9[%c0_345, %c0_346, %c1_347, %c2_348, %c0_349] : memref<2x2x6x10x16xbf16, #tpu.memory_space<vmem>>, vector<1x1x4x8x16xbf16>
    %265 = vector.shape_cast %264 : vector<1x1x4x8x16xbf16> to vector<4x8x16xbf16>
    %266 = vector.shape_cast %265 : vector<4x8x16xbf16> to vector<32x16xbf16>
    %c3 = arith.constant 3 : index
    %c0_350 = arith.constant 0 : index
    %c0_351 = arith.constant 0 : index
    %267 = vector.load %arg5[%c3, %c0_350, %c0_351] : memref<8x16x16xbf16, #tpu.memory_space<vmem>>, vector<1x16x16xbf16>
    %268 = vector.shape_cast %267 : vector<1x16x16xbf16> to vector<16x16xbf16>
    %cst_352 = arith.constant dense<0.000000e+00> : vector<32x16xf32>
    %269 = tpu.matmul %266, %268, %cst_352 {dimension_numbers = #tpu.dot_dimension_numbers<[1], [0], [0], [1], [0, 0, 1, 1], [], []>} : vector<32x16xbf16>, vector<16x16xbf16>, vector<32x16xf32> -> vector<32x16xf32>
    %c0_353 = arith.constant 0 : index
    %c1_354 = arith.constant 1 : index
    %c0_355 = arith.constant 0 : index
    %c0_356 = arith.constant 0 : index
    %270 = vector.load %arg10[%c0_353, %c1_354, %c0_355, %c0_356] : memref<2x2x32x8xf32, #tpu.memory_space<vmem>>, vector<1x1x32x8xf32>
    %271 = vector.shape_cast %270 : vector<1x1x32x8xf32> to vector<32x8xf32>
    %272 = vector.extract_strided_slice %269 {offsets = [0, 0], sizes = [32, 8], strides = [1, 1]} : vector<32x16xf32> to vector<32x8xf32>
    %273 = arith.addf %271, %272 : vector<32x8xf32>
    %c0_357 = arith.constant 0 : index
    %c1_358 = arith.constant 1 : index
    %c0_359 = arith.constant 0 : index
    %c0_360 = arith.constant 0 : index
    %274 = vector.load %arg10[%c0_357, %c1_358, %c0_359, %c0_360] : memref<2x2x32x8xf32, #tpu.memory_space<vmem>>, vector<1x1x32x8xf32>
    %275 = vector.shape_cast %274 : vector<1x1x32x8xf32> to vector<32x8xf32>
    %276 = vector.shape_cast %273 : vector<32x8xf32> to vector<1x1x32x8xf32>
    tpu.vector_store %arg10[%c0_357, %c1_358, %c0_359, %c0_360], %276 {strides = array<i32>} : memref<2x2x32x8xf32, #tpu.memory_space<vmem>>, vector<1x1x32x8xf32>,
    %c1_361 = arith.constant 1 : index
    %c1_362 = arith.constant 1 : index
    %c0_363 = arith.constant 0 : index
    %c0_364 = arith.constant 0 : index
    %277 = vector.load %arg10[%c1_361, %c1_362, %c0_363, %c0_364] : memref<2x2x32x8xf32, #tpu.memory_space<vmem>>, vector<1x1x32x8xf32>
    %278 = vector.shape_cast %277 : vector<1x1x32x8xf32> to vector<32x8xf32>
    %279 = vector.extract_strided_slice %269 {offsets = [0, 8], sizes = [32, 8], strides = [1, 1]} : vector<32x16xf32> to vector<32x8xf32>
    %280 = arith.addf %278, %279 : vector<32x8xf32>
    %c1_365 = arith.constant 1 : index
    %c1_366 = arith.constant 1 : index
    %c0_367 = arith.constant 0 : index
    %c0_368 = arith.constant 0 : index
    %281 = vector.load %arg10[%c1_365, %c1_366, %c0_367, %c0_368] : memref<2x2x32x8xf32, #tpu.memory_space<vmem>>, vector<1x1x32x8xf32>
    %282 = vector.shape_cast %281 : vector<1x1x32x8xf32> to vector<32x8xf32>
    %283 = vector.shape_cast %280 : vector<32x8xf32> to vector<1x1x32x8xf32>
    tpu.vector_store %arg10[%c1_365, %c1_366, %c0_367, %c0_368], %283 {strides = array<i32>} : memref<2x2x32x8xf32, #tpu.memory_space<vmem>>, vector<1x1x32x8xf32>,
    %c1_369 = arith.constant 1 : index
    %c1_370 = arith.constant 1 : index
    %c1_371 = arith.constant 1 : index
    %c0_372 = arith.constant 0 : index
    %c0_373 = arith.constant 0 : index
    %284 = vector.load %arg9[%c1_369, %c1_370, %c1_371, %c0_372, %c0_373] : memref<2x2x6x10x16xbf16, #tpu.memory_space<vmem>>, vector<1x1x4x8x16xbf16>
    %285 = vector.shape_cast %284 : vector<1x1x4x8x16xbf16> to vector<4x8x16xbf16>
    %286 = vector.shape_cast %285 : vector<4x8x16xbf16> to vector<32x16xbf16>
    %c4_374 = arith.constant 4 : index
    %c0_375 = arith.constant 0 : index
    %c0_376 = arith.constant 0 : index
    %287 = vector.load %arg5[%c4_374, %c0_375, %c0_376] : memref<8x16x16xbf16, #tpu.memory_space<vmem>>, vector<1x16x16xbf16>
    %288 = vector.shape_cast %287 : vector<1x16x16xbf16> to vector<16x16xbf16>
    %cst_377 = arith.constant dense<0.000000e+00> : vector<32x16xf32>
    %289 = tpu.matmul %286, %288, %cst_377 {dimension_numbers = #tpu.dot_dimension_numbers<[1], [0], [0], [1], [0, 0, 1, 1], [], []>} : vector<32x16xbf16>, vector<16x16xbf16>, vector<32x16xf32> -> vector<32x16xf32>
    %c0_378 = arith.constant 0 : index
    %c0_379 = arith.constant 0 : index
    %c0_380 = arith.constant 0 : index
    %c0_381 = arith.constant 0 : index
    %290 = vector.load %arg10[%c0_378, %c0_379, %c0_380, %c0_381] : memref<2x2x32x8xf32, #tpu.memory_space<vmem>>, vector<1x1x32x8xf32>
    %291 = vector.shape_cast %290 : vector<1x1x32x8xf32> to vector<32x8xf32>
    %292 = vector.extract_strided_slice %289 {offsets = [0, 0], sizes = [32, 8], strides = [1, 1]} : vector<32x16xf32> to vector<32x8xf32>
    %293 = arith.addf %291, %292 : vector<32x8xf32>
    %c0_382 = arith.constant 0 : index
    %c0_383 = arith.constant 0 : index
    %c0_384 = arith.constant 0 : index
    %c0_385 = arith.constant 0 : index
    %294 = vector.load %arg10[%c0_382, %c0_383, %c0_384, %c0_385] : memref<2x2x32x8xf32, #tpu.memory_space<vmem>>, vector<1x1x32x8xf32>
    %295 = vector.shape_cast %294 : vector<1x1x32x8xf32> to vector<32x8xf32>
    %296 = vector.shape_cast %293 : vector<32x8xf32> to vector<1x1x32x8xf32>
    tpu.vector_store %arg10[%c0_382, %c0_383, %c0_384, %c0_385], %296 {strides = array<i32>} : memref<2x2x32x8xf32, #tpu.memory_space<vmem>>, vector<1x1x32x8xf32>,
    %c1_386 = arith.constant 1 : index
    %c0_387 = arith.constant 0 : index
    %c0_388 = arith.constant 0 : index
    %c0_389 = arith.constant 0 : index
    %297 = vector.load %arg10[%c1_386, %c0_387, %c0_388, %c0_389] : memref<2x2x32x8xf32, #tpu.memory_space<vmem>>, vector<1x1x32x8xf32>
    %298 = vector.shape_cast %297 : vector<1x1x32x8xf32> to vector<32x8xf32>
    %299 = vector.extract_strided_slice %289 {offsets = [0, 8], sizes = [32, 8], strides = [1, 1]} : vector<32x16xf32> to vector<32x8xf32>
    %300 = arith.addf %298, %299 : vector<32x8xf32>
    %c1_390 = arith.constant 1 : index
    %c0_391 = arith.constant 0 : index
    %c0_392 = arith.constant 0 : index
    %c0_393 = arith.constant 0 : index
    %301 = vector.load %arg10[%c1_390, %c0_391, %c0_392, %c0_393] : memref<2x2x32x8xf32, #tpu.memory_space<vmem>>, vector<1x1x32x8xf32>
    %302 = vector.shape_cast %301 : vector<1x1x32x8xf32> to vector<32x8xf32>
    %303 = vector.shape_cast %300 : vector<32x8xf32> to vector<1x1x32x8xf32>
    tpu.vector_store %arg10[%c1_390, %c0_391, %c0_392, %c0_393], %303 {strides = array<i32>} : memref<2x2x32x8xf32, #tpu.memory_space<vmem>>, vector<1x1x32x8xf32>,
    %c1_394 = arith.constant 1 : index
    %c0_395 = arith.constant 0 : index
    %c1_396 = arith.constant 1 : index
    %c1_397 = arith.constant 1 : index
    %c0_398 = arith.constant 0 : index
    %304 = vector.load %arg9[%c1_394, %c0_395, %c1_396, %c1_397, %c0_398] : memref<2x2x6x10x16xbf16, #tpu.memory_space<vmem>>, vector<1x1x4x8x16xbf16>
    %305 = vector.shape_cast %304 : vector<1x1x4x8x16xbf16> to vector<4x8x16xbf16>
    %306 = vector.shape_cast %305 : vector<4x8x16xbf16> to vector<32x16xbf16>
    %c2_399 = arith.constant 2 : index
    %c0_400 = arith.constant 0 : index
    %c0_401 = arith.constant 0 : index
    %307 = vector.load %arg6[%c2_399, %c0_400, %c0_401] : memref<4x16x32xbf16, #tpu.memory_space<vmem>>, vector<1x16x32xbf16>
    %308 = vector.shape_cast %307 : vector<1x16x32xbf16> to vector<16x32xbf16>
    %cst_402 = arith.constant dense<0.000000e+00> : vector<32x32xf32>
    %309 = tpu.matmul %306, %308, %cst_402 {dimension_numbers = #tpu.dot_dimension_numbers<[1], [0], [0], [1], [0, 0, 1, 1], [], []>} : vector<32x16xbf16>, vector<16x32xbf16>, vector<32x32xf32> -> vector<32x32xf32>
    %c0_403 = arith.constant 0 : index
    %c0_404 = arith.constant 0 : index
    %c0_405 = arith.constant 0 : index
    %c0_406 = arith.constant 0 : index
    %310 = vector.load %arg10[%c0_403, %c0_404, %c0_405, %c0_406] : memref<2x2x32x8xf32, #tpu.memory_space<vmem>>, vector<1x1x32x8xf32>
    %311 = vector.shape_cast %310 : vector<1x1x32x8xf32> to vector<32x8xf32>
    %312 = vector.extract_strided_slice %309 {offsets = [0, 0], sizes = [32, 8], strides = [1, 1]} : vector<32x32xf32> to vector<32x8xf32>
    %313 = arith.addf %311, %312 : vector<32x8xf32>
    %c0_407 = arith.constant 0 : index
    %c0_408 = arith.constant 0 : index
    %c0_409 = arith.constant 0 : index
    %c0_410 = arith.constant 0 : index
    %314 = vector.load %arg10[%c0_407, %c0_408, %c0_409, %c0_410] : memref<2x2x32x8xf32, #tpu.memory_space<vmem>>, vector<1x1x32x8xf32>
    %315 = vector.shape_cast %314 : vector<1x1x32x8xf32> to vector<32x8xf32>
    %316 = vector.shape_cast %313 : vector<32x8xf32> to vector<1x1x32x8xf32>
    tpu.vector_store %arg10[%c0_407, %c0_408, %c0_409, %c0_410], %316 {strides = array<i32>} : memref<2x2x32x8xf32, #tpu.memory_space<vmem>>, vector<1x1x32x8xf32>,
    %c0_411 = arith.constant 0 : index
    %c1_412 = arith.constant 1 : index
    %c0_413 = arith.constant 0 : index
    %c0_414 = arith.constant 0 : index
    %317 = vector.load %arg10[%c0_411, %c1_412, %c0_413, %c0_414] : memref<2x2x32x8xf32, #tpu.memory_space<vmem>>, vector<1x1x32x8xf32>
    %318 = vector.shape_cast %317 : vector<1x1x32x8xf32> to vector<32x8xf32>
    %319 = vector.extract_strided_slice %309 {offsets = [0, 8], sizes = [32, 8], strides = [1, 1]} : vector<32x32xf32> to vector<32x8xf32>
    %320 = arith.addf %318, %319 : vector<32x8xf32>
    %c0_415 = arith.constant 0 : index
    %c1_416 = arith.constant 1 : index
    %c0_417 = arith.constant 0 : index
    %c0_418 = arith.constant 0 : index
    %321 = vector.load %arg10[%c0_415, %c1_416, %c0_417, %c0_418] : memref<2x2x32x8xf32, #tpu.memory_space<vmem>>, vector<1x1x32x8xf32>
    %322 = vector.shape_cast %321 : vector<1x1x32x8xf32> to vector<32x8xf32>
    %323 = vector.shape_cast %320 : vector<32x8xf32> to vector<1x1x32x8xf32>
    tpu.vector_store %arg10[%c0_415, %c1_416, %c0_417, %c0_418], %323 {strides = array<i32>} : memref<2x2x32x8xf32, #tpu.memory_space<vmem>>, vector<1x1x32x8xf32>,
    %c1_419 = arith.constant 1 : index
    %c0_420 = arith.constant 0 : index
    %c0_421 = arith.constant 0 : index
    %c0_422 = arith.constant 0 : index
    %324 = vector.load %arg10[%c1_419, %c0_420, %c0_421, %c0_422] : memref<2x2x32x8xf32, #tpu.memory_space<vmem>>, vector<1x1x32x8xf32>
    %325 = vector.shape_cast %324 : vector<1x1x32x8xf32> to vector<32x8xf32>
    %326 = vector.extract_strided_slice %309 {offsets = [0, 16], sizes = [32, 8], strides = [1, 1]} : vector<32x32xf32> to vector<32x8xf32>
    %327 = arith.addf %325, %326 : vector<32x8xf32>
    %c1_423 = arith.constant 1 : index
    %c0_424 = arith.constant 0 : index
    %c0_425 = arith.constant 0 : index
    %c0_426 = arith.constant 0 : index
    %328 = vector.load %arg10[%c1_423, %c0_424, %c0_425, %c0_426] : memref<2x2x32x8xf32, #tpu.memory_space<vmem>>, vector<1x1x32x8xf32>
    %329 = vector.shape_cast %328 : vector<1x1x32x8xf32> to vector<32x8xf32>
    %330 = vector.shape_cast %327 : vector<32x8xf32> to vector<1x1x32x8xf32>
    tpu.vector_store %arg10[%c1_423, %c0_424, %c0_425, %c0_426], %330 {strides = array<i32>} : memref<2x2x32x8xf32, #tpu.memory_space<vmem>>, vector<1x1x32x8xf32>,
    %c1_427 = arith.constant 1 : index
    %c1_428 = arith.constant 1 : index
    %c0_429 = arith.constant 0 : index
    %c0_430 = arith.constant 0 : index
    %331 = vector.load %arg10[%c1_427, %c1_428, %c0_429, %c0_430] : memref<2x2x32x8xf32, #tpu.memory_space<vmem>>, vector<1x1x32x8xf32>
    %332 = vector.shape_cast %331 : vector<1x1x32x8xf32> to vector<32x8xf32>
    %333 = vector.extract_strided_slice %309 {offsets = [0, 24], sizes = [32, 8], strides = [1, 1]} : vector<32x32xf32> to vector<32x8xf32>
    %334 = arith.addf %332, %333 : vector<32x8xf32>
    %c1_431 = arith.constant 1 : index
    %c1_432 = arith.constant 1 : index
    %c0_433 = arith.constant 0 : index
    %c0_434 = arith.constant 0 : index
    %335 = vector.load %arg10[%c1_431, %c1_432, %c0_433, %c0_434] : memref<2x2x32x8xf32, #tpu.memory_space<vmem>>, vector<1x1x32x8xf32>
    %336 = vector.shape_cast %335 : vector<1x1x32x8xf32> to vector<32x8xf32>
    %337 = vector.shape_cast %334 : vector<32x8xf32> to vector<1x1x32x8xf32>
    tpu.vector_store %arg10[%c1_431, %c1_432, %c0_433, %c0_434], %337 {strides = array<i32>} : memref<2x2x32x8xf32, #tpu.memory_space<vmem>>, vector<1x1x32x8xf32>,
    %c1_435 = arith.constant 1 : index
    %c1_436 = arith.constant 1 : index
    %c1_437 = arith.constant 1 : index
    %c1_438 = arith.constant 1 : index
    %c0_439 = arith.constant 0 : index
    %338 = vector.load %arg9[%c1_435, %c1_436, %c1_437, %c1_438, %c0_439] : memref<2x2x6x10x16xbf16, #tpu.memory_space<vmem>>, vector<1x1x4x8x16xbf16>
    %339 = vector.shape_cast %338 : vector<1x1x4x8x16xbf16> to vector<4x8x16xbf16>
    %340 = vector.shape_cast %339 : vector<4x8x16xbf16> to vector<32x16xbf16>
    %c3_440 = arith.constant 3 : index
    %c0_441 = arith.constant 0 : index
    %c0_442 = arith.constant 0 : index
    %341 = vector.load %arg6[%c3_440, %c0_441, %c0_442] : memref<4x16x32xbf16, #tpu.memory_space<vmem>>, vector<1x16x32xbf16>
    %342 = vector.shape_cast %341 : vector<1x16x32xbf16> to vector<16x32xbf16>
    %cst_443 = arith.constant dense<0.000000e+00> : vector<32x32xf32>
    %343 = tpu.matmul %340, %342, %cst_443 {dimension_numbers = #tpu.dot_dimension_numbers<[1], [0], [0], [1], [0, 0, 1, 1], [], []>} : vector<32x16xbf16>, vector<16x32xbf16>, vector<32x32xf32> -> vector<32x32xf32>
    %c0_444 = arith.constant 0 : index
    %c0_445 = arith.constant 0 : index
    %c0_446 = arith.constant 0 : index
    %c0_447 = arith.constant 0 : index
    %344 = vector.load %arg10[%c0_444, %c0_445, %c0_446, %c0_447] : memref<2x2x32x8xf32, #tpu.memory_space<vmem>>, vector<1x1x32x8xf32>
    %345 = vector.shape_cast %344 : vector<1x1x32x8xf32> to vector<32x8xf32>
    %346 = vector.extract_strided_slice %343 {offsets = [0, 0], sizes = [32, 8], strides = [1, 1]} : vector<32x32xf32> to vector<32x8xf32>
    %347 = arith.addf %345, %346 : vector<32x8xf32>
    %c0_448 = arith.constant 0 : index
    %c0_449 = arith.constant 0 : index
    %c0_450 = arith.constant 0 : index
    %c0_451 = arith.constant 0 : index
    %348 = vector.load %arg10[%c0_448, %c0_449, %c0_450, %c0_451] : memref<2x2x32x8xf32, #tpu.memory_space<vmem>>, vector<1x1x32x8xf32>
    %349 = vector.shape_cast %348 : vector<1x1x32x8xf32> to vector<32x8xf32>
    %350 = vector.shape_cast %347 : vector<32x8xf32> to vector<1x1x32x8xf32>
    tpu.vector_store %arg10[%c0_448, %c0_449, %c0_450, %c0_451], %350 {strides = array<i32>} : memref<2x2x32x8xf32, #tpu.memory_space<vmem>>, vector<1x1x32x8xf32>,
    %c0_452 = arith.constant 0 : index
    %c1_453 = arith.constant 1 : index
    %c0_454 = arith.constant 0 : index
    %c0_455 = arith.constant 0 : index
    %351 = vector.load %arg10[%c0_452, %c1_453, %c0_454, %c0_455] : memref<2x2x32x8xf32, #tpu.memory_space<vmem>>, vector<1x1x32x8xf32>
    %352 = vector.shape_cast %351 : vector<1x1x32x8xf32> to vector<32x8xf32>
    %353 = vector.extract_strided_slice %343 {offsets = [0, 8], sizes = [32, 8], strides = [1, 1]} : vector<32x32xf32> to vector<32x8xf32>
    %354 = arith.addf %352, %353 : vector<32x8xf32>
    %c0_456 = arith.constant 0 : index
    %c1_457 = arith.constant 1 : index
    %c0_458 = arith.constant 0 : index
    %c0_459 = arith.constant 0 : index
    %355 = vector.load %arg10[%c0_456, %c1_457, %c0_458, %c0_459] : memref<2x2x32x8xf32, #tpu.memory_space<vmem>>, vector<1x1x32x8xf32>
    %356 = vector.shape_cast %355 : vector<1x1x32x8xf32> to vector<32x8xf32>
    %357 = vector.shape_cast %354 : vector<32x8xf32> to vector<1x1x32x8xf32>
    tpu.vector_store %arg10[%c0_456, %c1_457, %c0_458, %c0_459], %357 {strides = array<i32>} : memref<2x2x32x8xf32, #tpu.memory_space<vmem>>, vector<1x1x32x8xf32>,
    %c1_460 = arith.constant 1 : index
    %c0_461 = arith.constant 0 : index
    %c0_462 = arith.constant 0 : index
    %c0_463 = arith.constant 0 : index
    %358 = vector.load %arg10[%c1_460, %c0_461, %c0_462, %c0_463] : memref<2x2x32x8xf32, #tpu.memory_space<vmem>>, vector<1x1x32x8xf32>
    %359 = vector.shape_cast %358 : vector<1x1x32x8xf32> to vector<32x8xf32>
    %360 = vector.extract_strided_slice %343 {offsets = [0, 16], sizes = [32, 8], strides = [1, 1]} : vector<32x32xf32> to vector<32x8xf32>
    %361 = arith.addf %359, %360 : vector<32x8xf32>
    %c1_464 = arith.constant 1 : index
    %c0_465 = arith.constant 0 : index
    %c0_466 = arith.constant 0 : index
    %c0_467 = arith.constant 0 : index
    %362 = vector.load %arg10[%c1_464, %c0_465, %c0_466, %c0_467] : memref<2x2x32x8xf32, #tpu.memory_space<vmem>>, vector<1x1x32x8xf32>
    %363 = vector.shape_cast %362 : vector<1x1x32x8xf32> to vector<32x8xf32>
    %364 = vector.shape_cast %361 : vector<32x8xf32> to vector<1x1x32x8xf32>
    tpu.vector_store %arg10[%c1_464, %c0_465, %c0_466, %c0_467], %364 {strides = array<i32>} : memref<2x2x32x8xf32, #tpu.memory_space<vmem>>, vector<1x1x32x8xf32>,
    %c1_468 = arith.constant 1 : index
    %c1_469 = arith.constant 1 : index
    %c0_470 = arith.constant 0 : index
    %c0_471 = arith.constant 0 : index
    %365 = vector.load %arg10[%c1_468, %c1_469, %c0_470, %c0_471] : memref<2x2x32x8xf32, #tpu.memory_space<vmem>>, vector<1x1x32x8xf32>
    %366 = vector.shape_cast %365 : vector<1x1x32x8xf32> to vector<32x8xf32>
    %367 = vector.extract_strided_slice %343 {offsets = [0, 24], sizes = [32, 8], strides = [1, 1]} : vector<32x32xf32> to vector<32x8xf32>
    %368 = arith.addf %366, %367 : vector<32x8xf32>
    %c1_472 = arith.constant 1 : index
    %c1_473 = arith.constant 1 : index
    %c0_474 = arith.constant 0 : index
    %c0_475 = arith.constant 0 : index
    %369 = vector.load %arg10[%c1_472, %c1_473, %c0_474, %c0_475] : memref<2x2x32x8xf32, #tpu.memory_space<vmem>>, vector<1x1x32x8xf32>
    %370 = vector.shape_cast %369 : vector<1x1x32x8xf32> to vector<32x8xf32>
    %371 = vector.shape_cast %368 : vector<32x8xf32> to vector<1x1x32x8xf32>
    tpu.vector_store %arg10[%c1_472, %c1_473, %c0_474, %c0_475], %371 {strides = array<i32>} : memref<2x2x32x8xf32, #tpu.memory_space<vmem>>, vector<1x1x32x8xf32>,
    %c1_476 = arith.constant 1 : index
    %c0_477 = arith.constant 0 : index
    %c1_478 = arith.constant 1 : index
    %c2_479 = arith.constant 2 : index
    %c0_480 = arith.constant 0 : index
    %372 = vector.load %arg9[%c1_476, %c0_477, %c1_478, %c2_479, %c0_480] : memref<2x2x6x10x16xbf16, #tpu.memory_space<vmem>>, vector<1x1x4x8x16xbf16>
    %373 = vector.shape_cast %372 : vector<1x1x4x8x16xbf16> to vector<4x8x16xbf16>
    %374 = vector.shape_cast %373 : vector<4x8x16xbf16> to vector<32x16xbf16>
    %c5_481 = arith.constant 5 : index
    %c0_482 = arith.constant 0 : index
    %c0_483 = arith.constant 0 : index
    %375 = vector.load %arg5[%c5_481, %c0_482, %c0_483] : memref<8x16x16xbf16, #tpu.memory_space<vmem>>, vector<1x16x16xbf16>
    %376 = vector.shape_cast %375 : vector<1x16x16xbf16> to vector<16x16xbf16>
    %cst_484 = arith.constant dense<0.000000e+00> : vector<32x16xf32>
    %377 = tpu.matmul %374, %376, %cst_484 {dimension_numbers = #tpu.dot_dimension_numbers<[1], [0], [0], [1], [0, 0, 1, 1], [], []>} : vector<32x16xbf16>, vector<16x16xbf16>, vector<32x16xf32> -> vector<32x16xf32>
    %c0_485 = arith.constant 0 : index
    %c1_486 = arith.constant 1 : index
    %c0_487 = arith.constant 0 : index
    %c0_488 = arith.constant 0 : index
    %378 = vector.load %arg10[%c0_485, %c1_486, %c0_487, %c0_488] : memref<2x2x32x8xf32, #tpu.memory_space<vmem>>, vector<1x1x32x8xf32>
    %379 = vector.shape_cast %378 : vector<1x1x32x8xf32> to vector<32x8xf32>
    %380 = vector.extract_strided_slice %377 {offsets = [0, 0], sizes = [32, 8], strides = [1, 1]} : vector<32x16xf32> to vector<32x8xf32>
    %381 = arith.addf %379, %380 : vector<32x8xf32>
    %c0_489 = arith.constant 0 : index
    %c1_490 = arith.constant 1 : index
    %c0_491 = arith.constant 0 : index
    %c0_492 = arith.constant 0 : index
    %382 = vector.load %arg10[%c0_489, %c1_490, %c0_491, %c0_492] : memref<2x2x32x8xf32, #tpu.memory_space<vmem>>, vector<1x1x32x8xf32>
    %383 = vector.shape_cast %382 : vector<1x1x32x8xf32> to vector<32x8xf32>
    %384 = vector.shape_cast %381 : vector<32x8xf32> to vector<1x1x32x8xf32>
    tpu.vector_store %arg10[%c0_489, %c1_490, %c0_491, %c0_492], %384 {strides = array<i32>} : memref<2x2x32x8xf32, #tpu.memory_space<vmem>>, vector<1x1x32x8xf32>,
    %c1_493 = arith.constant 1 : index
    %c1_494 = arith.constant 1 : index
    %c0_495 = arith.constant 0 : index
    %c0_496 = arith.constant 0 : index
    %385 = vector.load %arg10[%c1_493, %c1_494, %c0_495, %c0_496] : memref<2x2x32x8xf32, #tpu.memory_space<vmem>>, vector<1x1x32x8xf32>
    %386 = vector.shape_cast %385 : vector<1x1x32x8xf32> to vector<32x8xf32>
    %387 = vector.extract_strided_slice %377 {offsets = [0, 8], sizes = [32, 8], strides = [1, 1]} : vector<32x16xf32> to vector<32x8xf32>
    %388 = arith.addf %386, %387 : vector<32x8xf32>
    %c1_497 = arith.constant 1 : index
    %c1_498 = arith.constant 1 : index
    %c0_499 = arith.constant 0 : index
    %c0_500 = arith.constant 0 : index
    %389 = vector.load %arg10[%c1_497, %c1_498, %c0_499, %c0_500] : memref<2x2x32x8xf32, #tpu.memory_space<vmem>>, vector<1x1x32x8xf32>
    %390 = vector.shape_cast %389 : vector<1x1x32x8xf32> to vector<32x8xf32>
    %391 = vector.shape_cast %388 : vector<32x8xf32> to vector<1x1x32x8xf32>
    tpu.vector_store %arg10[%c1_497, %c1_498, %c0_499, %c0_500], %391 {strides = array<i32>} : memref<2x2x32x8xf32, #tpu.memory_space<vmem>>, vector<1x1x32x8xf32>,
    %c0_501 = arith.constant 0 : index
    %c1_502 = arith.constant 1 : index
    %c2_503 = arith.constant 2 : index
    %c0_504 = arith.constant 0 : index
    %c0_505 = arith.constant 0 : index
    %392 = vector.load %arg9[%c0_501, %c1_502, %c2_503, %c0_504, %c0_505] : memref<2x2x6x10x16xbf16, #tpu.memory_space<vmem>>, vector<1x1x4x8x16xbf16>
    %393 = vector.shape_cast %392 : vector<1x1x4x8x16xbf16> to vector<4x8x16xbf16>
    %394 = vector.shape_cast %393 : vector<4x8x16xbf16> to vector<32x16xbf16>
    %c2_506 = arith.constant 2 : index
    %c0_507 = arith.constant 0 : index
    %c0_508 = arith.constant 0 : index
    %395 = vector.load %arg4[%c2_506, %c0_507, %c0_508] : memref<4x16x8xbf16, #tpu.memory_space<vmem>>, vector<1x16x8xbf16>
    %396 = vector.shape_cast %395 : vector<1x16x8xbf16> to vector<16x8xbf16>
    %cst_509 = arith.constant dense<0.000000e+00> : vector<32x8xf32>
    %397 = tpu.matmul %394, %396, %cst_509 {dimension_numbers = #tpu.dot_dimension_numbers<[1], [0], [0], [1], [0, 0, 1, 1], [], []>} : vector<32x16xbf16>, vector<16x8xbf16>, vector<32x8xf32> -> vector<32x8xf32>
    %c1_510 = arith.constant 1 : index
    %c0_511 = arith.constant 0 : index
    %c0_512 = arith.constant 0 : index
    %c0_513 = arith.constant 0 : index
    %398 = vector.load %arg10[%c1_510, %c0_511, %c0_512, %c0_513] : memref<2x2x32x8xf32, #tpu.memory_space<vmem>>, vector<1x1x32x8xf32>
    %399 = vector.shape_cast %398 : vector<1x1x32x8xf32> to vector<32x8xf32>
    %400 = arith.addf %399, %397 : vector<32x8xf32>
    %c1_514 = arith.constant 1 : index
    %c0_515 = arith.constant 0 : index
    %c0_516 = arith.constant 0 : index
    %c0_517 = arith.constant 0 : index
    %401 = vector.load %arg10[%c1_514, %c0_515, %c0_516, %c0_517] : memref<2x2x32x8xf32, #tpu.memory_space<vmem>>, vector<1x1x32x8xf32>
    %402 = vector.shape_cast %401 : vector<1x1x32x8xf32> to vector<32x8xf32>
    %403 = vector.shape_cast %400 : vector<32x8xf32> to vector<1x1x32x8xf32>
    tpu.vector_store %arg10[%c1_514, %c0_515, %c0_516, %c0_517], %403 {strides = array<i32>} : memref<2x2x32x8xf32, #tpu.memory_space<vmem>>, vector<1x1x32x8xf32>,
    %c0_518 = arith.constant 0 : index
    %c0_519 = arith.constant 0 : index
    %c2_520 = arith.constant 2 : index
    %c1_521 = arith.constant 1 : index
    %c0_522 = arith.constant 0 : index
    %404 = vector.load %arg9[%c0_518, %c0_519, %c2_520, %c1_521, %c0_522] : memref<2x2x6x10x16xbf16, #tpu.memory_space<vmem>>, vector<1x1x4x8x16xbf16>
    %405 = vector.shape_cast %404 : vector<1x1x4x8x16xbf16> to vector<4x8x16xbf16>
    %406 = vector.shape_cast %405 : vector<4x8x16xbf16> to vector<32x16xbf16>
    %c6 = arith.constant 6 : index
    %c0_523 = arith.constant 0 : index
    %c0_524 = arith.constant 0 : index
    %407 = vector.load %arg5[%c6, %c0_523, %c0_524] : memref<8x16x16xbf16, #tpu.memory_space<vmem>>, vector<1x16x16xbf16>
    %408 = vector.shape_cast %407 : vector<1x16x16xbf16> to vector<16x16xbf16>
    %cst_525 = arith.constant dense<0.000000e+00> : vector<32x16xf32>
    %409 = tpu.matmul %406, %408, %cst_525 {dimension_numbers = #tpu.dot_dimension_numbers<[1], [0], [0], [1], [0, 0, 1, 1], [], []>} : vector<32x16xbf16>, vector<16x16xbf16>, vector<32x16xf32> -> vector<32x16xf32>
    %c1_526 = arith.constant 1 : index
    %c0_527 = arith.constant 0 : index
    %c0_528 = arith.constant 0 : index
    %c0_529 = arith.constant 0 : index
    %410 = vector.load %arg10[%c1_526, %c0_527, %c0_528, %c0_529] : memref<2x2x32x8xf32, #tpu.memory_space<vmem>>, vector<1x1x32x8xf32>
    %411 = vector.shape_cast %410 : vector<1x1x32x8xf32> to vector<32x8xf32>
    %412 = vector.extract_strided_slice %409 {offsets = [0, 0], sizes = [32, 8], strides = [1, 1]} : vector<32x16xf32> to vector<32x8xf32>
    %413 = arith.addf %411, %412 : vector<32x8xf32>
    %c1_530 = arith.constant 1 : index
    %c0_531 = arith.constant 0 : index
    %c0_532 = arith.constant 0 : index
    %c0_533 = arith.constant 0 : index
    %414 = vector.load %arg10[%c1_530, %c0_531, %c0_532, %c0_533] : memref<2x2x32x8xf32, #tpu.memory_space<vmem>>, vector<1x1x32x8xf32>
    %415 = vector.shape_cast %414 : vector<1x1x32x8xf32> to vector<32x8xf32>
    %416 = vector.shape_cast %413 : vector<32x8xf32> to vector<1x1x32x8xf32>
    tpu.vector_store %arg10[%c1_530, %c0_531, %c0_532, %c0_533], %416 {strides = array<i32>} : memref<2x2x32x8xf32, #tpu.memory_space<vmem>>, vector<1x1x32x8xf32>,
    %c1_534 = arith.constant 1 : index
    %c1_535 = arith.constant 1 : index
    %c0_536 = arith.constant 0 : index
    %c0_537 = arith.constant 0 : index
    %417 = vector.load %arg10[%c1_534, %c1_535, %c0_536, %c0_537] : memref<2x2x32x8xf32, #tpu.memory_space<vmem>>, vector<1x1x32x8xf32>
    %418 = vector.shape_cast %417 : vector<1x1x32x8xf32> to vector<32x8xf32>
    %419 = vector.extract_strided_slice %409 {offsets = [0, 8], sizes = [32, 8], strides = [1, 1]} : vector<32x16xf32> to vector<32x8xf32>
    %420 = arith.addf %418, %419 : vector<32x8xf32>
    %c1_538 = arith.constant 1 : index
    %c1_539 = arith.constant 1 : index
    %c0_540 = arith.constant 0 : index
    %c0_541 = arith.constant 0 : index
    %421 = vector.load %arg10[%c1_538, %c1_539, %c0_540, %c0_541] : memref<2x2x32x8xf32, #tpu.memory_space<vmem>>, vector<1x1x32x8xf32>
    %422 = vector.shape_cast %421 : vector<1x1x32x8xf32> to vector<32x8xf32>
    %423 = vector.shape_cast %420 : vector<32x8xf32> to vector<1x1x32x8xf32>
    tpu.vector_store %arg10[%c1_538, %c1_539, %c0_540, %c0_541], %423 {strides = array<i32>} : memref<2x2x32x8xf32, #tpu.memory_space<vmem>>, vector<1x1x32x8xf32>,
    %c0_542 = arith.constant 0 : index
    %c1_543 = arith.constant 1 : index
    %c2_544 = arith.constant 2 : index
    %c1_545 = arith.constant 1 : index
    %c0_546 = arith.constant 0 : index
    %424 = vector.load %arg9[%c0_542, %c1_543, %c2_544, %c1_545, %c0_546] : memref<2x2x6x10x16xbf16, #tpu.memory_space<vmem>>, vector<1x1x4x8x16xbf16>
    %425 = vector.shape_cast %424 : vector<1x1x4x8x16xbf16> to vector<4x8x16xbf16>
    %426 = vector.shape_cast %425 : vector<4x8x16xbf16> to vector<32x16xbf16>
    %c7 = arith.constant 7 : index
    %c0_547 = arith.constant 0 : index
    %c0_548 = arith.constant 0 : index
    %427 = vector.load %arg5[%c7, %c0_547, %c0_548] : memref<8x16x16xbf16, #tpu.memory_space<vmem>>, vector<1x16x16xbf16>
    %428 = vector.shape_cast %427 : vector<1x16x16xbf16> to vector<16x16xbf16>
    %cst_549 = arith.constant dense<0.000000e+00> : vector<32x16xf32>
    %429 = tpu.matmul %426, %428, %cst_549 {dimension_numbers = #tpu.dot_dimension_numbers<[1], [0], [0], [1], [0, 0, 1, 1], [], []>} : vector<32x16xbf16>, vector<16x16xbf16>, vector<32x16xf32> -> vector<32x16xf32>
    %c1_550 = arith.constant 1 : index
    %c0_551 = arith.constant 0 : index
    %c0_552 = arith.constant 0 : index
    %c0_553 = arith.constant 0 : index
    %430 = vector.load %arg10[%c1_550, %c0_551, %c0_552, %c0_553] : memref<2x2x32x8xf32, #tpu.memory_space<vmem>>, vector<1x1x32x8xf32>
    %431 = vector.shape_cast %430 : vector<1x1x32x8xf32> to vector<32x8xf32>
    %432 = vector.extract_strided_slice %429 {offsets = [0, 0], sizes = [32, 8], strides = [1, 1]} : vector<32x16xf32> to vector<32x8xf32>
    %433 = arith.addf %431, %432 : vector<32x8xf32>
    %c1_554 = arith.constant 1 : index
    %c0_555 = arith.constant 0 : index
    %c0_556 = arith.constant 0 : index
    %c0_557 = arith.constant 0 : index
    %434 = vector.load %arg10[%c1_554, %c0_555, %c0_556, %c0_557] : memref<2x2x32x8xf32, #tpu.memory_space<vmem>>, vector<1x1x32x8xf32>
    %435 = vector.shape_cast %434 : vector<1x1x32x8xf32> to vector<32x8xf32>
    %436 = vector.shape_cast %433 : vector<32x8xf32> to vector<1x1x32x8xf32>
    tpu.vector_store %arg10[%c1_554, %c0_555, %c0_556, %c0_557], %436 {strides = array<i32>} : memref<2x2x32x8xf32, #tpu.memory_space<vmem>>, vector<1x1x32x8xf32>,
    %c1_558 = arith.constant 1 : index
    %c1_559 = arith.constant 1 : index
    %c0_560 = arith.constant 0 : index
    %c0_561 = arith.constant 0 : index
    %437 = vector.load %arg10[%c1_558, %c1_559, %c0_560, %c0_561] : memref<2x2x32x8xf32, #tpu.memory_space<vmem>>, vector<1x1x32x8xf32>
    %438 = vector.shape_cast %437 : vector<1x1x32x8xf32> to vector<32x8xf32>
    %439 = vector.extract_strided_slice %429 {offsets = [0, 8], sizes = [32, 8], strides = [1, 1]} : vector<32x16xf32> to vector<32x8xf32>
    %440 = arith.addf %438, %439 : vector<32x8xf32>
    %c1_562 = arith.constant 1 : index
    %c1_563 = arith.constant 1 : index
    %c0_564 = arith.constant 0 : index
    %c0_565 = arith.constant 0 : index
    %441 = vector.load %arg10[%c1_562, %c1_563, %c0_564, %c0_565] : memref<2x2x32x8xf32, #tpu.memory_space<vmem>>, vector<1x1x32x8xf32>
    %442 = vector.shape_cast %441 : vector<1x1x32x8xf32> to vector<32x8xf32>
    %443 = vector.shape_cast %440 : vector<32x8xf32> to vector<1x1x32x8xf32>
    tpu.vector_store %arg10[%c1_562, %c1_563, %c0_564, %c0_565], %443 {strides = array<i32>} : memref<2x2x32x8xf32, #tpu.memory_space<vmem>>, vector<1x1x32x8xf32>,
    %c0_566 = arith.constant 0 : index
    %c0_567 = arith.constant 0 : index
    %c2_568 = arith.constant 2 : index
    %c2_569 = arith.constant 2 : index
    %c0_570 = arith.constant 0 : index
    %444 = vector.load %arg9[%c0_566, %c0_567, %c2_568, %c2_569, %c0_570] : memref<2x2x6x10x16xbf16, #tpu.memory_space<vmem>>, vector<1x1x4x8x16xbf16>
    %445 = vector.shape_cast %444 : vector<1x1x4x8x16xbf16> to vector<4x8x16xbf16>
    %446 = vector.shape_cast %445 : vector<4x8x16xbf16> to vector<32x16xbf16>
    %c3_571 = arith.constant 3 : index
    %c0_572 = arith.constant 0 : index
    %c0_573 = arith.constant 0 : index
    %447 = vector.load %arg4[%c3_571, %c0_572, %c0_573] : memref<4x16x8xbf16, #tpu.memory_space<vmem>>, vector<1x16x8xbf16>
    %448 = vector.shape_cast %447 : vector<1x16x8xbf16> to vector<16x8xbf16>
    %cst_574 = arith.constant dense<0.000000e+00> : vector<32x8xf32>
    %449 = tpu.matmul %446, %448, %cst_574 {dimension_numbers = #tpu.dot_dimension_numbers<[1], [0], [0], [1], [0, 0, 1, 1], [], []>} : vector<32x16xbf16>, vector<16x8xbf16>, vector<32x8xf32> -> vector<32x8xf32>
    %c1_575 = arith.constant 1 : index
    %c1_576 = arith.constant 1 : index
    %c0_577 = arith.constant 0 : index
    %c0_578 = arith.constant 0 : index
    %450 = vector.load %arg10[%c1_575, %c1_576, %c0_577, %c0_578] : memref<2x2x32x8xf32, #tpu.memory_space<vmem>>, vector<1x1x32x8xf32>
    %451 = vector.shape_cast %450 : vector<1x1x32x8xf32> to vector<32x8xf32>
    %452 = arith.addf %451, %449 : vector<32x8xf32>
    %c1_579 = arith.constant 1 : index
    %c1_580 = arith.constant 1 : index
    %c0_581 = arith.constant 0 : index
    %c0_582 = arith.constant 0 : index
    %453 = vector.load %arg10[%c1_579, %c1_580, %c0_581, %c0_582] : memref<2x2x32x8xf32, #tpu.memory_space<vmem>>, vector<1x1x32x8xf32>
    %454 = vector.shape_cast %453 : vector<1x1x32x8xf32> to vector<32x8xf32>
    %455 = vector.shape_cast %452 : vector<32x8xf32> to vector<1x1x32x8xf32>
    tpu.vector_store %arg10[%c1_579, %c1_580, %c0_581, %c0_582], %455 {strides = array<i32>} : memref<2x2x32x8xf32, #tpu.memory_space<vmem>>, vector<1x1x32x8xf32>,
    %c0_583 = arith.constant 0 : index
    %c0_584 = arith.constant 0 : index
    %c0_585 = arith.constant 0 : index
    %c0_586 = arith.constant 0 : index
    %456 = vector.load %arg10[%c0_583, %c0_584, %c0_585, %c0_586] : memref<2x2x32x8xf32, #tpu.memory_space<vmem>>, vector<1x1x32x8xf32>
    %457 = vector.shape_cast %456 : vector<1x1x32x8xf32> to vector<32x8xf32>
    %cst_587 = arith.constant 0.000000e+00 : f32
    %458 = vector.broadcast %cst_587 : f32 to vector<32x8xf32>
    %459 = arith.maximumf %457, %458 : vector<32x8xf32>
    %460 = vector.shape_cast %459 : vector<32x8xf32> to vector<4x8x8xf32>
    %c0_588 = arith.constant 0 : index
    %c1_589 = arith.constant 1 : index
    %c0_590 = arith.constant 0 : index
    %c0_591 = arith.constant 0 : index
    %461 = vector.load %arg10[%c0_588, %c1_589, %c0_590, %c0_591] : memref<2x2x32x8xf32, #tpu.memory_space<vmem>>, vector<1x1x32x8xf32>
    %462 = vector.shape_cast %461 : vector<1x1x32x8xf32> to vector<32x8xf32>
    %cst_592 = arith.constant 0.000000e+00 : f32
    %463 = vector.broadcast %cst_592 : f32 to vector<32x8xf32>
    %464 = arith.maximumf %462, %463 : vector<32x8xf32>
    %465 = vector.shape_cast %464 : vector<32x8xf32> to vector<4x8x8xf32>
    %466 = tpu.concatenate %460, %465 in 2 : vector<4x8x8xf32>, vector<4x8x8xf32> -> vector<4x8x16xf32>
    %c0_593 = arith.constant 0 : index
    %c0_594 = arith.constant 0 : index
    %c0_595 = arith.constant 0 : index
    %c0_596 = arith.constant 0 : index
    %c0_597 = arith.constant 0 : index
    %467 = vector.load %arg8[%c0_593, %c0_594, %c0_595, %c0_596, %c0_597] : memref<1x4x2x8x16xf32, #tpu.memory_space<vmem>>, vector<1x4x1x8x16xf32>
    %468 = vector.shape_cast %467 : vector<1x4x1x8x16xf32> to vector<4x8x16xf32>
    %469 = vector.shape_cast %466 : vector<4x8x16xf32> to vector<1x4x1x8x16xf32>
    tpu.vector_store %arg8[%c0_593, %c0_594, %c0_595, %c0_596, %c0_597], %469 {strides = array<i32>} : memref<1x4x2x8x16xf32, #tpu.memory_space<vmem>>, vector<1x4x1x8x16xf32>,
    %c1_598 = arith.constant 1 : index
    %c0_599 = arith.constant 0 : index
    %c0_600 = arith.constant 0 : index
    %c0_601 = arith.constant 0 : index
    %470 = vector.load %arg10[%c1_598, %c0_599, %c0_600, %c0_601] : memref<2x2x32x8xf32, #tpu.memory_space<vmem>>, vector<1x1x32x8xf32>
    %471 = vector.shape_cast %470 : vector<1x1x32x8xf32> to vector<32x8xf32>
    %cst_602 = arith.constant 0.000000e+00 : f32
    %472 = vector.broadcast %cst_602 : f32 to vector<32x8xf32>
    %473 = arith.maximumf %471, %472 : vector<32x8xf32>
    %474 = vector.shape_cast %473 : vector<32x8xf32> to vector<4x8x8xf32>
    %c1_603 = arith.constant 1 : index
    %c1_604 = arith.constant 1 : index
    %c0_605 = arith.constant 0 : index
    %c0_606 = arith.constant 0 : index
    %475 = vector.load %arg10[%c1_603, %c1_604, %c0_605, %c0_606] : memref<2x2x32x8xf32, #tpu.memory_space<vmem>>, vector<1x1x32x8xf32>
    %476 = vector.shape_cast %475 : vector<1x1x32x8xf32> to vector<32x8xf32>
    %cst_607 = arith.constant 0.000000e+00 : f32
    %477 = vector.broadcast %cst_607 : f32 to vector<32x8xf32>
    %478 = arith.maximumf %476, %477 : vector<32x8xf32>
    %479 = vector.shape_cast %478 : vector<32x8xf32> to vector<4x8x8xf32>
    %480 = tpu.concatenate %474, %479 in 2 : vector<4x8x8xf32>, vector<4x8x8xf32> -> vector<4x8x16xf32>
    %c0_608 = arith.constant 0 : index
    %c0_609 = arith.constant 0 : index
    %c1_610 = arith.constant 1 : index
    %c0_611 = arith.constant 0 : index
    %c0_612 = arith.constant 0 : index
    %481 = vector.load %arg8[%c0_608, %c0_609, %c1_610, %c0_611, %c0_612] : memref<1x4x2x8x16xf32, #tpu.memory_space<vmem>>, vector<1x4x1x8x16xf32>
    %482 = vector.shape_cast %481 : vector<1x4x1x8x16xf32> to vector<4x8x16xf32>
    %483 = vector.shape_cast %480 : vector<4x8x16xf32> to vector<1x4x1x8x16xf32>
    tpu.vector_store %arg8[%c0_608, %c0_609, %c1_610, %c0_611, %c0_612], %483 {strides = array<i32>} : memref<1x4x2x8x16xf32, #tpu.memory_space<vmem>>, vector<1x4x1x8x16xf32>,
    return
  }
  func.func @transform_0(%arg0: i32, %arg1: i32) -> (i32, i32, i32, i32) {
    %c0_i32 = arith.constant 0 : i32
    %c0_i32_0 = arith.constant 0 : i32
    %c0_i32_1 = arith.constant 0 : i32
    %c0_i32_2 = arith.constant 0 : i32
    return %arg0, %c0_i32, %c0_i32_0, %c0_i32_1 : i32, i32, i32, i32
  }
  func.func @transform_1(%arg0: i32, %arg1: i32) -> (i32, i32, i32, i32, i32) {
    %c0_i32 = arith.constant 0 : i32
    %c0_i32_0 = arith.constant 0 : i32
    %c0_i32_1 = arith.constant 0 : i32
    %c0_i32_2 = arith.constant 0 : i32
    %c0_i32_3 = arith.constant 0 : i32
    return %arg0, %c0_i32, %c0_i32_0, %c0_i32_1, %c0_i32_2 : i32, i32, i32, i32, i32
  }
  func.func @transform_2(%arg0: i32, %arg1: i32) -> (i32, i32, i32) {
    %c0_i32 = arith.constant 0 : i32
    %c0_i32_0 = arith.constant 0 : i32
    %c0_i32_1 = arith.constant 0 : i32
    %c0_i32_2 = arith.constant 0 : i32
    return %c0_i32, %c0_i32_0, %c0_i32_1 : i32, i32, i32
  }
  func.func @transform_3(%arg0: i32, %arg1: i32) -> (i32, i32, i32) {
    %c0_i32 = arith.constant 0 : i32
    %c0_i32_0 = arith.constant 0 : i32
    %c0_i32_1 = arith.constant 0 : i32
    %c0_i32_2 = arith.constant 0 : i32
    return %c0_i32, %c0_i32_0, %c0_i32_1 : i32, i32, i32
  }
  func.func @transform_4(%arg0: i32, %arg1: i32) -> (i32, i32, i32) {
    %c0_i32 = arith.constant 0 : i32
    %c0_i32_0 = arith.constant 0 : i32
    %c0_i32_1 = arith.constant 0 : i32
    %c0_i32_2 = arith.constant 0 : i32
    return %c0_i32, %c0_i32_0, %c0_i32_1 : i32, i32, i32
  }
  func.func @transform_5(%arg0: i32, %arg1: i32) -> (i32, i32) {
    %c0_i32 = arith.constant 0 : i32
    %c0_i32_0 = arith.constant 0 : i32
    %c0_i32_1 = arith.constant 0 : i32
    return %c0_i32, %c0_i32_0 : i32, i32
  }
  func.func @transform_6(%arg0: i32, %arg1: i32) -> (i32, i32, i32, i32, i32) {
    %c0_i32 = arith.constant 0 : i32
    %c0_i32_0 = arith.constant 0 : i32
    %c0_i32_1 = arith.constant 0 : i32
    %c0_i32_2 = arith.constant 0 : i32
    return %arg0, %arg1, %c0_i32, %c0_i32_0, %c0_i32_1 : i32, i32, i32, i32, i32
  }
}

</mosaic_0001>

<llo_original>
// kernel: up_forward.1
$region0: #{up_forward.1}
  #allocation0 [shape = 'u32[]', space=smem, size = 0x4, offset = 0x4, fixed_abs, tag = 'smem constant byte address 0x4 - core index']
  #allocation1 [shape = 'u32[144,128]{1,0:T(1,128)}', space=vmem, size = 0x12000, scoped, tag = 'internal scratch']
  #allocation2 [shape = 'bf16[2,2,6,10,16]{4,3,2,1,0:T(8,128)(2,1)}', space=vmem, size = 0x18000, scoped, tag = 'scratch operand']
  #allocation3 [shape = 'f32[2,2,32,8]{3,2,1,0:T(8,128)}', space=vmem, size = 0x10000, scoped, tag = 'scratch operand']
  %s0 = inlined_call_operand.vmem [shape: bf16[2,8,8,12], index: 0, kind: input, shape index: {}]
  %s1 = inlined_call_operand.vmem [shape: bf16[2,8,2,8,8], index: 1, kind: input, shape index: {}]
  %s2 = inlined_call_operand.vmem [shape: bf16[4,16,8], index: 2, kind: input, shape index: {}]
  %s3 = inlined_call_operand.vmem [shape: bf16[8,16,16], index: 3, kind: input, shape index: {}]
  %s4 = inlined_call_operand.vmem [shape: bf16[4,16,32], index: 4, kind: input, shape index: {}]
  %s5 = inlined_call_operand.vmem [shape: f32[1,8], index: 5, kind: input, shape index: {}]
  %s6 = inlined_call_operand.vmem [shape: f32[2,8,2,8,16], index: 6, kind: output, shape index: {}]
  %s7 = sld [smem:[#allocation0]]
  $region65: #{up_forward.1} parent=0
    _
  %s9 = ssub.s32 1, %s7
  %s10 = scalar_select 0, %s9, %s7
  loop: start=0, step=1, limit=6
  $region2: #{up_forward.1} parent=0 // loop_pre_header
    _
  $region3: #{up_forward.1} parent=0 // loop_header
    %s12 = sphi 0, %s16
    %p13 = scmp.ge.s32.totalorder %s12, 6
    %s19 = sphi 0, %s31
    %s20 = sphi 0, %s27
    %s21 = sphi 0, %s19
    %s22 = sphi 0, %s20
    %s23 = sphi 0, %s21
    %s24 = sphi 0, %s22
    %s34 = sphi 0, %s36
    %s37 = sphi 0, %s34
    %s38 = sphi 0, %s37
    %s54 = sphi 0, %s38
    %s60 = sphi 0, %s62
    %s63 = sphi 0, %s60
    %s64 = sphi 0, %s63
    %s80 = sphi 0, %s64
    %s84 = sphi 0, %s84
    %s86 = sphi 0, %s84
    %s87 = sphi 0, %s86
    %s101 = sphi 0, %s87
    %s105 = sphi 0, %s105
    %s107 = sphi 0, %s105
    %s108 = sphi 0, %s107
    %s122 = sphi 0, %s108
    %s126 = sphi 0, %s126
    %s128 = sphi 0, %s126
    %s129 = sphi 0, %s128
    %s143 = sphi 0, %s129
    %s147 = sphi 0, %s147
    %s149 = sphi 0, %s147
    %s150 = sphi 0, %s149
    %s164 = sphi 0, %s150
    %s172 = sphi 0, %s174
    %s175 = sphi 0, %s172
    %s176 = sphi 0, %s175
    %s192 = sphi 0, %s176
  $region4: #{up_forward.1} parent=0 // loop_header_branch
    %15 = sbr.rel (%p13) target = $region8
  $region5: #{up_forward.1} parent=0 // loop_body
    %s17 = ssub.s32 %s12, 1
    %s18 = ssub.s32 %s12, 2
    %s25 = sadd.s32 1, %s20
    %p26 = scmp.ge.s32.totalorder %s25, 2
    %s27 = scalar_select %p26, 0, %s25
    %s28 = sadd.s32 1, %s19
    %s29 = scalar_select %p26, %s28, %s19
    %p30 = scmp.ge.s32.totalorder %s29, 2
    %s31 = scalar_select %p30, 0, %s29
    %s32 = ssub.s32 %s19, %s31
    %p33 = scmp.eq.s32.totalorder %s32, 0
    %s35 = sadd.s32 %s34, 1
    %s36 = scalar_select %p33, %s34, %s35
    %p39 = pneg %p33
    %p40 = scmp.eq.s32.totalorder %s12, 3
    %p41 = por %p39, %p40
    %p42 = scmp.ne.s32.totalorder %s34, %s37
    %p43 = scmp.eq.s32.totalorder %s12, 0
    %p44 = por %p42, %p43
    %p45 = scmp.ne.s32.totalorder %s34, %s37
    %p46 = scmp.eq.s32.totalorder %s17, 3
    %p47 = por %p45, %p46
    %p48 = scmp.ne.s32.totalorder %s37, %s38
    %p49 = scmp.eq.s32.totalorder %s17, 0
    %p50 = por %p48, %p49
    %p51 = scmp.ne.s32.totalorder %s37, %s38
    %p52 = scmp.eq.s32.totalorder %s18, 3
    %p53 = por %p51, %p52
    %p55 = scmp.ne.s32.totalorder %s38, %s54
    %p56 = scmp.eq.s32.totalorder %s18, 0
    %p57 = por %p55, %p56
    %s58 = ssub.s32 %s19, %s31
    %p59 = scmp.eq.s32.totalorder %s58, 0
    %s61 = sadd.s32 %s60, 1
    %s62 = scalar_select %p59, %s60, %s61
    %p65 = pneg %p59
    %p66 = scmp.eq.s32.totalorder %s12, 3
    %p67 = por %p65, %p66
    %p68 = scmp.ne.s32.totalorder %s60, %s63
    %p69 = scmp.eq.s32.totalorder %s12, 0
    %p70 = por %p68, %p69
    %p71 = scmp.ne.s32.totalorder %s60, %s63
    %p72 = scmp.eq.s32.totalorder %s17, 3
    %p73 = por %p71, %p72
    %p74 = scmp.ne.s32.totalorder %s63, %s64
    %p75 = scmp.eq.s32.totalorder %s17, 0
    %p76 = por %p74, %p75
    %p77 = scmp.ne.s32.totalorder %s63, %s64
    %p78 = scmp.eq.s32.totalorder %s18, 3
    %p79 = por %p77, %p78
    %p81 = scmp.ne.s32.totalorder %s64, %s80
    %p82 = scmp.eq.s32.totalorder %s18, 0
    %p83 = por %p81, %p82
    %s85 = sadd.s32 %s84, 1
    %p88 = scmp.eq.s32.totalorder %s12, 3
    %p89 = scmp.ne.s32.totalorder %s84, %s86
    %p90 = scmp.eq.s32.totalorder %s12, 0
    %p91 = por %p89, %p90
    %p92 = scmp.ne.s32.totalorder %s84, %s86
    %p93 = scmp.eq.s32.totalorder %s17, 3
    %p94 = por %p92, %p93
    %p95 = scmp.ne.s32.totalorder %s86, %s87
    %p96 = scmp.eq.s32.totalorder %s17, 0
    %p97 = por %p95, %p96
    %p98 = scmp.ne.s32.totalorder %s86, %s87
    %p99 = scmp.eq.s32.totalorder %s18, 3
    %p100 = por %p98, %p99
    %p102 = scmp.ne.s32.totalorder %s87, %s101
    %p103 = scmp.eq.s32.totalorder %s18, 0
    %p104 = por %p102, %p103
    %s106 = sadd.s32 %s105, 1
    %p109 = scmp.eq.s32.totalorder %s12, 3
    %p110 = scmp.ne.s32.totalorder %s105, %s107
    %p111 = scmp.eq.s32.totalorder %s12, 0
    %p112 = por %p110, %p111
    %p113 = scmp.ne.s32.totalorder %s105, %s107
    %p114 = scmp.eq.s32.totalorder %s17, 3
    %p115 = por %p113, %p114
    %p116 = scmp.ne.s32.totalorder %s107, %s108
    %p117 = scmp.eq.s32.totalorder %s17, 0
    %p118 = por %p116, %p117
    %p119 = scmp.ne.s32.totalorder %s107, %s108
    %p120 = scmp.eq.s32.totalorder %s18, 3
    %p121 = por %p119, %p120
    %p123 = scmp.ne.s32.totalorder %s108, %s122
    %p124 = scmp.eq.s32.totalorder %s18, 0
    %p125 = por %p123, %p124
    %s127 = sadd.s32 %s126, 1
    %p130 = scmp.eq.s32.totalorder %s12, 3
    %p131 = scmp.ne.s32.totalorder %s126, %s128
    %p132 = scmp.eq.s32.totalorder %s12, 0
    %p133 = por %p131, %p132
    %p134 = scmp.ne.s32.totalorder %s126, %s128
    %p135 = scmp.eq.s32.totalorder %s17, 3
    %p136 = por %p134, %p135
    %p137 = scmp.ne.s32.totalorder %s128, %s129
    %p138 = scmp.eq.s32.totalorder %s17, 0
    %p139 = por %p137, %p138
    %p140 = scmp.ne.s32.totalorder %s128, %s129
    %p141 = scmp.eq.s32.totalorder %s18, 3
    %p142 = por %p140, %p141
    %p144 = scmp.ne.s32.totalorder %s129, %s143
    %p145 = scmp.eq.s32.totalorder %s18, 0
    %p146 = por %p144, %p145
    %s148 = sadd.s32 %s147, 1
    %p151 = scmp.eq.s32.totalorder %s12, 3
    %p152 = scmp.ne.s32.totalorder %s147, %s149
    %p153 = scmp.eq.s32.totalorder %s12, 0
    %p154 = por %p152, %p153
    %p155 = scmp.ne.s32.totalorder %s147, %s149
    %p156 = scmp.eq.s32.totalorder %s17, 3
    %p157 = por %p155, %p156
    %p158 = scmp.ne.s32.totalorder %s149, %s150
    %p159 = scmp.eq.s32.totalorder %s17, 0
    %p160 = por %p158, %p159
    %p161 = scmp.ne.s32.totalorder %s149, %s150
    %p162 = scmp.eq.s32.totalorder %s18, 3
    %p163 = por %p161, %p162
    %p165 = scmp.ne.s32.totalorder %s150, %s164
    %p166 = scmp.eq.s32.totalorder %s18, 0
    %p167 = por %p165, %p166
    %s168 = ssub.s32 %s19, %s31
    %s169 = ssub.s32 %s20, %s27
    %s170 = sor.u32 %s168, %s169
    %p171 = scmp.eq.s32.totalorder %s170, 0
    %s173 = sadd.s32 %s172, 1
    %s174 = scalar_select %p171, %s172, %s173
    %p177 = pneg %p171
    %p178 = scmp.eq.s32.totalorder %s12, 3
    %p179 = por %p177, %p178
    %p180 = scmp.ne.s32.totalorder %s172, %s175
    %p181 = scmp.eq.s32.totalorder %s12, 0
    %p182 = por %p180, %p181
    %p183 = scmp.ne.s32.totalorder %s172, %s175
    %p184 = scmp.eq.s32.totalorder %s17, 3
    %p185 = por %p183, %p184
    %p186 = scmp.ne.s32.totalorder %s175, %s176
    %p187 = scmp.eq.s32.totalorder %s17, 0
    %p188 = por %p186, %p187
    %p189 = scmp.ne.s32.totalorder %s175, %s176
    %p190 = scmp.eq.s32.totalorder %s18, 3
    %p191 = por %p189, %p190
    %p193 = scmp.ne.s32.totalorder %s176, %s192
    %p194 = scmp.eq.s32.totalorder %s18, 0
    %p195 = por %p193, %p194
    %p196 = scmp.le.s32.totalorder 1, %s12
    %p197 = scmp.lt.s32.totalorder %s12, 5
    %p198 = pnand %p196, %p197
    %p199 = pneg %p198
    // Predicated region
    $region9: #{up_forward.1} parent=5 // pred_check
      _
    $region10: #{up_forward.1} parent=5 // pred_check_branch
      %201 = sbr.rel (%p198) target = $region12
    $region11: #{up_forward.1} parent=5 // pred_region
      %s202 = ssub.s32 %s12, 1
      // Predicated region
      $region13: #{up_forward.1} parent=11 // pred_check
        %p203 = pneg %p97
      $region14: #{up_forward.1} parent=11 // pred_check_branch
        %205 = sbr.rel (%p203) target = $region16
      $region15: #{up_forward.1} parent=11 // pred_region
        _
      $region16: #{up_forward.1} parent=11 // pred_fallthru
        _
      // Predicated region
      $region17: #{up_forward.1} parent=11 // pred_check
        %p206 = pneg %p118
      $region18: #{up_forward.1} parent=11 // pred_check_branch
        %208 = sbr.rel (%p206) target = $region20
      $region19: #{up_forward.1} parent=11 // pred_region
        _
      $region20: #{up_forward.1} parent=11 // pred_fallthru
        _
      // Predicated region
      $region21: #{up_forward.1} parent=11 // pred_check
        %p209 = pneg %p139
      $region22: #{up_forward.1} parent=11 // pred_check_branch
        %211 = sbr.rel (%p209) target = $region24
      $region23: #{up_forward.1} parent=11 // pred_region
        _
      $region24: #{up_forward.1} parent=11 // pred_fallthru
        _
      // Predicated region
      $region25: #{up_forward.1} parent=11 // pred_check
        %p212 = pneg %p160
      $region26: #{up_forward.1} parent=11 // pred_check_branch
        %214 = sbr.rel (%p212) target = $region28
      $region27: #{up_forward.1} parent=11 // pred_region
        _
      $region28: #{up_forward.1} parent=11 // pred_fallthru
        _
    $region12: #{up_forward.1} parent=5 // pred_fallthru
      _
    %p215 = scmp.lt.s32.totalorder %s12, 4
    // Predicated region
    $region29: #{up_forward.1} parent=5 // pred_check
      %p216 = pneg %p215
    $region30: #{up_forward.1} parent=5 // pred_check_branch
      %218 = sbr.rel (%p216) target = $region32
    $region31: #{up_forward.1} parent=5 // pred_region
      // Predicated region
      $region33: #{up_forward.1} parent=31 // pred_check
        %p219 = pneg %p44
      $region34: #{up_forward.1} parent=31 // pred_check_branch
        %221 = sbr.rel (%p219) target = $region36
      $region35: #{up_forward.1} parent=31 // pred_region
        %p222 = scmp.lt.s32.totalorder %s19, 1
        %s223 = scalar_select %p222, %s19, 1
        %s224 = smul.addr %s223, 8
        %s225 = smul.addr %s224, 4
        %s226 = scalar_lea.vmem %s0, %s225
      $region36: #{up_forward.1} parent=31 // pred_fallthru
        _
      // Predicated region
      $region37: #{up_forward.1} parent=31 // pred_check
        %p227 = pneg %p70
      $region38: #{up_forward.1} parent=31 // pred_check_branch
        %229 = sbr.rel (%p227) target = $region40
      $region39: #{up_forward.1} parent=31 // pred_region
        %p230 = scmp.lt.s32.totalorder %s19, 1
        %s231 = scalar_select %p230, %s19, 1
        %s232 = smul.addr %s231, 16
        %s233 = smul.addr %s232, 4
        %s234 = scalar_lea.vmem %s1, %s233
      $region40: #{up_forward.1} parent=31 // pred_fallthru
        _
    $region32: #{up_forward.1} parent=5 // pred_fallthru
      _
    %p235 = scmp.le.s32.totalorder 1, %s12
    %p236 = scmp.lt.s32.totalorder %s12, 5
    %p237 = pnand %p235, %p236
    %p238 = pneg %p237
    // Predicated region
    $region41: #{up_forward.1} parent=5 // pred_check
      _
    $region42: #{up_forward.1} parent=5 // pred_check_branch
      %240 = sbr.rel (%p237) target = $region44
    $region43: #{up_forward.1} parent=5 // pred_region
      %s241 = ssub.s32 %s12, 1
      %p242 = scmp.lt.s32.totalorder %s21, 1
      %s243 = scalar_select %p242, %s21, 1
      %s244 = smul.addr %s243, 8
      %s245 = smul.addr %s244, 4
      %s246 = scalar_lea.vmem %s0, %s245
      %p247 = pneg %p50
      %p248 = pneg %p47
      %p249 = scmp.lt.s32.totalorder %s21, 1
      %s250 = scalar_select %p249, %s21, 1
      %s251 = smul.addr %s250, 16
      %s252 = smul.addr %s251, 4
      %s253 = scalar_lea.vmem %s1, %s252
      %p254 = pneg %p76
      %p255 = pneg %p73
      %p256 = pneg %p97
      %p257 = pneg %p94
      %p258 = pneg %p118
      %p259 = pneg %p115
      %p260 = pneg %p139
      %p261 = pneg %p136
      %p262 = pneg %p160
      %p263 = pneg %p157
      %p264 = pneg %p188
      %p265 = pneg %p185
      %s266 = smul.u32 4, %s22
      %p267 = scmp.lt.s32.totalorder %s21, 1
      %s268 = scalar_select %p267, %s21, 1
      %p269 = scmp.lt.s32.totalorder %s266, 7
      %s270 = scalar_select %p269, %s266, 7
      %s271 = smul.addr %s270, 2
      %s272 = smul.addr %s268, 16
      %s273 = sadd.s32 %s271, %s272
      %s274 = smul.addr %s273, 8
      %s275 = scalar_lea.vmem %s6, %s274
      %p276 = scmp.lt.s32.totalorder %s21, 1
      %s277 = scalar_select %p276, %s21, 1
      %s278 = smul.addr %s277, 8
      %s279 = smul.addr %s278, 4
      %s280 = scalar_lea.vmem %s0, %s279
      %p281 = scmp.lt.s32.totalorder %s21, 1
      %s282 = scalar_select %p281, %s21, 1
      %s283 = smul.addr %s282, 16
      %s284 = smul.addr %s283, 4
      %s285 = scalar_lea.vmem %s1, %s284
      %s286 = smul.u32 4, %s22
      %p287 = scmp.lt.s32.totalorder %s21, 1
      %s288 = scalar_select %p287, %s21, 1
      %p289 = scmp.lt.s32.totalorder %s286, 7
      %s290 = scalar_select %p289, %s286, 7
      %s291 = smul.addr %s290, 2
      %s292 = smul.addr %s288, 16
      %s293 = sadd.s32 %s291, %s292
      %s294 = smul.addr %s293, 8
      %s295 = scalar_lea.vmem %s6, %s294
      %s296 = smul.u32 4, %s22
      %s298 = smul.u32 %s22, 4
      %vm299 = vcmask 125952
      %300 = vst.msk [vmem:[#allocation2] sm:$0xf] %vm299, 0
      %vm301 = vcmask 122880
      %302 = vst.msk [vmem:[#allocation2 + $0x4] sm:$0x1] %vm301, 0
      %s303 = scalar_lea.vmem [#allocation2], 40
      %304 = vst.msk [vmem:[%s303] sm:$0xf] %vm299, 0
      %305 = vst.msk [vmem:[%s303 + $0x4] sm:$0x1] %vm301, 0
      %vm306 = vcmask 122880
      %vm307 = vsmask.f32 256
      %vm308 = vmand %vm306, %vm307
      %v309 = vld [vmem:[#allocation2] sm:$0x1]
      %v310 = vsel %vm308, 0, %v309
      %311 = vst [vmem:[#allocation2] sm:$0x1] %v310
      %v312 = vld [vmem:[#allocation2 + $0x8] sm:$0x1]
      %v313 = vsel %vm308, 0, %v312
      %314 = vst [vmem:[#allocation2 + $0x8] sm:$0x1] %v313
      %v315 = vld [vmem:[#allocation2 + $0x10] sm:$0x1]
      %v316 = vsel %vm308, 0, %v315
      %317 = vst [vmem:[#allocation2 + $0x10] sm:$0x1] %v316
      %v318 = vld [vmem:[#allocation2 + $0x18] sm:$0x1]
      %v319 = vsel %vm308, 0, %v318
      %320 = vst [vmem:[#allocation2 + $0x18] sm:$0x1] %v319
      %v321 = vld [vmem:[#allocation2 + $0x20] sm:$0x1]
      %v322 = vsel %vm308, 0, %v321
      %323 = vst [vmem:[#allocation2 + $0x20] sm:$0x1] %v322
      %v324 = vld [vmem:[#allocation2 + $0x28] sm:$0x1]
      %v325 = vsel %vm308, 0, %v324
      %326 = vst [vmem:[#allocation2 + $0x28] sm:$0x1] %v325
      %vm327 = vsmask.f32 7938
      %vm328 = vmand %vm306, %vm327
      %v329 = vld [vmem:[#allocation2 + $0x4] sm:$0x1]
      %v330 = vsel %vm328, 0, %v329
      %331 = vst [vmem:[#allocation2 + $0x4] sm:$0x1] %v330
      %v332 = vld [vmem:[#allocation2 + $0xc] sm:$0x1]
      %v333 = vsel %vm328, 0, %v332
      %334 = vst [vmem:[#allocation2 + $0xc] sm:$0x1] %v333
      %v335 = vld [vmem:[#allocation2 + $0x14] sm:$0x1]
      %v336 = vsel %vm328, 0, %v335
      %337 = vst [vmem:[#allocation2 + $0x14] sm:$0x1] %v336
      %v338 = vld [vmem:[#allocation2 + $0x1c] sm:$0x1]
      %v339 = vsel %vm328, 0, %v338
      %340 = vst [vmem:[#allocation2 + $0x1c] sm:$0x1] %v339
      %v341 = vld [vmem:[#allocation2 + $0x24] sm:$0x1]
      %v342 = vsel %vm328, 0, %v341
      %343 = vst [vmem:[#allocation2 + $0x24] sm:$0x1] %v342
      %v344 = vld [vmem:[#allocation2 + $0x2c] sm:$0x1]
      %v345 = vsel %vm328, 0, %v344
      %346 = vst [vmem:[#allocation2 + $0x2c] sm:$0x1] %v345
      %s347 = scalar_lea.vmem [#allocation2], 48
      %348 = vst.msk [vmem:[%s347] sm:$0xf] %vm299, 0
      %349 = vst.msk [vmem:[%s347 + $0x4] sm:$0x1] %vm301, 0
      %s350 = scalar_lea.vmem [#allocation2], 88
      %351 = vst.msk [vmem:[%s350] sm:$0xf] %vm299, 0
      %352 = vst.msk [vmem:[%s350 + $0x4] sm:$0x1] %vm301, 0
      %v353 = vld [vmem:[%s347] sm:$0x1]
      %v354 = vsel %vm308, 0, %v353
      %355 = vst [vmem:[%s347] sm:$0x1] %v354
      %v356 = vld [vmem:[%s347 + $0x8] sm:$0x1]
      %v357 = vsel %vm308, 0, %v356
      %358 = vst [vmem:[%s347 + $0x8] sm:$0x1] %v357
      %v359 = vld [vmem:[%s347 + $0x10] sm:$0x1]
      %v360 = vsel %vm308, 0, %v359
      %361 = vst [vmem:[%s347 + $0x10] sm:$0x1] %v360
      %v362 = vld [vmem:[%s347 + $0x18] sm:$0x1]
      %v363 = vsel %vm308, 0, %v362
      %364 = vst [vmem:[%s347 + $0x18] sm:$0x1] %v363
      %v365 = vld [vmem:[%s347 + $0x20] sm:$0x1]
      %v366 = vsel %vm308, 0, %v365
      %367 = vst [vmem:[%s347 + $0x20] sm:$0x1] %v366
      %v368 = vld [vmem:[%s347 + $0x28] sm:$0x1]
      %v369 = vsel %vm308, 0, %v368
      %370 = vst [vmem:[%s347 + $0x28] sm:$0x1] %v369
      %v371 = vld [vmem:[%s347 + $0x4] sm:$0x1]
      %v372 = vsel %vm328, 0, %v371
      %373 = vst [vmem:[%s347 + $0x4] sm:$0x1] %v372
      %v374 = vld [vmem:[%s347 + $0xc] sm:$0x1]
      %v375 = vsel %vm328, 0, %v374
      %376 = vst [vmem:[%s347 + $0xc] sm:$0x1] %v375
      %v377 = vld [vmem:[%s347 + $0x14] sm:$0x1]
      %v378 = vsel %vm328, 0, %v377
      %379 = vst [vmem:[%s347 + $0x14] sm:$0x1] %v378
      %v380 = vld [vmem:[%s347 + $0x1c] sm:$0x1]
      %v381 = vsel %vm328, 0, %v380
      %382 = vst [vmem:[%s347 + $0x1c] sm:$0x1] %v381
      %v383 = vld [vmem:[%s347 + $0x24] sm:$0x1]
      %v384 = vsel %vm328, 0, %v383
      %385 = vst [vmem:[%s347 + $0x24] sm:$0x1] %v384
      %v386 = vld [vmem:[%s347 + $0x2c] sm:$0x1]
      %v387 = vsel %vm328, 0, %v386
      %388 = vst [vmem:[%s347 + $0x2c] sm:$0x1] %v387
      %s389 = scalar_lea.vmem [#allocation2], 96
      %390 = vst.msk [vmem:[%s389] sm:$0xf] %vm299, 0
      %391 = vst.msk [vmem:[%s389 + $0x4] sm:$0x1] %vm301, 0
      %s392 = scalar_lea.vmem [#allocation2], 136
      %393 = vst.msk [vmem:[%s392] sm:$0xf] %vm299, 0
      %394 = vst.msk [vmem:[%s392 + $0x4] sm:$0x1] %vm301, 0
      %v395 = vld [vmem:[%s389] sm:$0x1]
      %v396 = vsel %vm308, 0, %v395
      %397 = vst [vmem:[%s389] sm:$0x1] %v396
      %v398 = vld [vmem:[%s389 + $0x8] sm:$0x1]
      %v399 = vsel %vm308, 0, %v398
      %400 = vst [vmem:[%s389 + $0x8] sm:$0x1] %v399
      %v401 = vld [vmem:[%s389 + $0x10] sm:$0x1]
      %v402 = vsel %vm308, 0, %v401
      %403 = vst [vmem:[%s389 + $0x10] sm:$0x1] %v402
      %v404 = vld [vmem:[%s389 + $0x18] sm:$0x1]
      %v405 = vsel %vm308, 0, %v404
      %406 = vst [vmem:[%s389 + $0x18] sm:$0x1] %v405
      %v407 = vld [vmem:[%s389 + $0x20] sm:$0x1]
      %v408 = vsel %vm308, 0, %v407
      %409 = vst [vmem:[%s389 + $0x20] sm:$0x1] %v408
      %v410 = vld [vmem:[%s389 + $0x28] sm:$0x1]
      %v411 = vsel %vm308, 0, %v410
      %412 = vst [vmem:[%s389 + $0x28] sm:$0x1] %v411
      %v413 = vld [vmem:[%s389 + $0x4] sm:$0x1]
      %v414 = vsel %vm328, 0, %v413
      %415 = vst [vmem:[%s389 + $0x4] sm:$0x1] %v414
      %v416 = vld [vmem:[%s389 + $0xc] sm:$0x1]
      %v417 = vsel %vm328, 0, %v416
      %418 = vst [vmem:[%s389 + $0xc] sm:$0x1] %v417
      %v419 = vld [vmem:[%s389 + $0x14] sm:$0x1]
      %v420 = vsel %vm328, 0, %v419
      %421 = vst [vmem:[%s389 + $0x14] sm:$0x1] %v420
      %v422 = vld [vmem:[%s389 + $0x1c] sm:$0x1]
      %v423 = vsel %vm328, 0, %v422
      %424 = vst [vmem:[%s389 + $0x1c] sm:$0x1] %v423
      %v425 = vld [vmem:[%s389 + $0x24] sm:$0x1]
      %v426 = vsel %vm328, 0, %v425
      %427 = vst [vmem:[%s389 + $0x24] sm:$0x1] %v426
      %v428 = vld [vmem:[%s389 + $0x2c] sm:$0x1]
      %v429 = vsel %vm328, 0, %v428
      %430 = vst [vmem:[%s389 + $0x2c] sm:$0x1] %v429
      %s431 = scalar_lea.vmem [#allocation2], 144
      %432 = vst.msk [vmem:[%s431] sm:$0xf] %vm299, 0
      %433 = vst.msk [vmem:[%s431 + $0x4] sm:$0x1] %vm301, 0
      %s434 = scalar_lea.vmem [#allocation2], 184
      %435 = vst.msk [vmem:[%s434] sm:$0xf] %vm299, 0
      %436 = vst.msk [vmem:[%s434 + $0x4] sm:$0x1] %vm301, 0
      %v437 = vld [vmem:[%s431] sm:$0x1]
      %v438 = vsel %vm308, 0, %v437
      %439 = vst [vmem:[%s431] sm:$0x1] %v438
      %v440 = vld [vmem:[%s431 + $0x8] sm:$0x1]
      %v441 = vsel %vm308, 0, %v440
      %442 = vst [vmem:[%s431 + $0x8] sm:$0x1] %v441
      %v443 = vld [vmem:[%s431 + $0x10] sm:$0x1]
      %v444 = vsel %vm308, 0, %v443
      %445 = vst [vmem:[%s431 + $0x10] sm:$0x1] %v444
      %v446 = vld [vmem:[%s431 + $0x18] sm:$0x1]
      %v447 = vsel %vm308, 0, %v446
      %448 = vst [vmem:[%s431 + $0x18] sm:$0x1] %v447
      %v449 = vld [vmem:[%s431 + $0x20] sm:$0x1]
      %v450 = vsel %vm308, 0, %v449
      %451 = vst [vmem:[%s431 + $0x20] sm:$0x1] %v450
      %v452 = vld [vmem:[%s431 + $0x28] sm:$0x1]
      %v453 = vsel %vm308, 0, %v452
      %454 = vst [vmem:[%s431 + $0x28] sm:$0x1] %v453
      %v455 = vld [vmem:[%s431 + $0x4] sm:$0x1]
      %v456 = vsel %vm328, 0, %v455
      %457 = vst [vmem:[%s431 + $0x4] sm:$0x1] %v456
      %v458 = vld [vmem:[%s431 + $0xc] sm:$0x1]
      %v459 = vsel %vm328, 0, %v458
      %460 = vst [vmem:[%s431 + $0xc] sm:$0x1] %v459
      %v461 = vld [vmem:[%s431 + $0x14] sm:$0x1]
      %v462 = vsel %vm328, 0, %v461
      %463 = vst [vmem:[%s431 + $0x14] sm:$0x1] %v462
      %v464 = vld [vmem:[%s431 + $0x1c] sm:$0x1]
      %v465 = vsel %vm328, 0, %v464
      %466 = vst [vmem:[%s431 + $0x1c] sm:$0x1] %v465
      %v467 = vld [vmem:[%s431 + $0x24] sm:$0x1]
      %v468 = vsel %vm328, 0, %v467
      %469 = vst [vmem:[%s431 + $0x24] sm:$0x1] %v468
      %v470 = vld [vmem:[%s431 + $0x2c] sm:$0x1]
      %v471 = vsel %vm328, 0, %v470
      %472 = vst [vmem:[%s431 + $0x2c] sm:$0x1] %v471
      %s473 = smul.addr %s298, 4
      %s474 = scalar_lea.vmem %s280, %s473
      %v475 = vld [vmem:[%s474] sm:$0xf]
      %v476 = vld [vmem:[%s474 + $0x4] sm:$0xf]
      %v477 = vld [vmem:[%s474 + $0x8] sm:$0xf]
      %v478 = vld [vmem:[%s474 + $0xc] sm:$0xf]
      %s479 = smul.u32 %s298, 2
      %s480 = smul.addr %s479, 4
      %s481 = scalar_lea.vmem %s285, %s480
      %v482 = vld [vmem:[%s481] sm:$0xf]
      %v483 = vld [vmem:[%s481 + $0x8] sm:$0xf]
      %v484 = vld [vmem:[%s481 + $0x10] sm:$0xf]
      %v485 = vld [vmem:[%s481 + $0x18] sm:$0xf]
      %v487 = vshrl.u32 %v482, 16
      %v489 = vrot.slane %v487, 7
      %v490 = vshll.u32 %v482, 16
      %v492 = vor.u32 %v489, %v490
      %v493 = vrot.slane %v489, 4
      %v495 = vshrl.u32 %v483, 16
      %v497 = vrot.slane %v495, 7
      %v498 = vshll.u32 %v483, 16
      %v500 = vor.u32 %v497, %v498
      %v501 = vrot.slane %v497, 4
      %v503 = vshrl.u32 %v484, 16
      %v505 = vrot.slane %v503, 7
      %v506 = vshll.u32 %v484, 16
      %v508 = vor.u32 %v505, %v506
      %v509 = vrot.slane %v505, 4
      %v511 = vshrl.u32 %v485, 16
      %v513 = vrot.slane %v511, 7
      %v514 = vshll.u32 %v485, 16
      %v516 = vor.u32 %v513, %v514
      %v517 = vrot.slane %v513, 4
      %s526 = scalar_lea.vmem [#allocation2], 8
      %vm527 = vcmask 27648
      %vm528 = vmand %vm527, %vm327
      %v529 = vld [vmem:[%s526] sm:$0xf]
      %v530 = vsel %vm528, %v492, %v529
      %531 = vst [vmem:[%s526] sm:$0xf] %v530
      %vm532 = vcmask 24576
      %vm533 = vmand %vm532, %vm307
      %v534 = vld [vmem:[%s526 + $0x4] sm:$0x1]
      %v535 = vsel %vm533, %v493, %v534
      %536 = vst [vmem:[%s526 + $0x4] sm:$0x1] %v535
      %v537 = vld [vmem:[%s526 + $0x8] sm:$0xf]
      %v538 = vsel %vm528, %v500, %v537
      %539 = vst [vmem:[%s526 + $0x8] sm:$0xf] %v538
      %v540 = vld [vmem:[%s526 + $0xc] sm:$0x1]
      %v541 = vsel %vm533, %v501, %v540
      %542 = vst [vmem:[%s526 + $0xc] sm:$0x1] %v541
      %v543 = vld [vmem:[%s526 + $0x10] sm:$0xf]
      %v544 = vsel %vm528, %v508, %v543
      %545 = vst [vmem:[%s526 + $0x10] sm:$0xf] %v544
      %v546 = vld [vmem:[%s526 + $0x14] sm:$0x1]
      %v547 = vsel %vm533, %v509, %v546
      %548 = vst [vmem:[%s526 + $0x14] sm:$0x1] %v547
      %v549 = vld [vmem:[%s526 + $0x18] sm:$0xf]
      %v550 = vsel %vm528, %v516, %v549
      %551 = vst [vmem:[%s526 + $0x18] sm:$0xf] %v550
      %v552 = vld [vmem:[%s526 + $0x1c] sm:$0x1]
      %v553 = vsel %vm533, %v517, %v552
      %554 = vst [vmem:[%s526 + $0x1c] sm:$0x1] %v553
      %v556 = vshrl.u32 %v475, 16
      %v558 = vrot.slane %v556, 7
      %v559 = vshll.u32 %v475, 16
      %v561 = vor.u32 %v558, %v559
      %v562 = vrot.slane %v558, 4
      %v564 = vshrl.u32 %v476, 16
      %v566 = vrot.slane %v564, 7
      %v567 = vshll.u32 %v476, 16
      %v569 = vor.u32 %v566, %v567
      %v570 = vrot.slane %v566, 4
      %v572 = vshrl.u32 %v477, 16
      %v574 = vrot.slane %v572, 7
      %v575 = vshll.u32 %v477, 16
      %v577 = vor.u32 %v574, %v575
      %v578 = vrot.slane %v574, 4
      %v580 = vshrl.u32 %v478, 16
      %v582 = vrot.slane %v580, 7
      %v583 = vshll.u32 %v478, 16
      %v585 = vor.u32 %v582, %v583
      %v586 = vrot.slane %v582, 4
      %587 = vrot.lane.b32.xlu0 %v561, 4
      %v588 = vpop.permute.xlu0 %587
      %589 = vrot.lane.b32.xlu0 %v562, 4
      %v590 = vpop.permute.xlu0 %589
      %591 = vrot.lane.b32.xlu0 %v569, 4
      %v592 = vpop.permute.xlu0 %591
      %593 = vrot.lane.b32.xlu0 %v570, 4
      %v594 = vpop.permute.xlu0 %593
      %595 = vrot.lane.b32.xlu0 %v577, 4
      %v596 = vpop.permute.xlu0 %595
      %597 = vrot.lane.b32.xlu0 %v578, 4
      %v598 = vpop.permute.xlu0 %597
      %599 = vrot.lane.b32.xlu0 %v585, 4
      %v600 = vpop.permute.xlu0 %599
      %601 = vrot.lane.b32.xlu0 %v586, 4
      %v602 = vpop.permute.xlu0 %601
      %vm611 = vcmask 125984
      %vm612 = vmand %vm611, %vm327
      %v613 = vld [vmem:[%s526] sm:$0xf]
      %v614 = vsel %vm612, %v588, %v613
      %615 = vst [vmem:[%s526] sm:$0xf] %v614
      %vm616 = vcmask 122912
      %vm617 = vmand %vm616, %vm307
      %v618 = vld [vmem:[%s526 + $0x4] sm:$0x1]
      %v619 = vsel %vm617, %v590, %v618
      %620 = vst [vmem:[%s526 + $0x4] sm:$0x1] %v619
      %v621 = vld [vmem:[%s526 + $0x8] sm:$0xf]
      %v622 = vsel %vm612, %v592, %v621
      %623 = vst [vmem:[%s526 + $0x8] sm:$0xf] %v622
      %v624 = vld [vmem:[%s526 + $0xc] sm:$0x1]
      %v625 = vsel %vm617, %v594, %v624
      %626 = vst [vmem:[%s526 + $0xc] sm:$0x1] %v625
      %v627 = vld [vmem:[%s526 + $0x10] sm:$0xf]
      %v628 = vsel %vm612, %v596, %v627
      %629 = vst [vmem:[%s526 + $0x10] sm:$0xf] %v628
      %v630 = vld [vmem:[%s526 + $0x14] sm:$0x1]
      %v631 = vsel %vm617, %v598, %v630
      %632 = vst [vmem:[%s526 + $0x14] sm:$0x1] %v631
      %v633 = vld [vmem:[%s526 + $0x18] sm:$0xf]
      %v634 = vsel %vm612, %v600, %v633
      %635 = vst [vmem:[%s526 + $0x18] sm:$0xf] %v634
      %v636 = vld [vmem:[%s526 + $0x1c] sm:$0x1]
      %v637 = vsel %vm617, %v602, %v636
      %638 = vst [vmem:[%s526 + $0x1c] sm:$0x1] %v637
      %v639 = vld [vmem:[%s481] sm:$0xf]
      %v640 = vld [vmem:[%s481 + $0x8] sm:$0xf]
      %v641 = vld [vmem:[%s481 + $0x10] sm:$0xf]
      %v642 = vld [vmem:[%s481 + $0x18] sm:$0xf]
      %v644 = vshrl.u32 %v639, 16
      %v646 = vrot.slane %v644, 7
      %v647 = vshll.u32 %v639, 16
      %v649 = vor.u32 %v646, %v647
      %v650 = vrot.slane %v646, 4
      %v652 = vshrl.u32 %v640, 16
      %v654 = vrot.slane %v652, 7
      %v655 = vshll.u32 %v640, 16
      %v657 = vor.u32 %v654, %v655
      %v658 = vrot.slane %v654, 4
      %v660 = vshrl.u32 %v641, 16
      %v662 = vrot.slane %v660, 7
      %v663 = vshll.u32 %v641, 16
      %v665 = vor.u32 %v662, %v663
      %v666 = vrot.slane %v662, 4
      %v668 = vshrl.u32 %v642, 16
      %v670 = vrot.slane %v668, 7
      %v671 = vshll.u32 %v642, 16
      %v673 = vor.u32 %v670, %v671
      %v674 = vrot.slane %v670, 4
      %675 = vrot.lane.b32.xlu0 %v649, 124
      %v676 = vpop.permute.xlu0 %675
      %677 = vrot.lane.b32.xlu0 %v650, 124
      %v678 = vpop.permute.xlu0 %677
      %679 = vrot.lane.b32.xlu0 %v657, 124
      %v680 = vpop.permute.xlu0 %679
      %681 = vrot.lane.b32.xlu0 %v658, 124
      %v682 = vpop.permute.xlu0 %681
      %683 = vrot.lane.b32.xlu0 %v665, 124
      %v684 = vpop.permute.xlu0 %683
      %685 = vrot.lane.b32.xlu0 %v666, 124
      %v686 = vpop.permute.xlu0 %685
      %687 = vrot.lane.b32.xlu0 %v673, 124
      %v688 = vpop.permute.xlu0 %687
      %689 = vrot.lane.b32.xlu0 %v674, 124
      %v690 = vpop.permute.xlu0 %689
      %s699 = scalar_lea.vmem [#allocation2], 56
      %v700 = vld [vmem:[%s699] sm:$0xf]
      %v701 = vsel %vm528, %v676, %v700
      %702 = vst [vmem:[%s699] sm:$0xf] %v701
      %v703 = vld [vmem:[%s699 + $0x4] sm:$0x1]
      %v704 = vsel %vm533, %v678, %v703
      %705 = vst [vmem:[%s699 + $0x4] sm:$0x1] %v704
      %v706 = vld [vmem:[%s699 + $0x8] sm:$0xf]
      %v707 = vsel %vm528, %v680, %v706
      %708 = vst [vmem:[%s699 + $0x8] sm:$0xf] %v707
      %v709 = vld [vmem:[%s699 + $0xc] sm:$0x1]
      %v710 = vsel %vm533, %v682, %v709
      %711 = vst [vmem:[%s699 + $0xc] sm:$0x1] %v710
      %v712 = vld [vmem:[%s699 + $0x10] sm:$0xf]
      %v713 = vsel %vm528, %v684, %v712
      %714 = vst [vmem:[%s699 + $0x10] sm:$0xf] %v713
      %v715 = vld [vmem:[%s699 + $0x14] sm:$0x1]
      %v716 = vsel %vm533, %v686, %v715
      %717 = vst [vmem:[%s699 + $0x14] sm:$0x1] %v716
      %v718 = vld [vmem:[%s699 + $0x18] sm:$0xf]
      %v719 = vsel %vm528, %v688, %v718
      %720 = vst [vmem:[%s699 + $0x18] sm:$0xf] %v719
      %v721 = vld [vmem:[%s699 + $0x1c] sm:$0x1]
      %v722 = vsel %vm533, %v690, %v721
      %723 = vst [vmem:[%s699 + $0x1c] sm:$0x1] %v722
      %v724 = vld [vmem:[%s699] sm:$0xf]
      %v725 = vsel %vm612, %v588, %v724
      %726 = vst [vmem:[%s699] sm:$0xf] %v725
      %v727 = vld [vmem:[%s699 + $0x4] sm:$0x1]
      %v728 = vsel %vm617, %v590, %v727
      %729 = vst [vmem:[%s699 + $0x4] sm:$0x1] %v728
      %v730 = vld [vmem:[%s699 + $0x8] sm:$0xf]
      %v731 = vsel %vm612, %v592, %v730
      %732 = vst [vmem:[%s699 + $0x8] sm:$0xf] %v731
      %v733 = vld [vmem:[%s699 + $0xc] sm:$0x1]
      %v734 = vsel %vm617, %v594, %v733
      %735 = vst [vmem:[%s699 + $0xc] sm:$0x1] %v734
      %v736 = vld [vmem:[%s699 + $0x10] sm:$0xf]
      %v737 = vsel %vm612, %v596, %v736
      %738 = vst [vmem:[%s699 + $0x10] sm:$0xf] %v737
      %v739 = vld [vmem:[%s699 + $0x14] sm:$0x1]
      %v740 = vsel %vm617, %v598, %v739
      %741 = vst [vmem:[%s699 + $0x14] sm:$0x1] %v740
      %v742 = vld [vmem:[%s699 + $0x18] sm:$0xf]
      %v743 = vsel %vm612, %v600, %v742
      %744 = vst [vmem:[%s699 + $0x18] sm:$0xf] %v743
      %v745 = vld [vmem:[%s699 + $0x1c] sm:$0x1]
      %v746 = vsel %vm617, %v602, %v745
      %747 = vst [vmem:[%s699 + $0x1c] sm:$0x1] %v746
      %s748 = sadd.s32 1, %s479
      %s749 = smul.addr %s748, 4
      %s750 = scalar_lea.vmem %s285, %s749
      %v751 = vld [vmem:[%s750] sm:$0xf]
      %v752 = vld [vmem:[%s750 + $0x8] sm:$0xf]
      %v753 = vld [vmem:[%s750 + $0x10] sm:$0xf]
      %v754 = vld [vmem:[%s750 + $0x18] sm:$0xf]
      %v756 = vshrl.u32 %v751, 16
      %v758 = vrot.slane %v756, 7
      %v759 = vshll.u32 %v751, 16
      %v761 = vor.u32 %v758, %v759
      %v762 = vrot.slane %v758, 4
      %v764 = vshrl.u32 %v752, 16
      %v766 = vrot.slane %v764, 7
      %v767 = vshll.u32 %v752, 16
      %v769 = vor.u32 %v766, %v767
      %v770 = vrot.slane %v766, 4
      %v772 = vshrl.u32 %v753, 16
      %v774 = vrot.slane %v772, 7
      %v775 = vshll.u32 %v753, 16
      %v777 = vor.u32 %v774, %v775
      %v778 = vrot.slane %v774, 4
      %v780 = vshrl.u32 %v754, 16
      %v782 = vrot.slane %v780, 7
      %v783 = vshll.u32 %v754, 16
      %v785 = vor.u32 %v782, %v783
      %v786 = vrot.slane %v782, 4
      %s795 = scalar_lea.vmem [#allocation2], 104
      %v796 = vld [vmem:[%s795] sm:$0xf]
      %v797 = vsel %vm528, %v761, %v796
      %798 = vst [vmem:[%s795] sm:$0xf] %v797
      %v799 = vld [vmem:[%s795 + $0x4] sm:$0x1]
      %v800 = vsel %vm533, %v762, %v799
      %801 = vst [vmem:[%s795 + $0x4] sm:$0x1] %v800
      %v802 = vld [vmem:[%s795 + $0x8] sm:$0xf]
      %v803 = vsel %vm528, %v769, %v802
      %804 = vst [vmem:[%s795 + $0x8] sm:$0xf] %v803
      %v805 = vld [vmem:[%s795 + $0xc] sm:$0x1]
      %v806 = vsel %vm533, %v770, %v805
      %807 = vst [vmem:[%s795 + $0xc] sm:$0x1] %v806
      %v808 = vld [vmem:[%s795 + $0x10] sm:$0xf]
      %v809 = vsel %vm528, %v777, %v808
      %810 = vst [vmem:[%s795 + $0x10] sm:$0xf] %v809
      %v811 = vld [vmem:[%s795 + $0x14] sm:$0x1]
      %v812 = vsel %vm533, %v778, %v811
      %813 = vst [vmem:[%s795 + $0x14] sm:$0x1] %v812
      %v814 = vld [vmem:[%s795 + $0x18] sm:$0xf]
      %v815 = vsel %vm528, %v785, %v814
      %816 = vst [vmem:[%s795 + $0x18] sm:$0xf] %v815
      %v817 = vld [vmem:[%s795 + $0x1c] sm:$0x1]
      %v818 = vsel %vm533, %v786, %v817
      %819 = vst [vmem:[%s795 + $0x1c] sm:$0x1] %v818
      %v820 = vld [vmem:[%s795] sm:$0xf]
      %v821 = vsel %vm612, %v588, %v820
      %822 = vst [vmem:[%s795] sm:$0xf] %v821
      %v823 = vld [vmem:[%s795 + $0x4] sm:$0x1]
      %v824 = vsel %vm617, %v590, %v823
      %825 = vst [vmem:[%s795 + $0x4] sm:$0x1] %v824
      %v826 = vld [vmem:[%s795 + $0x8] sm:$0xf]
      %v827 = vsel %vm612, %v592, %v826
      %828 = vst [vmem:[%s795 + $0x8] sm:$0xf] %v827
      %v829 = vld [vmem:[%s795 + $0xc] sm:$0x1]
      %v830 = vsel %vm617, %v594, %v829
      %831 = vst [vmem:[%s795 + $0xc] sm:$0x1] %v830
      %v832 = vld [vmem:[%s795 + $0x10] sm:$0xf]
      %v833 = vsel %vm612, %v596, %v832
      %834 = vst [vmem:[%s795 + $0x10] sm:$0xf] %v833
      %v835 = vld [vmem:[%s795 + $0x14] sm:$0x1]
      %v836 = vsel %vm617, %v598, %v835
      %837 = vst [vmem:[%s795 + $0x14] sm:$0x1] %v836
      %v838 = vld [vmem:[%s795 + $0x18] sm:$0xf]
      %v839 = vsel %vm612, %v600, %v838
      %840 = vst [vmem:[%s795 + $0x18] sm:$0xf] %v839
      %v841 = vld [vmem:[%s795 + $0x1c] sm:$0x1]
      %v842 = vsel %vm617, %v602, %v841
      %843 = vst [vmem:[%s795 + $0x1c] sm:$0x1] %v842
      %v844 = vld [vmem:[%s750] sm:$0xf]
      %v845 = vld [vmem:[%s750 + $0x8] sm:$0xf]
      %v846 = vld [vmem:[%s750 + $0x10] sm:$0xf]
      %v847 = vld [vmem:[%s750 + $0x18] sm:$0xf]
      %v849 = vshrl.u32 %v844, 16
      %v851 = vrot.slane %v849, 7
      %v852 = vshll.u32 %v844, 16
      %v854 = vor.u32 %v851, %v852
      %v855 = vrot.slane %v851, 4
      %v857 = vshrl.u32 %v845, 16
      %v859 = vrot.slane %v857, 7
      %v860 = vshll.u32 %v845, 16
      %v862 = vor.u32 %v859, %v860
      %v863 = vrot.slane %v859, 4
      %v865 = vshrl.u32 %v846, 16
      %v867 = vrot.slane %v865, 7
      %v868 = vshll.u32 %v846, 16
      %v870 = vor.u32 %v867, %v868
      %v871 = vrot.slane %v867, 4
      %v873 = vshrl.u32 %v847, 16
      %v875 = vrot.slane %v873, 7
      %v876 = vshll.u32 %v847, 16
      %v878 = vor.u32 %v875, %v876
      %v879 = vrot.slane %v875, 4
      %880 = vrot.lane.b32.xlu0 %v854, 124
      %v881 = vpop.permute.xlu0 %880
      %882 = vrot.lane.b32.xlu0 %v855, 124
      %v883 = vpop.permute.xlu0 %882
      %884 = vrot.lane.b32.xlu0 %v862, 124
      %v885 = vpop.permute.xlu0 %884
      %886 = vrot.lane.b32.xlu0 %v863, 124
      %v887 = vpop.permute.xlu0 %886
      %888 = vrot.lane.b32.xlu0 %v870, 124
      %v889 = vpop.permute.xlu0 %888
      %890 = vrot.lane.b32.xlu0 %v871, 124
      %v891 = vpop.permute.xlu0 %890
      %892 = vrot.lane.b32.xlu0 %v878, 124
      %v893 = vpop.permute.xlu0 %892
      %894 = vrot.lane.b32.xlu0 %v879, 124
      %v895 = vpop.permute.xlu0 %894
      %s904 = scalar_lea.vmem [#allocation2], 152
      %v905 = vld [vmem:[%s904] sm:$0xf]
      %v906 = vsel %vm528, %v881, %v905
      %907 = vst [vmem:[%s904] sm:$0xf] %v906
      %v908 = vld [vmem:[%s904 + $0x4] sm:$0x1]
      %v909 = vsel %vm533, %v883, %v908
      %910 = vst [vmem:[%s904 + $0x4] sm:$0x1] %v909
      %v911 = vld [vmem:[%s904 + $0x8] sm:$0xf]
      %v912 = vsel %vm528, %v885, %v911
      %913 = vst [vmem:[%s904 + $0x8] sm:$0xf] %v912
      %v914 = vld [vmem:[%s904 + $0xc] sm:$0x1]
      %v915 = vsel %vm533, %v887, %v914
      %916 = vst [vmem:[%s904 + $0xc] sm:$0x1] %v915
      %v917 = vld [vmem:[%s904 + $0x10] sm:$0xf]
      %v918 = vsel %vm528, %v889, %v917
      %919 = vst [vmem:[%s904 + $0x10] sm:$0xf] %v918
      %v920 = vld [vmem:[%s904 + $0x14] sm:$0x1]
      %v921 = vsel %vm533, %v891, %v920
      %922 = vst [vmem:[%s904 + $0x14] sm:$0x1] %v921
      %v923 = vld [vmem:[%s904 + $0x18] sm:$0xf]
      %v924 = vsel %vm528, %v893, %v923
      %925 = vst [vmem:[%s904 + $0x18] sm:$0xf] %v924
      %v926 = vld [vmem:[%s904 + $0x1c] sm:$0x1]
      %v927 = vsel %vm533, %v895, %v926
      %928 = vst [vmem:[%s904 + $0x1c] sm:$0x1] %v927
      %v929 = vld [vmem:[%s904] sm:$0xf]
      %v930 = vsel %vm612, %v588, %v929
      %931 = vst [vmem:[%s904] sm:$0xf] %v930
      %v932 = vld [vmem:[%s904 + $0x4] sm:$0x1]
      %v933 = vsel %vm617, %v590, %v932
      %934 = vst [vmem:[%s904 + $0x4] sm:$0x1] %v933
      %v935 = vld [vmem:[%s904 + $0x8] sm:$0xf]
      %v936 = vsel %vm612, %v592, %v935
      %937 = vst [vmem:[%s904 + $0x8] sm:$0xf] %v936
      %v938 = vld [vmem:[%s904 + $0xc] sm:$0x1]
      %v939 = vsel %vm617, %v594, %v938
      %940 = vst [vmem:[%s904 + $0xc] sm:$0x1] %v939
      %v941 = vld [vmem:[%s904 + $0x10] sm:$0xf]
      %v942 = vsel %vm612, %v596, %v941
      %943 = vst [vmem:[%s904 + $0x10] sm:$0xf] %v942
      %v944 = vld [vmem:[%s904 + $0x14] sm:$0x1]
      %v945 = vsel %vm617, %v598, %v944
      %946 = vst [vmem:[%s904 + $0x14] sm:$0x1] %v945
      %v947 = vld [vmem:[%s904 + $0x18] sm:$0xf]
      %v948 = vsel %vm612, %v600, %v947
      %949 = vst [vmem:[%s904 + $0x18] sm:$0xf] %v948
      %v950 = vld [vmem:[%s904 + $0x1c] sm:$0x1]
      %v951 = vsel %vm617, %v602, %v950
      %952 = vst [vmem:[%s904 + $0x1c] sm:$0x1] %v951
      %p953 = scmp.gt.s32.totalorder %s22, 0
      // Predicated region
      $region45: #{up_forward.1} parent=43 // pred_check
        %p954 = pneg %p953
      $region46: #{up_forward.1} parent=43 // pred_check_branch
        %956 = sbr.rel (%p954) target = $region48
      $region47: #{up_forward.1} parent=43 // pred_region
        %s957 = ssub.s32 %s298, 1
        %s958 = smul.addr %s957, 4
        %s959 = scalar_lea.vmem %s280, %s958
        %v960 = vld [vmem:[%s959] sm:$0xf]
        %s961 = smul.u32 %s957, 2
        %s962 = smul.addr %s961, 4
        %s963 = scalar_lea.vmem %s285, %s962
        %v964 = vld [vmem:[%s963] sm:$0xf]
        %v966 = vshrl.u32 %v964, 16
        %v968 = vrot.slane %v966, 7
        %v969 = vshll.u32 %v964, 16
        %v971 = vor.u32 %v968, %v969
        %v972 = vrot.slane %v968, 4
        %v975 = vld [vmem:[#allocation2] sm:$0xf]
        %v976 = vsel %vm528, %v971, %v975
        %977 = vst [vmem:[#allocation2] sm:$0xf] %v976
        %v978 = vld [vmem:[#allocation2 + $0x4] sm:$0x1]
        %v979 = vsel %vm533, %v972, %v978
        %980 = vst [vmem:[#allocation2 + $0x4] sm:$0x1] %v979
        %v982 = vshrl.u32 %v960, 16
        %v984 = vrot.slane %v982, 7
        %v985 = vshll.u32 %v960, 16
        %v987 = vor.u32 %v984, %v985
        %v988 = vrot.slane %v984, 4
        %989 = vrot.lane.b32.xlu0 %v987, 4
        %v990 = vpop.permute.xlu0 %989
        %991 = vrot.lane.b32.xlu0 %v988, 4
        %v992 = vpop.permute.xlu0 %991
        %v995 = vld [vmem:[#allocation2] sm:$0xf]
        %v996 = vsel %vm612, %v990, %v995
        %997 = vst [vmem:[#allocation2] sm:$0xf] %v996
        %v998 = vld [vmem:[#allocation2 + $0x4] sm:$0x1]
        %v999 = vsel %vm617, %v992, %v998
        %1000 = vst [vmem:[#allocation2 + $0x4] sm:$0x1] %v999
        %v1001 = vld [vmem:[%s963] sm:$0xf]
        %v1003 = vshrl.u32 %v1001, 16
        %v1005 = vrot.slane %v1003, 7
        %v1006 = vshll.u32 %v1001, 16
        %v1008 = vor.u32 %v1005, %v1006
        %v1009 = vrot.slane %v1005, 4
        %1010 = vrot.lane.b32.xlu0 %v1008, 124
        %v1011 = vpop.permute.xlu0 %1010
        %1012 = vrot.lane.b32.xlu0 %v1009, 124
        %v1013 = vpop.permute.xlu0 %1012
        %v1016 = vld [vmem:[%s347] sm:$0xf]
        %v1017 = vsel %vm528, %v1011, %v1016
        %1018 = vst [vmem:[%s347] sm:$0xf] %v1017
        %v1019 = vld [vmem:[%s347 + $0x4] sm:$0x1]
        %v1020 = vsel %vm533, %v1013, %v1019
        %1021 = vst [vmem:[%s347 + $0x4] sm:$0x1] %v1020
        %v1022 = vld [vmem:[%s347] sm:$0xf]
        %v1023 = vsel %vm612, %v990, %v1022
        %1024 = vst [vmem:[%s347] sm:$0xf] %v1023
        %v1025 = vld [vmem:[%s347 + $0x4] sm:$0x1]
        %v1026 = vsel %vm617, %v992, %v1025
        %1027 = vst [vmem:[%s347 + $0x4] sm:$0x1] %v1026
        %s1028 = sadd.s32 1, %s961
        %s1029 = smul.addr %s1028, 4
        %s1030 = scalar_lea.vmem %s285, %s1029
        %v1031 = vld [vmem:[%s1030] sm:$0xf]
        %v1033 = vshrl.u32 %v1031, 16
        %v1035 = vrot.slane %v1033, 7
        %v1036 = vshll.u32 %v1031, 16
        %v1038 = vor.u32 %v1035, %v1036
        %v1039 = vrot.slane %v1035, 4
        %v1042 = vld [vmem:[%s389] sm:$0xf]
        %v1043 = vsel %vm528, %v1038, %v1042
        %1044 = vst [vmem:[%s389] sm:$0xf] %v1043
        %v1045 = vld [vmem:[%s389 + $0x4] sm:$0x1]
        %v1046 = vsel %vm533, %v1039, %v1045
        %1047 = vst [vmem:[%s389 + $0x4] sm:$0x1] %v1046
        %v1048 = vld [vmem:[%s389] sm:$0xf]
        %v1049 = vsel %vm612, %v990, %v1048
        %1050 = vst [vmem:[%s389] sm:$0xf] %v1049
        %v1051 = vld [vmem:[%s389 + $0x4] sm:$0x1]
        %v1052 = vsel %vm617, %v992, %v1051
        %1053 = vst [vmem:[%s389 + $0x4] sm:$0x1] %v1052
        %v1054 = vld [vmem:[%s1030] sm:$0xf]
        %v1056 = vshrl.u32 %v1054, 16
        %v1058 = vrot.slane %v1056, 7
        %v1059 = vshll.u32 %v1054, 16
        %v1061 = vor.u32 %v1058, %v1059
        %v1062 = vrot.slane %v1058, 4
        %1063 = vrot.lane.b32.xlu0 %v1061, 124
        %v1064 = vpop.permute.xlu0 %1063
        %1065 = vrot.lane.b32.xlu0 %v1062, 124
        %v1066 = vpop.permute.xlu0 %1065
        %v1069 = vld [vmem:[%s431] sm:$0xf]
        %v1070 = vsel %vm528, %v1064, %v1069
        %1071 = vst [vmem:[%s431] sm:$0xf] %v1070
        %v1072 = vld [vmem:[%s431 + $0x4] sm:$0x1]
        %v1073 = vsel %vm533, %v1066, %v1072
        %1074 = vst [vmem:[%s431 + $0x4] sm:$0x1] %v1073
        %v1075 = vld [vmem:[%s431] sm:$0xf]
        %v1076 = vsel %vm612, %v990, %v1075
        %1077 = vst [vmem:[%s431] sm:$0xf] %v1076
        %v1078 = vld [vmem:[%s431 + $0x4] sm:$0x1]
        %v1079 = vsel %vm617, %v992, %v1078
        %1080 = vst [vmem:[%s431 + $0x4] sm:$0x1] %v1079
      $region48: #{up_forward.1} parent=43 // pred_fallthru
        _
      %p1081 = scmp.lt.s32.totalorder %s22, 1
      // Predicated region
      $region49: #{up_forward.1} parent=43 // pred_check
        %p1082 = pneg %p1081
      $region50: #{up_forward.1} parent=43 // pred_check_branch
        %1084 = sbr.rel (%p1082) target = $region52
      $region51: #{up_forward.1} parent=43 // pred_region
        %s1085 = sadd.s32 %s298, 4
        %s1086 = smul.addr %s1085, 4
        %s1087 = scalar_lea.vmem %s280, %s1086
        %v1088 = vld [vmem:[%s1087] sm:$0xf]
        %s1089 = smul.u32 %s1085, 2
        %s1090 = smul.addr %s1089, 4
        %s1091 = scalar_lea.vmem %s285, %s1090
        %v1092 = vld [vmem:[%s1091] sm:$0xf]
        %v1094 = vshrl.u32 %v1092, 16
        %v1096 = vrot.slane %v1094, 7
        %v1097 = vshll.u32 %v1092, 16
        %v1099 = vor.u32 %v1096, %v1097
        %v1100 = vrot.slane %v1096, 4
        %v1103 = vld [vmem:[%s303] sm:$0xf]
        %v1104 = vsel %vm528, %v1099, %v1103
        %1105 = vst [vmem:[%s303] sm:$0xf] %v1104
        %v1106 = vld [vmem:[%s303 + $0x4] sm:$0x1]
        %v1107 = vsel %vm533, %v1100, %v1106
        %1108 = vst [vmem:[%s303 + $0x4] sm:$0x1] %v1107
        %v1110 = vshrl.u32 %v1088, 16
        %v1112 = vrot.slane %v1110, 7
        %v1113 = vshll.u32 %v1088, 16
        %v1115 = vor.u32 %v1112, %v1113
        %v1116 = vrot.slane %v1112, 4
        %1117 = vrot.lane.b32.xlu0 %v1115, 4
        %v1118 = vpop.permute.xlu0 %1117
        %1119 = vrot.lane.b32.xlu0 %v1116, 4
        %v1120 = vpop.permute.xlu0 %1119
        %v1123 = vld [vmem:[%s303] sm:$0xf]
        %v1124 = vsel %vm612, %v1118, %v1123
        %1125 = vst [vmem:[%s303] sm:$0xf] %v1124
        %v1126 = vld [vmem:[%s303 + $0x4] sm:$0x1]
        %v1127 = vsel %vm617, %v1120, %v1126
        %1128 = vst [vmem:[%s303 + $0x4] sm:$0x1] %v1127
        %v1129 = vld [vmem:[%s1091] sm:$0xf]
        %v1131 = vshrl.u32 %v1129, 16
        %v1133 = vrot.slane %v1131, 7
        %v1134 = vshll.u32 %v1129, 16
        %v1136 = vor.u32 %v1133, %v1134
        %v1137 = vrot.slane %v1133, 4
        %1138 = vrot.lane.b32.xlu0 %v1136, 124
        %v1139 = vpop.permute.xlu0 %1138
        %1140 = vrot.lane.b32.xlu0 %v1137, 124
        %v1141 = vpop.permute.xlu0 %1140
        %v1144 = vld [vmem:[%s350] sm:$0xf]
        %v1145 = vsel %vm528, %v1139, %v1144
        %1146 = vst [vmem:[%s350] sm:$0xf] %v1145
        %v1147 = vld [vmem:[%s350 + $0x4] sm:$0x1]
        %v1148 = vsel %vm533, %v1141, %v1147
        %1149 = vst [vmem:[%s350 + $0x4] sm:$0x1] %v1148
        %v1150 = vld [vmem:[%s350] sm:$0xf]
        %v1151 = vsel %vm612, %v1118, %v1150
        %1152 = vst [vmem:[%s350] sm:$0xf] %v1151
        %v1153 = vld [vmem:[%s350 + $0x4] sm:$0x1]
        %v1154 = vsel %vm617, %v1120, %v1153
        %1155 = vst [vmem:[%s350 + $0x4] sm:$0x1] %v1154
        %s1156 = sadd.s32 1, %s1089
        %s1157 = smul.addr %s1156, 4
        %s1158 = scalar_lea.vmem %s285, %s1157
        %v1159 = vld [vmem:[%s1158] sm:$0xf]
        %v1161 = vshrl.u32 %v1159, 16
        %v1163 = vrot.slane %v1161, 7
        %v1164 = vshll.u32 %v1159, 16
        %v1166 = vor.u32 %v1163, %v1164
        %v1167 = vrot.slane %v1163, 4
        %v1170 = vld [vmem:[%s392] sm:$0xf]
        %v1171 = vsel %vm528, %v1166, %v1170
        %1172 = vst [vmem:[%s392] sm:$0xf] %v1171
        %v1173 = vld [vmem:[%s392 + $0x4] sm:$0x1]
        %v1174 = vsel %vm533, %v1167, %v1173
        %1175 = vst [vmem:[%s392 + $0x4] sm:$0x1] %v1174
        %v1176 = vld [vmem:[%s392] sm:$0xf]
        %v1177 = vsel %vm612, %v1118, %v1176
        %1178 = vst [vmem:[%s392] sm:$0xf] %v1177
        %v1179 = vld [vmem:[%s392 + $0x4] sm:$0x1]
        %v1180 = vsel %vm617, %v1120, %v1179
        %1181 = vst [vmem:[%s392 + $0x4] sm:$0x1] %v1180
        %v1182 = vld [vmem:[%s1158] sm:$0xf]
        %v1184 = vshrl.u32 %v1182, 16
        %v1186 = vrot.slane %v1184, 7
        %v1187 = vshll.u32 %v1182, 16
        %v1189 = vor.u32 %v1186, %v1187
        %v1190 = vrot.slane %v1186, 4
        %1191 = vrot.lane.b32.xlu0 %v1189, 124
        %v1192 = vpop.permute.xlu0 %1191
        %1193 = vrot.lane.b32.xlu0 %v1190, 124
        %v1194 = vpop.permute.xlu0 %1193
        %v1197 = vld [vmem:[%s434] sm:$0xf]
        %v1198 = vsel %vm528, %v1192, %v1197
        %1199 = vst [vmem:[%s434] sm:$0xf] %v1198
        %v1200 = vld [vmem:[%s434 + $0x4] sm:$0x1]
        %v1201 = vsel %vm533, %v1194, %v1200
        %1202 = vst [vmem:[%s434 + $0x4] sm:$0x1] %v1201
        %v1203 = vld [vmem:[%s434] sm:$0xf]
        %v1204 = vsel %vm612, %v1118, %v1203
        %1205 = vst [vmem:[%s434] sm:$0xf] %v1204
        %v1206 = vld [vmem:[%s434 + $0x4] sm:$0x1]
        %v1207 = vsel %vm617, %v1120, %v1206
        %1208 = vst [vmem:[%s434 + $0x4] sm:$0x1] %v1207
      $region52: #{up_forward.1} parent=43 // pred_fallthru
        _
      %v1209 = vld [vmem:[%s5] sm:$0x1]
      %v1211 = vlaneseq
      %v1212 = vshrl.u32 %v1211, 7
      %v1213 = vsub.s32 0, %v1212
      %v1214 = vrot.slane %v1209, %v1213
      %vm1216 = vcmask 64512
      %1217 = vst.msk [vmem:[#allocation3] sm:$0xff] %vm1216, %v1214
      %1218 = vst.msk [vmem:[#allocation3 + $0x8] sm:$0xff] %vm1216, %v1214
      %1219 = vst.msk [vmem:[#allocation3 + $0x10] sm:$0xff] %vm1216, %v1214
      %1220 = vst.msk [vmem:[#allocation3 + $0x18] sm:$0xff] %vm1216, %v1214
      %s1221 = scalar_lea.vmem [#allocation3], 32
      %1222 = vst.msk [vmem:[%s1221] sm:$0xff] %vm1216, %v1214
      %1223 = vst.msk [vmem:[%s1221 + $0x8] sm:$0xff] %vm1216, %v1214
      %1224 = vst.msk [vmem:[%s1221 + $0x10] sm:$0xff] %vm1216, %v1214
      %1225 = vst.msk [vmem:[%s1221 + $0x18] sm:$0xff] %vm1216, %v1214
      %s1226 = scalar_lea.vmem [#allocation3], 64
      %1227 = vst.msk [vmem:[%s1226] sm:$0xff] %vm1216, %v1214
      %1228 = vst.msk [vmem:[%s1226 + $0x8] sm:$0xff] %vm1216, %v1214
      %1229 = vst.msk [vmem:[%s1226 + $0x10] sm:$0xff] %vm1216, %v1214
      %1230 = vst.msk [vmem:[%s1226 + $0x18] sm:$0xff] %vm1216, %v1214
      %s1231 = scalar_lea.vmem [#allocation3], 96
      %1232 = vst.msk [vmem:[%s1231] sm:$0xff] %vm1216, %v1214
      %1233 = vst.msk [vmem:[%s1231 + $0x8] sm:$0xff] %vm1216, %v1214
      %1234 = vst.msk [vmem:[%s1231 + $0x10] sm:$0xff] %vm1216, %v1214
      %1235 = vst.msk [vmem:[%s1231 + $0x18] sm:$0xff] %vm1216, %v1214
      %v1236 = vld [vmem:[%s431] sm:$0xf]
      %v1237 = vld [vmem:[%s431 + $0x8] sm:$0xf]
      %v1238 = vld [vmem:[%s431 + $0x10] sm:$0xf]
      %v1239 = vld [vmem:[%s431 + $0x18] sm:$0xf]
      %v1240 = vld [vmem:[%s2] sm:$0xf]
      %v1241 = vld [vmem:[%s2 + $0x4] sm:$0xf]
      %v1246 = vunpack.c.l.b16 %v1236
      %v1247 = vunpack.c.l.b16 %v1237
      %v1248 = vunpack.c.l.b16 %v1238
      %v1249 = vunpack.c.l.b16 %v1239
      %v1250 = vpack.c.b16 %v1247, %v1246
      %v1251 = vpack.c.b16 %v1249, %v1248
      %v1254 = vunpack.c.l.b16 %v1240
      %v1255 = vunpack.c.l.b16 %v1241
      %v1256 = vpack.c.b16 %v1255, %v1254
      %vm1258 = vcmask 130048
      %v1260 = vsel %vm1258, %v1250, 0
      %v1263 = vsel %vm1258, %v1251, 0
      %1265 = vmatprep.subr.bf16.mxu0 0
      %1266 = vmatpush1.bf16.msra.mxu0 0
      %1267 = vmatprep.subr.bf16.mxu0 0
      %1268 = vmatpush1.bf16.msra.mxu0 0
      %1269 = vmatprep.subr.bf16.mxu0 0
      %1270 = vmatpush1.bf16.msra.mxu0 0
      %1271 = vmatprep.subr.bf16.mxu0 0
      %1272 = vmatpush1.bf16.msra.mxu0 0
      %1273 = vmatprep.subr.bf16.mxu0 0
      %1274 = vmatpush1.bf16.msra.mxu0 0
      %1275 = vmatprep.subr.bf16.mxu0 0
      %1276 = vmatpush1.bf16.msra.mxu0 0
      %1277 = vmatprep.subr.bf16.mxu0 0
      %1278 = vmatpush1.bf16.msra.mxu0 0
      %1279 = vmatprep.subr.bf16.mxu0 0
      %1280 = vmatpush1.bf16.msra.mxu0 %v1256
      %1281 = vmatprep.subr.bf16.mxu0 0
      %1282 = vmatpush2.bf16.msra.mxu0 0
      %1283 = vmatprep.subr.bf16.mxu0 0
      %1284 = vmatpush2.bf16.msra.mxu0 0
      %1285 = vmatprep.subr.bf16.mxu0 0
      %1286 = vmatpush2.bf16.msra.mxu0 0
      %1287 = vmatprep.subr.bf16.mxu0 0
      %1288 = vmatpush2.bf16.msra.mxu0 0
      %1289 = vmatprep.subr.bf16.mxu0 0
      %1290 = vmatpush2.bf16.msra.mxu0 0
      %1291 = vmatprep.subr.bf16.mxu0 0
      %1292 = vmatpush2.bf16.msra.mxu0 0
      %1293 = vmatprep.subr.bf16.mxu0 0
      %1294 = vmatpush2.bf16.msra.mxu0 0
      %1295 = vmatprep.subr.bf16.mxu0 0
      %1296 = vmatpush2.bf16.msra.mxu0 0
      %1297 = vmatprep.mubr.bf16.mxu0 0
      %1298 = vmatmul.mubr.bf16.gmra.mxu0 %v1260
      %v1299 = vpop.f32.mrf.mxu0
      %v1300 = vadd.f32 0.0, %v1299
      %v1301 = vpop.f32.mrf.mxu0
      %v1302 = vpop.f32.mrf.mxu0
      %v1303 = vadd.f32 0.0, %v1302
      %v1304 = vpop.f32.mrf.mxu0
      %1305 = vmatprep.mubr.bf16.mxu0 0
      %1306 = vmatmul.mubr.bf16.gmra.mxu0 %v1263
      %v1307 = vpop.f32.mrf.mxu0
      %v1308 = vadd.f32 0.0, %v1307
      %v1309 = vpop.f32.mrf.mxu0
      %v1310 = vpop.f32.mrf.mxu0
      %v1311 = vadd.f32 0.0, %v1310
      %v1312 = vpop.f32.mrf.mxu0
      %1313 = vdwg.mxu0
      %v1314 = vld [vmem:[#allocation3] sm:$0xff]
      %v1315 = vld [vmem:[#allocation3 + $0x8] sm:$0xff]
      %v1316 = vld [vmem:[#allocation3 + $0x10] sm:$0xff]
      %v1317 = vld [vmem:[#allocation3 + $0x18] sm:$0xff]
      %v1318 = vadd.f32 %v1314, %v1300
      %v1319 = vadd.f32 %v1315, %v1303
      %v1320 = vadd.f32 %v1316, %v1308
      %v1321 = vadd.f32 %v1317, %v1311
      %1322 = vst.msk [vmem:[#allocation3] sm:$0xff] %vm1216, %v1318
      %1323 = vst.msk [vmem:[#allocation3 + $0x8] sm:$0xff] %vm1216, %v1319
      %1324 = vst.msk [vmem:[#allocation3 + $0x10] sm:$0xff] %vm1216, %v1320
      %1325 = vst.msk [vmem:[#allocation3 + $0x18] sm:$0xff] %vm1216, %v1321
      %v1326 = vld [vmem:[%s389] sm:$0xf]
      %v1327 = vld [vmem:[%s389 + $0x4] sm:$0x1]
      %v1328 = vld [vmem:[%s389 + $0x8] sm:$0xf]
      %v1329 = vld [vmem:[%s389 + $0xc] sm:$0x1]
      %v1330 = vld [vmem:[%s389 + $0x10] sm:$0xf]
      %v1331 = vld [vmem:[%s389 + $0x14] sm:$0x1]
      %v1332 = vld [vmem:[%s389 + $0x18] sm:$0xf]
      %v1333 = vld [vmem:[%s389 + $0x1c] sm:$0x1]
      %vm1334 = vsmask.f32 3328
      %vm1335 = vsmask.f32 7440
      %vm1336 = vmor %vm1334, %vm1335
      %v1338 = vshrl.u32 %v1326, 16
      %v1340 = vrot.slane %v1338, 4
      %v1341 = vshll.u32 %v1326, 16
      %v1343 = vrot.slane %v1341, 5
      %v1344 = vor.u32 %v1340, %v1343
      %v1345 = vrot.slane %v1344, 4
      %v1347 = vshll.u32 %v1327, 16
      %v1349 = vrot.slane %v1347, 5
      %v1350 = vsel %vm1336, %v1345, %v1349
      %v1352 = vshrl.u32 %v1328, 16
      %v1354 = vrot.slane %v1352, 4
      %v1355 = vshll.u32 %v1328, 16
      %v1357 = vrot.slane %v1355, 5
      %v1358 = vor.u32 %v1354, %v1357
      %v1359 = vrot.slane %v1358, 4
      %v1361 = vshll.u32 %v1329, 16
      %v1363 = vrot.slane %v1361, 5
      %v1364 = vsel %vm1336, %v1359, %v1363
      %v1366 = vshrl.u32 %v1330, 16
      %v1368 = vrot.slane %v1366, 4
      %v1369 = vshll.u32 %v1330, 16
      %v1371 = vrot.slane %v1369, 5
      %v1372 = vor.u32 %v1368, %v1371
      %v1373 = vrot.slane %v1372, 4
      %v1375 = vshll.u32 %v1331, 16
      %v1377 = vrot.slane %v1375, 5
      %v1378 = vsel %vm1336, %v1373, %v1377
      %v1380 = vshrl.u32 %v1332, 16
      %v1382 = vrot.slane %v1380, 4
      %v1383 = vshll.u32 %v1332, 16
      %v1385 = vrot.slane %v1383, 5
      %v1386 = vor.u32 %v1382, %v1385
      %v1387 = vrot.slane %v1386, 4
      %v1389 = vshll.u32 %v1333, 16
      %v1391 = vrot.slane %v1389, 5
      %v1392 = vsel %vm1336, %v1387, %v1391
      %v1393 = vld [vmem:[%s3] sm:$0xf]
      %v1394 = vld [vmem:[%s3 + $0x4] sm:$0xf]
      %v1395 = vunpack.c.l.b16 %v1350
      %v1396 = vunpack.c.l.b16 %v1364
      %v1397 = vunpack.c.l.b16 %v1378
      %v1398 = vunpack.c.l.b16 %v1392
      %v1399 = vpack.c.b16 %v1396, %v1395
      %v1400 = vpack.c.b16 %v1398, %v1397
      %v1403 = vunpack.c.l.b16 %v1393
      %v1404 = vunpack.c.l.b16 %v1394
      %v1405 = vpack.c.b16 %v1404, %v1403
      %v1408 = vsel %vm1258, %v1399, 0
      %v1411 = vsel %vm1258, %v1400, 0
      %1413 = vmatprep.subr.bf16.mxu0 0
      %1414 = vmatpush1.bf16.msra.mxu0 0
      %1415 = vmatprep.subr.bf16.mxu0 0
      %1416 = vmatpush1.bf16.msra.mxu0 0
      %1417 = vmatprep.subr.bf16.mxu0 0
      %1418 = vmatpush1.bf16.msra.mxu0 0
      %1419 = vmatprep.subr.bf16.mxu0 0
      %1420 = vmatpush1.bf16.msra.mxu0 0
      %1421 = vmatprep.subr.bf16.mxu0 0
      %1422 = vmatpush1.bf16.msra.mxu0 0
      %1423 = vmatprep.subr.bf16.mxu0 0
      %1424 = vmatpush1.bf16.msra.mxu0 0
      %1425 = vmatprep.subr.bf16.mxu0 0
      %1426 = vmatpush1.bf16.msra.mxu0 0
      %1427 = vmatprep.subr.bf16.mxu0 0
      %1428 = vmatpush1.bf16.msra.mxu0 %v1405
      %1429 = vmatprep.subr.bf16.mxu0 0
      %1430 = vmatpush2.bf16.msra.mxu0 0
      %1431 = vmatprep.subr.bf16.mxu0 0
      %1432 = vmatpush2.bf16.msra.mxu0 0
      %1433 = vmatprep.subr.bf16.mxu0 0
      %1434 = vmatpush2.bf16.msra.mxu0 0
      %1435 = vmatprep.subr.bf16.mxu0 0
      %1436 = vmatpush2.bf16.msra.mxu0 0
      %1437 = vmatprep.subr.bf16.mxu0 0
      %1438 = vmatpush2.bf16.msra.mxu0 0
      %1439 = vmatprep.subr.bf16.mxu0 0
      %1440 = vmatpush2.bf16.msra.mxu0 0
      %1441 = vmatprep.subr.bf16.mxu0 0
      %1442 = vmatpush2.bf16.msra.mxu0 0
      %1443 = vmatprep.subr.bf16.mxu0 0
      %1444 = vmatpush2.bf16.msra.mxu0 0
      %1445 = vmatprep.mubr.bf16.mxu0 0
      %1446 = vmatmul.mubr.bf16.gmra.mxu0 %v1408
      %v1447 = vpop.f32.mrf.mxu0
      %v1448 = vadd.f32 0.0, %v1447
      %v1449 = vpop.f32.mrf.mxu0
      %v1450 = vpop.f32.mrf.mxu0
      %v1451 = vadd.f32 0.0, %v1450
      %v1452 = vpop.f32.mrf.mxu0
      %1453 = vmatprep.mubr.bf16.mxu0 0
      %1454 = vmatmul.mubr.bf16.gmra.mxu0 %v1411
      %v1455 = vpop.f32.mrf.mxu0
      %v1456 = vadd.f32 0.0, %v1455
      %v1457 = vpop.f32.mrf.mxu0
      %v1458 = vpop.f32.mrf.mxu0
      %v1459 = vadd.f32 0.0, %v1458
      %v1460 = vpop.f32.mrf.mxu0
      %1461 = vdwg.mxu0
      %v1462 = vld [vmem:[#allocation3] sm:$0xff]
      %v1463 = vld [vmem:[#allocation3 + $0x8] sm:$0xff]
      %v1464 = vld [vmem:[#allocation3 + $0x10] sm:$0xff]
      %v1465 = vld [vmem:[#allocation3 + $0x18] sm:$0xff]
      %v1466 = vadd.f32 %v1462, %v1448
      %v1467 = vadd.f32 %v1463, %v1451
      %v1468 = vadd.f32 %v1464, %v1456
      %v1469 = vadd.f32 %v1465, %v1459
      %1470 = vst.msk [vmem:[#allocation3] sm:$0xff] %vm1216, %v1466
      %1471 = vst.msk [vmem:[#allocation3 + $0x8] sm:$0xff] %vm1216, %v1467
      %1472 = vst.msk [vmem:[#allocation3 + $0x10] sm:$0xff] %vm1216, %v1468
      %1473 = vst.msk [vmem:[#allocation3 + $0x18] sm:$0xff] %vm1216, %v1469
      %v1474 = vld [vmem:[%s1221] sm:$0xff]
      %v1475 = vld [vmem:[%s1221 + $0x8] sm:$0xff]
      %v1476 = vld [vmem:[%s1221 + $0x10] sm:$0xff]
      %v1477 = vld [vmem:[%s1221 + $0x18] sm:$0xff]
      %1482 = vrot.lane.b32.xlu0 %v1448, 120
      %v1483 = vpop.permute.xlu0 %1482
      %1484 = vrot.lane.b32.xlu0 %v1451, 120
      %v1485 = vpop.permute.xlu0 %1484
      %1486 = vrot.lane.b32.xlu0 %v1456, 120
      %v1487 = vpop.permute.xlu0 %1486
      %1488 = vrot.lane.b32.xlu0 %v1459, 120
      %v1489 = vpop.permute.xlu0 %1488
      %v1494 = vadd.f32 %v1474, %v1483
      %v1495 = vadd.f32 %v1475, %v1485
      %v1496 = vadd.f32 %v1476, %v1487
      %v1497 = vadd.f32 %v1477, %v1489
      %1498 = vst.msk [vmem:[%s1221] sm:$0xff] %vm1216, %v1494
      %1499 = vst.msk [vmem:[%s1221 + $0x8] sm:$0xff] %vm1216, %v1495
      %1500 = vst.msk [vmem:[%s1221 + $0x10] sm:$0xff] %vm1216, %v1496
      %1501 = vst.msk [vmem:[%s1221 + $0x18] sm:$0xff] %vm1216, %v1497
      %v1502 = vld [vmem:[%s431] sm:$0xf]
      %v1503 = vld [vmem:[%s431 + $0x4] sm:$0x1]
      %v1504 = vld [vmem:[%s431 + $0x8] sm:$0xf]
      %v1505 = vld [vmem:[%s431 + $0xc] sm:$0x1]
      %v1506 = vld [vmem:[%s431 + $0x10] sm:$0xf]
      %v1507 = vld [vmem:[%s431 + $0x14] sm:$0x1]
      %v1508 = vld [vmem:[%s431 + $0x18] sm:$0xf]
      %v1509 = vld [vmem:[%s431 + $0x1c] sm:$0x1]
      %v1511 = vshrl.u32 %v1502, 16
      %v1513 = vrot.slane %v1511, 4
      %v1514 = vshll.u32 %v1502, 16
      %v1516 = vrot.slane %v1514, 5
      %v1517 = vor.u32 %v1513, %v1516
      %v1518 = vrot.slane %v1517, 4
      %v1520 = vshll.u32 %v1503, 16
      %v1522 = vrot.slane %v1520, 5
      %v1523 = vsel %vm1336, %v1518, %v1522
      %v1525 = vshrl.u32 %v1504, 16
      %v1527 = vrot.slane %v1525, 4
      %v1528 = vshll.u32 %v1504, 16
      %v1530 = vrot.slane %v1528, 5
      %v1531 = vor.u32 %v1527, %v1530
      %v1532 = vrot.slane %v1531, 4
      %v1534 = vshll.u32 %v1505, 16
      %v1536 = vrot.slane %v1534, 5
      %v1537 = vsel %vm1336, %v1532, %v1536
      %v1539 = vshrl.u32 %v1506, 16
      %v1541 = vrot.slane %v1539, 4
      %v1542 = vshll.u32 %v1506, 16
      %v1544 = vrot.slane %v1542, 5
      %v1545 = vor.u32 %v1541, %v1544
      %v1546 = vrot.slane %v1545, 4
      %v1548 = vshll.u32 %v1507, 16
      %v1550 = vrot.slane %v1548, 5
      %v1551 = vsel %vm1336, %v1546, %v1550
      %v1553 = vshrl.u32 %v1508, 16
      %v1555 = vrot.slane %v1553, 4
      %v1556 = vshll.u32 %v1508, 16
      %v1558 = vrot.slane %v1556, 5
      %v1559 = vor.u32 %v1555, %v1558
      %v1560 = vrot.slane %v1559, 4
      %v1562 = vshll.u32 %v1509, 16
      %v1564 = vrot.slane %v1562, 5
      %v1565 = vsel %vm1336, %v1560, %v1564
      %s1566 = scalar_lea.vmem %s3, 8
      %v1567 = vld [vmem:[%s1566] sm:$0xf]
      %v1568 = vld [vmem:[%s1566 + $0x4] sm:$0xf]
      %v1569 = vunpack.c.l.b16 %v1523
      %v1570 = vunpack.c.l.b16 %v1537
      %v1571 = vunpack.c.l.b16 %v1551
      %v1572 = vunpack.c.l.b16 %v1565
      %v1573 = vpack.c.b16 %v1570, %v1569
      %v1574 = vpack.c.b16 %v1572, %v1571
      %v1577 = vunpack.c.l.b16 %v1567
      %v1578 = vunpack.c.l.b16 %v1568
      %v1579 = vpack.c.b16 %v1578, %v1577
      %v1582 = vsel %vm1258, %v1573, 0
      %v1585 = vsel %vm1258, %v1574, 0
      %1587 = vmatprep.subr.bf16.mxu0 0
      %1588 = vmatpush1.bf16.msra.mxu0 0
      %1589 = vmatprep.subr.bf16.mxu0 0
      %1590 = vmatpush1.bf16.msra.mxu0 0
      %1591 = vmatprep.subr.bf16.mxu0 0
      %1592 = vmatpush1.bf16.msra.mxu0 0
      %1593 = vmatprep.subr.bf16.mxu0 0
      %1594 = vmatpush1.bf16.msra.mxu0 0
      %1595 = vmatprep.subr.bf16.mxu0 0
      %1596 = vmatpush1.bf16.msra.mxu0 0
      %1597 = vmatprep.subr.bf16.mxu0 0
      %1598 = vmatpush1.bf16.msra.mxu0 0
      %1599 = vmatprep.subr.bf16.mxu0 0
      %1600 = vmatpush1.bf16.msra.mxu0 0
      %1601 = vmatprep.subr.bf16.mxu0 0
      %1602 = vmatpush1.bf16.msra.mxu0 %v1579
      %1603 = vmatprep.subr.bf16.mxu0 0
      %1604 = vmatpush2.bf16.msra.mxu0 0
      %1605 = vmatprep.subr.bf16.mxu0 0
      %1606 = vmatpush2.bf16.msra.mxu0 0
      %1607 = vmatprep.subr.bf16.mxu0 0
      %1608 = vmatpush2.bf16.msra.mxu0 0
      %1609 = vmatprep.subr.bf16.mxu0 0
      %1610 = vmatpush2.bf16.msra.mxu0 0
      %1611 = vmatprep.subr.bf16.mxu0 0
      %1612 = vmatpush2.bf16.msra.mxu0 0
      %1613 = vmatprep.subr.bf16.mxu0 0
      %1614 = vmatpush2.bf16.msra.mxu0 0
      %1615 = vmatprep.subr.bf16.mxu0 0
      %1616 = vmatpush2.bf16.msra.mxu0 0
      %1617 = vmatprep.subr.bf16.mxu0 0
      %1618 = vmatpush2.bf16.msra.mxu0 0
      %1619 = vmatprep.mubr.bf16.mxu0 0
      %1620 = vmatmul.mubr.bf16.gmra.mxu0 %v1582
      %v1621 = vpop.f32.mrf.mxu0
      %v1622 = vadd.f32 0.0, %v1621
      %v1623 = vpop.f32.mrf.mxu0
      %v1624 = vpop.f32.mrf.mxu0
      %v1625 = vadd.f32 0.0, %v1624
      %v1626 = vpop.f32.mrf.mxu0
      %1627 = vmatprep.mubr.bf16.mxu0 0
      %1628 = vmatmul.mubr.bf16.gmra.mxu0 %v1585
      %v1629 = vpop.f32.mrf.mxu0
      %v1630 = vadd.f32 0.0, %v1629
      %v1631 = vpop.f32.mrf.mxu0
      %v1632 = vpop.f32.mrf.mxu0
      %v1633 = vadd.f32 0.0, %v1632
      %v1634 = vpop.f32.mrf.mxu0
      %1635 = vdwg.mxu0
      %v1636 = vld [vmem:[#allocation3] sm:$0xff]
      %v1637 = vld [vmem:[#allocation3 + $0x8] sm:$0xff]
      %v1638 = vld [vmem:[#allocation3 + $0x10] sm:$0xff]
      %v1639 = vld [vmem:[#allocation3 + $0x18] sm:$0xff]
      %v1640 = vadd.f32 %v1636, %v1622
      %v1641 = vadd.f32 %v1637, %v1625
      %v1642 = vadd.f32 %v1638, %v1630
      %v1643 = vadd.f32 %v1639, %v1633
      %1644 = vst.msk [vmem:[#allocation3] sm:$0xff] %vm1216, %v1640
      %1645 = vst.msk [vmem:[#allocation3 + $0x8] sm:$0xff] %vm1216, %v1641
      %1646 = vst.msk [vmem:[#allocation3 + $0x10] sm:$0xff] %vm1216, %v1642
      %1647 = vst.msk [vmem:[#allocation3 + $0x18] sm:$0xff] %vm1216, %v1643
      %v1648 = vld [vmem:[%s1221] sm:$0xff]
      %v1649 = vld [vmem:[%s1221 + $0x8] sm:$0xff]
      %v1650 = vld [vmem:[%s1221 + $0x10] sm:$0xff]
      %v1651 = vld [vmem:[%s1221 + $0x18] sm:$0xff]
      %1656 = vrot.lane.b32.xlu0 %v1622, 120
      %v1657 = vpop.permute.xlu0 %1656
      %1658 = vrot.lane.b32.xlu0 %v1625, 120
      %v1659 = vpop.permute.xlu0 %1658
      %1660 = vrot.lane.b32.xlu0 %v1630, 120
      %v1661 = vpop.permute.xlu0 %1660
      %1662 = vrot.lane.b32.xlu0 %v1633, 120
      %v1663 = vpop.permute.xlu0 %1662
      %v1668 = vadd.f32 %v1648, %v1657
      %v1669 = vadd.f32 %v1649, %v1659
      %v1670 = vadd.f32 %v1650, %v1661
      %v1671 = vadd.f32 %v1651, %v1663
      %1672 = vst.msk [vmem:[%s1221] sm:$0xff] %vm1216, %v1668
      %1673 = vst.msk [vmem:[%s1221 + $0x8] sm:$0xff] %vm1216, %v1669
      %1674 = vst.msk [vmem:[%s1221 + $0x10] sm:$0xff] %vm1216, %v1670
      %1675 = vst.msk [vmem:[%s1221 + $0x18] sm:$0xff] %vm1216, %v1671
      %v1676 = vld [vmem:[%s389] sm:$0xe]
      %v1677 = vld [vmem:[%s389 + $0x4] sm:$0x1]
      %v1678 = vld [vmem:[%s389 + $0x8] sm:$0xe]
      %v1679 = vld [vmem:[%s389 + $0xc] sm:$0x1]
      %v1680 = vld [vmem:[%s389 + $0x10] sm:$0xe]
      %v1681 = vld [vmem:[%s389 + $0x14] sm:$0x1]
      %v1682 = vld [vmem:[%s389 + $0x18] sm:$0xe]
      %v1683 = vld [vmem:[%s389 + $0x1c] sm:$0x1]
      %vm1692 = vcmask 1042432
      %vm1693 = vcmask 1046532
      %vm1694 = vmor %vm1692, %vm1693
      %v1695 = vrot.slane %v1676, 5
      %v1696 = vrot.slane %v1695, 4
      %v1697 = vrot.slane %v1677, 5
      %v1698 = vsel %vm1694, %v1696, %v1697
      %v1699 = vrot.slane %v1678, 5
      %v1700 = vrot.slane %v1699, 4
      %v1701 = vrot.slane %v1679, 5
      %v1702 = vsel %vm1694, %v1700, %v1701
      %v1703 = vrot.slane %v1680, 5
      %v1704 = vrot.slane %v1703, 4
      %v1705 = vrot.slane %v1681, 5
      %v1706 = vsel %vm1694, %v1704, %v1705
      %v1707 = vrot.slane %v1682, 5
      %v1708 = vrot.slane %v1707, 4
      %v1709 = vrot.slane %v1683, 5
      %v1710 = vsel %vm1694, %v1708, %v1709
      %s1711 = scalar_lea.vmem %s2, 8
      %v1712 = vld [vmem:[%s1711] sm:$0xf]
      %v1713 = vld [vmem:[%s1711 + $0x4] sm:$0xf]
      %v1714 = vunpack.c.l.b16 %v1698
      %v1715 = vunpack.c.l.b16 %v1702
      %v1716 = vunpack.c.l.b16 %v1706
      %v1717 = vunpack.c.l.b16 %v1710
      %v1718 = vpack.c.b16 %v1715, %v1714
      %v1719 = vpack.c.b16 %v1717, %v1716
      %v1722 = vunpack.c.l.b16 %v1712
      %v1723 = vunpack.c.l.b16 %v1713
      %v1724 = vpack.c.b16 %v1723, %v1722
      %v1727 = vsel %vm1258, %v1718, 0
      %v1730 = vsel %vm1258, %v1719, 0
      %1732 = vmatprep.subr.bf16.mxu0 0
      %1733 = vmatpush1.bf16.msra.mxu0 0
      %1734 = vmatprep.subr.bf16.mxu0 0
      %1735 = vmatpush1.bf16.msra.mxu0 0
      %1736 = vmatprep.subr.bf16.mxu0 0
      %1737 = vmatpush1.bf16.msra.mxu0 0
      %1738 = vmatprep.subr.bf16.mxu0 0
      %1739 = vmatpush1.bf16.msra.mxu0 0
      %1740 = vmatprep.subr.bf16.mxu0 0
      %1741 = vmatpush1.bf16.msra.mxu0 0
      %1742 = vmatprep.subr.bf16.mxu0 0
      %1743 = vmatpush1.bf16.msra.mxu0 0
      %1744 = vmatprep.subr.bf16.mxu0 0
      %1745 = vmatpush1.bf16.msra.mxu0 0
      %1746 = vmatprep.subr.bf16.mxu0 0
      %1747 = vmatpush1.bf16.msra.mxu0 %v1724
      %1748 = vmatprep.subr.bf16.mxu0 0
      %1749 = vmatpush2.bf16.msra.mxu0 0
      %1750 = vmatprep.subr.bf16.mxu0 0
      %1751 = vmatpush2.bf16.msra.mxu0 0
      %1752 = vmatprep.subr.bf16.mxu0 0
      %1753 = vmatpush2.bf16.msra.mxu0 0
      %1754 = vmatprep.subr.bf16.mxu0 0
      %1755 = vmatpush2.bf16.msra.mxu0 0
      %1756 = vmatprep.subr.bf16.mxu0 0
      %1757 = vmatpush2.bf16.msra.mxu0 0
      %1758 = vmatprep.subr.bf16.mxu0 0
      %1759 = vmatpush2.bf16.msra.mxu0 0
      %1760 = vmatprep.subr.bf16.mxu0 0
      %1761 = vmatpush2.bf16.msra.mxu0 0
      %1762 = vmatprep.subr.bf16.mxu0 0
      %1763 = vmatpush2.bf16.msra.mxu0 0
      %1764 = vmatprep.mubr.bf16.mxu0 0
      %1765 = vmatmul.mubr.bf16.gmra.mxu0 %v1727
      %v1766 = vpop.f32.mrf.mxu0
      %v1767 = vadd.f32 0.0, %v1766
      %v1768 = vpop.f32.mrf.mxu0
      %v1769 = vpop.f32.mrf.mxu0
      %v1770 = vadd.f32 0.0, %v1769
      %v1771 = vpop.f32.mrf.mxu0
      %1772 = vmatprep.mubr.bf16.mxu0 0
      %1773 = vmatmul.mubr.bf16.gmra.mxu0 %v1730
      %v1774 = vpop.f32.mrf.mxu0
      %v1775 = vadd.f32 0.0, %v1774
      %v1776 = vpop.f32.mrf.mxu0
      %v1777 = vpop.f32.mrf.mxu0
      %v1778 = vadd.f32 0.0, %v1777
      %v1779 = vpop.f32.mrf.mxu0
      %1780 = vdwg.mxu0
      %v1781 = vld [vmem:[%s1221] sm:$0xff]
      %v1782 = vld [vmem:[%s1221 + $0x8] sm:$0xff]
      %v1783 = vld [vmem:[%s1221 + $0x10] sm:$0xff]
      %v1784 = vld [vmem:[%s1221 + $0x18] sm:$0xff]
      %v1785 = vadd.f32 %v1781, %v1767
      %v1786 = vadd.f32 %v1782, %v1770
      %v1787 = vadd.f32 %v1783, %v1775
      %v1788 = vadd.f32 %v1784, %v1778
      %1789 = vst.msk [vmem:[%s1221] sm:$0xff] %vm1216, %v1785
      %1790 = vst.msk [vmem:[%s1221 + $0x8] sm:$0xff] %vm1216, %v1786
      %1791 = vst.msk [vmem:[%s1221 + $0x10] sm:$0xff] %vm1216, %v1787
      %1792 = vst.msk [vmem:[%s1221 + $0x18] sm:$0xff] %vm1216, %v1788
      %v1793 = vld [vmem:[%s699] sm:$0xf]
      %v1794 = vld [vmem:[%s699 + $0x8] sm:$0xf]
      %v1795 = vld [vmem:[%s699 + $0x10] sm:$0xf]
      %v1796 = vld [vmem:[%s699 + $0x18] sm:$0xf]
      %s1797 = scalar_lea.vmem %s3, 16
      %v1798 = vld [vmem:[%s1797] sm:$0xf]
      %v1799 = vld [vmem:[%s1797 + $0x4] sm:$0xf]
      %v1804 = vunpack.c.l.b16 %v1793
      %v1805 = vunpack.c.l.b16 %v1794
      %v1806 = vunpack.c.l.b16 %v1795
      %v1807 = vunpack.c.l.b16 %v1796
      %v1808 = vpack.c.b16 %v1805, %v1804
      %v1809 = vpack.c.b16 %v1807, %v1806
      %v1812 = vunpack.c.l.b16 %v1798
      %v1813 = vunpack.c.l.b16 %v1799
      %v1814 = vpack.c.b16 %v1813, %v1812
      %v1817 = vsel %vm1258, %v1808, 0
      %v1820 = vsel %vm1258, %v1809, 0
      %1822 = vmatprep.subr.bf16.mxu0 0
      %1823 = vmatpush1.bf16.msra.mxu0 0
      %1824 = vmatprep.subr.bf16.mxu0 0
      %1825 = vmatpush1.bf16.msra.mxu0 0
      %1826 = vmatprep.subr.bf16.mxu0 0
      %1827 = vmatpush1.bf16.msra.mxu0 0
      %1828 = vmatprep.subr.bf16.mxu0 0
      %1829 = vmatpush1.bf16.msra.mxu0 0
      %1830 = vmatprep.subr.bf16.mxu0 0
      %1831 = vmatpush1.bf16.msra.mxu0 0
      %1832 = vmatprep.subr.bf16.mxu0 0
      %1833 = vmatpush1.bf16.msra.mxu0 0
      %1834 = vmatprep.subr.bf16.mxu0 0
      %1835 = vmatpush1.bf16.msra.mxu0 0
      %1836 = vmatprep.subr.bf16.mxu0 0
      %1837 = vmatpush1.bf16.msra.mxu0 %v1814
      %1838 = vmatprep.subr.bf16.mxu0 0
      %1839 = vmatpush2.bf16.msra.mxu0 0
      %1840 = vmatprep.subr.bf16.mxu0 0
      %1841 = vmatpush2.bf16.msra.mxu0 0
      %1842 = vmatprep.subr.bf16.mxu0 0
      %1843 = vmatpush2.bf16.msra.mxu0 0
      %1844 = vmatprep.subr.bf16.mxu0 0
      %1845 = vmatpush2.bf16.msra.mxu0 0
      %1846 = vmatprep.subr.bf16.mxu0 0
      %1847 = vmatpush2.bf16.msra.mxu0 0
      %1848 = vmatprep.subr.bf16.mxu0 0
      %1849 = vmatpush2.bf16.msra.mxu0 0
      %1850 = vmatprep.subr.bf16.mxu0 0
      %1851 = vmatpush2.bf16.msra.mxu0 0
      %1852 = vmatprep.subr.bf16.mxu0 0
      %1853 = vmatpush2.bf16.msra.mxu0 0
      %1854 = vmatprep.mubr.bf16.mxu0 0
      %1855 = vmatmul.mubr.bf16.gmra.mxu0 %v1817
      %v1856 = vpop.f32.mrf.mxu0
      %v1857 = vadd.f32 0.0, %v1856
      %v1858 = vpop.f32.mrf.mxu0
      %v1859 = vpop.f32.mrf.mxu0
      %v1860 = vadd.f32 0.0, %v1859
      %v1861 = vpop.f32.mrf.mxu0
      %1862 = vmatprep.mubr.bf16.mxu0 0
      %1863 = vmatmul.mubr.bf16.gmra.mxu0 %v1820
      %v1864 = vpop.f32.mrf.mxu0
      %v1865 = vadd.f32 0.0, %v1864
      %v1866 = vpop.f32.mrf.mxu0
      %v1867 = vpop.f32.mrf.mxu0
      %v1868 = vadd.f32 0.0, %v1867
      %v1869 = vpop.f32.mrf.mxu0
      %1870 = vdwg.mxu0
      %v1871 = vld [vmem:[#allocation3] sm:$0xff]
      %v1872 = vld [vmem:[#allocation3 + $0x8] sm:$0xff]
      %v1873 = vld [vmem:[#allocation3 + $0x10] sm:$0xff]
      %v1874 = vld [vmem:[#allocation3 + $0x18] sm:$0xff]
      %v1875 = vadd.f32 %v1871, %v1857
      %v1876 = vadd.f32 %v1872, %v1860
      %v1877 = vadd.f32 %v1873, %v1865
      %v1878 = vadd.f32 %v1874, %v1868
      %1879 = vst.msk [vmem:[#allocation3] sm:$0xff] %vm1216, %v1875
      %1880 = vst.msk [vmem:[#allocation3 + $0x8] sm:$0xff] %vm1216, %v1876
      %1881 = vst.msk [vmem:[#allocation3 + $0x10] sm:$0xff] %vm1216, %v1877
      %1882 = vst.msk [vmem:[#allocation3 + $0x18] sm:$0xff] %vm1216, %v1878
      %v1883 = vld [vmem:[%s1226] sm:$0xff]
      %v1884 = vld [vmem:[%s1226 + $0x8] sm:$0xff]
      %v1885 = vld [vmem:[%s1226 + $0x10] sm:$0xff]
      %v1886 = vld [vmem:[%s1226 + $0x18] sm:$0xff]
      %1891 = vrot.lane.b32.xlu0 %v1857, 120
      %v1892 = vpop.permute.xlu0 %1891
      %1893 = vrot.lane.b32.xlu0 %v1860, 120
      %v1894 = vpop.permute.xlu0 %1893
      %1895 = vrot.lane.b32.xlu0 %v1865, 120
      %v1896 = vpop.permute.xlu0 %1895
      %1897 = vrot.lane.b32.xlu0 %v1868, 120
      %v1898 = vpop.permute.xlu0 %1897
      %v1903 = vadd.f32 %v1883, %v1892
      %v1904 = vadd.f32 %v1884, %v1894
      %v1905 = vadd.f32 %v1885, %v1896
      %v1906 = vadd.f32 %v1886, %v1898
      %1907 = vst.msk [vmem:[%s1226] sm:$0xff] %vm1216, %v1903
      %1908 = vst.msk [vmem:[%s1226 + $0x8] sm:$0xff] %vm1216, %v1904
      %1909 = vst.msk [vmem:[%s1226 + $0x10] sm:$0xff] %vm1216, %v1905
      %1910 = vst.msk [vmem:[%s1226 + $0x18] sm:$0xff] %vm1216, %v1906
      %v1911 = vld [vmem:[%s526] sm:$0xf]
      %v1912 = vld [vmem:[%s526 + $0x4] sm:$0x1]
      %v1913 = vld [vmem:[%s526 + $0x8] sm:$0xf]
      %v1914 = vld [vmem:[%s526 + $0xc] sm:$0x1]
      %v1915 = vld [vmem:[%s526 + $0x10] sm:$0xf]
      %v1916 = vld [vmem:[%s526 + $0x14] sm:$0x1]
      %v1917 = vld [vmem:[%s526 + $0x18] sm:$0xf]
      %v1918 = vld [vmem:[%s526 + $0x1c] sm:$0x1]
      %v1920 = vshrl.u32 %v1911, 16
      %v1922 = vrot.slane %v1920, 4
      %v1923 = vshll.u32 %v1911, 16
      %v1925 = vrot.slane %v1923, 5
      %v1926 = vor.u32 %v1922, %v1925
      %v1927 = vrot.slane %v1926, 4
      %v1929 = vshll.u32 %v1912, 16
      %v1931 = vrot.slane %v1929, 5
      %v1932 = vsel %vm1336, %v1927, %v1931
      %v1934 = vshrl.u32 %v1913, 16
      %v1936 = vrot.slane %v1934, 4
      %v1937 = vshll.u32 %v1913, 16
      %v1939 = vrot.slane %v1937, 5
      %v1940 = vor.u32 %v1936, %v1939
      %v1941 = vrot.slane %v1940, 4
      %v1943 = vshll.u32 %v1914, 16
      %v1945 = vrot.slane %v1943, 5
      %v1946 = vsel %vm1336, %v1941, %v1945
      %v1948 = vshrl.u32 %v1915, 16
      %v1950 = vrot.slane %v1948, 4
      %v1951 = vshll.u32 %v1915, 16
      %v1953 = vrot.slane %v1951, 5
      %v1954 = vor.u32 %v1950, %v1953
      %v1955 = vrot.slane %v1954, 4
      %v1957 = vshll.u32 %v1916, 16
      %v1959 = vrot.slane %v1957, 5
      %v1960 = vsel %vm1336, %v1955, %v1959
      %v1962 = vshrl.u32 %v1917, 16
      %v1964 = vrot.slane %v1962, 4
      %v1965 = vshll.u32 %v1917, 16
      %v1967 = vrot.slane %v1965, 5
      %v1968 = vor.u32 %v1964, %v1967
      %v1969 = vrot.slane %v1968, 4
      %v1971 = vshll.u32 %v1918, 16
      %v1973 = vrot.slane %v1971, 5
      %v1974 = vsel %vm1336, %v1969, %v1973
      %v1975 = vld [vmem:[%s4] sm:$0xf]
      %v1976 = vld [vmem:[%s4 + $0x4] sm:$0xf]
      %v1977 = vunpack.c.l.b16 %v1932
      %v1978 = vunpack.c.l.b16 %v1946
      %v1979 = vunpack.c.l.b16 %v1960
      %v1980 = vunpack.c.l.b16 %v1974
      %v1981 = vpack.c.b16 %v1978, %v1977
      %v1982 = vpack.c.b16 %v1980, %v1979
      %v1985 = vunpack.c.l.b16 %v1975
      %v1986 = vunpack.c.l.b16 %v1976
      %v1987 = vpack.c.b16 %v1986, %v1985
      %v1990 = vsel %vm1258, %v1981, 0
      %v1993 = vsel %vm1258, %v1982, 0
      %1995 = vmatprep.subr.bf16.mxu0 0
      %1996 = vmatpush1.bf16.msra.mxu0 0
      %1997 = vmatprep.subr.bf16.mxu0 0
      %1998 = vmatpush1.bf16.msra.mxu0 0
      %1999 = vmatprep.subr.bf16.mxu0 0
      %2000 = vmatpush1.bf16.msra.mxu0 0
      %2001 = vmatprep.subr.bf16.mxu0 0
      %2002 = vmatpush1.bf16.msra.mxu0 0
      %2003 = vmatprep.subr.bf16.mxu0 0
      %2004 = vmatpush1.bf16.msra.mxu0 0
      %2005 = vmatprep.subr.bf16.mxu0 0
      %2006 = vmatpush1.bf16.msra.mxu0 0
      %2007 = vmatprep.subr.bf16.mxu0 0
      %2008 = vmatpush1.bf16.msra.mxu0 0
      %2009 = vmatprep.subr.bf16.mxu0 0
      %2010 = vmatpush1.bf16.msra.mxu0 %v1987
      %2011 = vmatprep.subr.bf16.mxu0 0
      %2012 = vmatpush2.bf16.msra.mxu0 0
      %2013 = vmatprep.subr.bf16.mxu0 0
      %2014 = vmatpush2.bf16.msra.mxu0 0
      %2015 = vmatprep.subr.bf16.mxu0 0
      %2016 = vmatpush2.bf16.msra.mxu0 0
      %2017 = vmatprep.subr.bf16.mxu0 0
      %2018 = vmatpush2.bf16.msra.mxu0 0
      %2019 = vmatprep.subr.bf16.mxu0 0
      %2020 = vmatpush2.bf16.msra.mxu0 0
      %2021 = vmatprep.subr.bf16.mxu0 0
      %2022 = vmatpush2.bf16.msra.mxu0 0
      %2023 = vmatprep.subr.bf16.mxu0 0
      %2024 = vmatpush2.bf16.msra.mxu0 0
      %2025 = vmatprep.subr.bf16.mxu0 0
      %2026 = vmatpush2.bf16.msra.mxu0 0
      %2027 = vmatprep.mubr.bf16.mxu0 0
      %2028 = vmatmul.mubr.bf16.gmra.mxu0 %v1990
      %v2029 = vpop.f32.mrf.mxu0
      %v2030 = vadd.f32 0.0, %v2029
      %v2031 = vpop.f32.mrf.mxu0
      %v2032 = vpop.f32.mrf.mxu0
      %v2033 = vadd.f32 0.0, %v2032
      %v2034 = vpop.f32.mrf.mxu0
      %2035 = vmatprep.mubr.bf16.mxu0 0
      %2036 = vmatmul.mubr.bf16.gmra.mxu0 %v1993
      %v2037 = vpop.f32.mrf.mxu0
      %v2038 = vadd.f32 0.0, %v2037
      %v2039 = vpop.f32.mrf.mxu0
      %v2040 = vpop.f32.mrf.mxu0
      %v2041 = vadd.f32 0.0, %v2040
      %v2042 = vpop.f32.mrf.mxu0
      %2043 = vdwg.mxu0
      %v2044 = vld [vmem:[#allocation3] sm:$0xff]
      %v2045 = vld [vmem:[#allocation3 + $0x8] sm:$0xff]
      %v2046 = vld [vmem:[#allocation3 + $0x10] sm:$0xff]
      %v2047 = vld [vmem:[#allocation3 + $0x18] sm:$0xff]
      %v2048 = vadd.f32 %v2044, %v2030
      %v2049 = vadd.f32 %v2045, %v2033
      %v2050 = vadd.f32 %v2046, %v2038
      %v2051 = vadd.f32 %v2047, %v2041
      %2052 = vst.msk [vmem:[#allocation3] sm:$0xff] %vm1216, %v2048
      %2053 = vst.msk [vmem:[#allocation3 + $0x8] sm:$0xff] %vm1216, %v2049
      %2054 = vst.msk [vmem:[#allocation3 + $0x10] sm:$0xff] %vm1216, %v2050
      %2055 = vst.msk [vmem:[#allocation3 + $0x18] sm:$0xff] %vm1216, %v2051
      %v2056 = vld [vmem:[%s1221] sm:$0xff]
      %v2057 = vld [vmem:[%s1221 + $0x8] sm:$0xff]
      %v2058 = vld [vmem:[%s1221 + $0x10] sm:$0xff]
      %v2059 = vld [vmem:[%s1221 + $0x18] sm:$0xff]
      %2064 = vrot.lane.b32.xlu0 %v2030, 120
      %v2065 = vpop.permute.xlu0 %2064
      %2066 = vrot.lane.b32.xlu0 %v2033, 120
      %v2067 = vpop.permute.xlu0 %2066
      %2068 = vrot.lane.b32.xlu0 %v2038, 120
      %v2069 = vpop.permute.xlu0 %2068
      %2070 = vrot.lane.b32.xlu0 %v2041, 120
      %v2071 = vpop.permute.xlu0 %2070
      %v2076 = vadd.f32 %v2056, %v2065
      %v2077 = vadd.f32 %v2057, %v2067
      %v2078 = vadd.f32 %v2058, %v2069
      %v2079 = vadd.f32 %v2059, %v2071
      %2080 = vst.msk [vmem:[%s1221] sm:$0xff] %vm1216, %v2076
      %2081 = vst.msk [vmem:[%s1221 + $0x8] sm:$0xff] %vm1216, %v2077
      %2082 = vst.msk [vmem:[%s1221 + $0x10] sm:$0xff] %vm1216, %v2078
      %2083 = vst.msk [vmem:[%s1221 + $0x18] sm:$0xff] %vm1216, %v2079
      %v2084 = vld [vmem:[%s1226] sm:$0xff]
      %v2085 = vld [vmem:[%s1226 + $0x8] sm:$0xff]
      %v2086 = vld [vmem:[%s1226 + $0x10] sm:$0xff]
      %v2087 = vld [vmem:[%s1226 + $0x18] sm:$0xff]
      %2088 = vrot.lane.b32.xlu0 %v2030, 112
      %v2089 = vpop.permute.xlu0 %2088
      %2090 = vrot.lane.b32.xlu0 %v2033, 112
      %v2091 = vpop.permute.xlu0 %2090
      %2092 = vrot.lane.b32.xlu0 %v2038, 112
      %v2093 = vpop.permute.xlu0 %2092
      %2094 = vrot.lane.b32.xlu0 %v2041, 112
      %v2095 = vpop.permute.xlu0 %2094
      %v2100 = vadd.f32 %v2084, %v2089
      %v2101 = vadd.f32 %v2085, %v2091
      %v2102 = vadd.f32 %v2086, %v2093
      %v2103 = vadd.f32 %v2087, %v2095
      %2104 = vst.msk [vmem:[%s1226] sm:$0xff] %vm1216, %v2100
      %2105 = vst.msk [vmem:[%s1226 + $0x8] sm:$0xff] %vm1216, %v2101
      %2106 = vst.msk [vmem:[%s1226 + $0x10] sm:$0xff] %vm1216, %v2102
      %2107 = vst.msk [vmem:[%s1226 + $0x18] sm:$0xff] %vm1216, %v2103
      %v2108 = vld [vmem:[%s1231] sm:$0xff]
      %v2109 = vld [vmem:[%s1231 + $0x8] sm:$0xff]
      %v2110 = vld [vmem:[%s1231 + $0x10] sm:$0xff]
      %v2111 = vld [vmem:[%s1231 + $0x18] sm:$0xff]
      %2112 = vrot.lane.b32.xlu0 %v2030, 104
      %v2113 = vpop.permute.xlu0 %2112
      %2114 = vrot.lane.b32.xlu0 %v2033, 104
      %v2115 = vpop.permute.xlu0 %2114
      %2116 = vrot.lane.b32.xlu0 %v2038, 104
      %v2117 = vpop.permute.xlu0 %2116
      %2118 = vrot.lane.b32.xlu0 %v2041, 104
      %v2119 = vpop.permute.xlu0 %2118
      %v2124 = vadd.f32 %v2108, %v2113
      %v2125 = vadd.f32 %v2109, %v2115
      %v2126 = vadd.f32 %v2110, %v2117
      %v2127 = vadd.f32 %v2111, %v2119
      %2128 = vst.msk [vmem:[%s1231] sm:$0xff] %vm1216, %v2124
      %2129 = vst.msk [vmem:[%s1231 + $0x8] sm:$0xff] %vm1216, %v2125
      %2130 = vst.msk [vmem:[%s1231 + $0x10] sm:$0xff] %vm1216, %v2126
      %2131 = vst.msk [vmem:[%s1231 + $0x18] sm:$0xff] %vm1216, %v2127
      %v2132 = vld [vmem:[%s699] sm:$0xf]
      %v2133 = vld [vmem:[%s699 + $0x4] sm:$0x1]
      %v2134 = vld [vmem:[%s699 + $0x8] sm:$0xf]
      %v2135 = vld [vmem:[%s699 + $0xc] sm:$0x1]
      %v2136 = vld [vmem:[%s699 + $0x10] sm:$0xf]
      %v2137 = vld [vmem:[%s699 + $0x14] sm:$0x1]
      %v2138 = vld [vmem:[%s699 + $0x18] sm:$0xf]
      %v2139 = vld [vmem:[%s699 + $0x1c] sm:$0x1]
      %v2141 = vshrl.u32 %v2132, 16
      %v2143 = vrot.slane %v2141, 4
      %v2144 = vshll.u32 %v2132, 16
      %v2146 = vrot.slane %v2144, 5
      %v2147 = vor.u32 %v2143, %v2146
      %v2148 = vrot.slane %v2147, 4
      %v2150 = vshll.u32 %v2133, 16
      %v2152 = vrot.slane %v2150, 5
      %v2153 = vsel %vm1336, %v2148, %v2152
      %v2155 = vshrl.u32 %v2134, 16
      %v2157 = vrot.slane %v2155, 4
      %v2158 = vshll.u32 %v2134, 16
      %v2160 = vrot.slane %v2158, 5
      %v2161 = vor.u32 %v2157, %v2160
      %v2162 = vrot.slane %v2161, 4
      %v2164 = vshll.u32 %v2135, 16
      %v2166 = vrot.slane %v2164, 5
      %v2167 = vsel %vm1336, %v2162, %v2166
      %v2169 = vshrl.u32 %v2136, 16
      %v2171 = vrot.slane %v2169, 4
      %v2172 = vshll.u32 %v2136, 16
      %v2174 = vrot.slane %v2172, 5
      %v2175 = vor.u32 %v2171, %v2174
      %v2176 = vrot.slane %v2175, 4
      %v2178 = vshll.u32 %v2137, 16
      %v2180 = vrot.slane %v2178, 5
      %v2181 = vsel %vm1336, %v2176, %v2180
      %v2183 = vshrl.u32 %v2138, 16
      %v2185 = vrot.slane %v2183, 4
      %v2186 = vshll.u32 %v2138, 16
      %v2188 = vrot.slane %v2186, 5
      %v2189 = vor.u32 %v2185, %v2188
      %v2190 = vrot.slane %v2189, 4
      %v2192 = vshll.u32 %v2139, 16
      %v2194 = vrot.slane %v2192, 5
      %v2195 = vsel %vm1336, %v2190, %v2194
      %s2196 = scalar_lea.vmem %s4, 8
      %v2197 = vld [vmem:[%s2196] sm:$0xf]
      %v2198 = vld [vmem:[%s2196 + $0x4] sm:$0xf]
      %v2199 = vunpack.c.l.b16 %v2153
      %v2200 = vunpack.c.l.b16 %v2167
      %v2201 = vunpack.c.l.b16 %v2181
      %v2202 = vunpack.c.l.b16 %v2195
      %v2203 = vpack.c.b16 %v2200, %v2199
      %v2204 = vpack.c.b16 %v2202, %v2201
      %v2207 = vunpack.c.l.b16 %v2197
      %v2208 = vunpack.c.l.b16 %v2198
      %v2209 = vpack.c.b16 %v2208, %v2207
      %v2212 = vsel %vm1258, %v2203, 0
      %v2215 = vsel %vm1258, %v2204, 0
      %2217 = vmatprep.subr.bf16.mxu0 0
      %2218 = vmatpush1.bf16.msra.mxu0 0
      %2219 = vmatprep.subr.bf16.mxu0 0
      %2220 = vmatpush1.bf16.msra.mxu0 0
      %2221 = vmatprep.subr.bf16.mxu0 0
      %2222 = vmatpush1.bf16.msra.mxu0 0
      %2223 = vmatprep.subr.bf16.mxu0 0
      %2224 = vmatpush1.bf16.msra.mxu0 0
      %2225 = vmatprep.subr.bf16.mxu0 0
      %2226 = vmatpush1.bf16.msra.mxu0 0
      %2227 = vmatprep.subr.bf16.mxu0 0
      %2228 = vmatpush1.bf16.msra.mxu0 0
      %2229 = vmatprep.subr.bf16.mxu0 0
      %2230 = vmatpush1.bf16.msra.mxu0 0
      %2231 = vmatprep.subr.bf16.mxu0 0
      %2232 = vmatpush1.bf16.msra.mxu0 %v2209
      %2233 = vmatprep.subr.bf16.mxu0 0
      %2234 = vmatpush2.bf16.msra.mxu0 0
      %2235 = vmatprep.subr.bf16.mxu0 0
      %2236 = vmatpush2.bf16.msra.mxu0 0
      %2237 = vmatprep.subr.bf16.mxu0 0
      %2238 = vmatpush2.bf16.msra.mxu0 0
      %2239 = vmatprep.subr.bf16.mxu0 0
      %2240 = vmatpush2.bf16.msra.mxu0 0
      %2241 = vmatprep.subr.bf16.mxu0 0
      %2242 = vmatpush2.bf16.msra.mxu0 0
      %2243 = vmatprep.subr.bf16.mxu0 0
      %2244 = vmatpush2.bf16.msra.mxu0 0
      %2245 = vmatprep.subr.bf16.mxu0 0
      %2246 = vmatpush2.bf16.msra.mxu0 0
      %2247 = vmatprep.subr.bf16.mxu0 0
      %2248 = vmatpush2.bf16.msra.mxu0 0
      %2249 = vmatprep.mubr.bf16.mxu0 0
      %2250 = vmatmul.mubr.bf16.gmra.mxu0 %v2212
      %v2251 = vpop.f32.mrf.mxu0
      %v2252 = vadd.f32 0.0, %v2251
      %v2253 = vpop.f32.mrf.mxu0
      %v2254 = vpop.f32.mrf.mxu0
      %v2255 = vadd.f32 0.0, %v2254
      %v2256 = vpop.f32.mrf.mxu0
      %2257 = vmatprep.mubr.bf16.mxu0 0
      %2258 = vmatmul.mubr.bf16.gmra.mxu0 %v2215
      %v2259 = vpop.f32.mrf.mxu0
      %v2260 = vadd.f32 0.0, %v2259
      %v2261 = vpop.f32.mrf.mxu0
      %v2262 = vpop.f32.mrf.mxu0
      %v2263 = vadd.f32 0.0, %v2262
      %v2264 = vpop.f32.mrf.mxu0
      %2265 = vdwg.mxu0
      %v2266 = vld [vmem:[#allocation3] sm:$0xff]
      %v2267 = vld [vmem:[#allocation3 + $0x8] sm:$0xff]
      %v2268 = vld [vmem:[#allocation3 + $0x10] sm:$0xff]
      %v2269 = vld [vmem:[#allocation3 + $0x18] sm:$0xff]
      %v2270 = vadd.f32 %v2266, %v2252
      %v2271 = vadd.f32 %v2267, %v2255
      %v2272 = vadd.f32 %v2268, %v2260
      %v2273 = vadd.f32 %v2269, %v2263
      %2274 = vst.msk [vmem:[#allocation3] sm:$0xff] %vm1216, %v2270
      %2275 = vst.msk [vmem:[#allocation3 + $0x8] sm:$0xff] %vm1216, %v2271
      %2276 = vst.msk [vmem:[#allocation3 + $0x10] sm:$0xff] %vm1216, %v2272
      %2277 = vst.msk [vmem:[#allocation3 + $0x18] sm:$0xff] %vm1216, %v2273
      %v2278 = vld [vmem:[%s1221] sm:$0xff]
      %v2279 = vld [vmem:[%s1221 + $0x8] sm:$0xff]
      %v2280 = vld [vmem:[%s1221 + $0x10] sm:$0xff]
      %v2281 = vld [vmem:[%s1221 + $0x18] sm:$0xff]
      %2286 = vrot.lane.b32.xlu0 %v2252, 120
      %v2287 = vpop.permute.xlu0 %2286
      %2288 = vrot.lane.b32.xlu0 %v2255, 120
      %v2289 = vpop.permute.xlu0 %2288
      %2290 = vrot.lane.b32.xlu0 %v2260, 120
      %v2291 = vpop.permute.xlu0 %2290
      %2292 = vrot.lane.b32.xlu0 %v2263, 120
      %v2293 = vpop.permute.xlu0 %2292
      %v2298 = vadd.f32 %v2278, %v2287
      %v2299 = vadd.f32 %v2279, %v2289
      %v2300 = vadd.f32 %v2280, %v2291
      %v2301 = vadd.f32 %v2281, %v2293
      %2302 = vst.msk [vmem:[%s1221] sm:$0xff] %vm1216, %v2298
      %2303 = vst.msk [vmem:[%s1221 + $0x8] sm:$0xff] %vm1216, %v2299
      %2304 = vst.msk [vmem:[%s1221 + $0x10] sm:$0xff] %vm1216, %v2300
      %2305 = vst.msk [vmem:[%s1221 + $0x18] sm:$0xff] %vm1216, %v2301
      %v2306 = vld [vmem:[%s1226] sm:$0xff]
      %v2307 = vld [vmem:[%s1226 + $0x8] sm:$0xff]
      %v2308 = vld [vmem:[%s1226 + $0x10] sm:$0xff]
      %v2309 = vld [vmem:[%s1226 + $0x18] sm:$0xff]
      %2310 = vrot.lane.b32.xlu0 %v2252, 112
      %v2311 = vpop.permute.xlu0 %2310
      %2312 = vrot.lane.b32.xlu0 %v2255, 112
      %v2313 = vpop.permute.xlu0 %2312
      %2314 = vrot.lane.b32.xlu0 %v2260, 112
      %v2315 = vpop.permute.xlu0 %2314
      %2316 = vrot.lane.b32.xlu0 %v2263, 112
      %v2317 = vpop.permute.xlu0 %2316
      %v2322 = vadd.f32 %v2306, %v2311
      %v2323 = vadd.f32 %v2307, %v2313
      %v2324 = vadd.f32 %v2308, %v2315
      %v2325 = vadd.f32 %v2309, %v2317
      %2326 = vst.msk [vmem:[%s1226] sm:$0xff] %vm1216, %v2322
      %2327 = vst.msk [vmem:[%s1226 + $0x8] sm:$0xff] %vm1216, %v2323
      %2328 = vst.msk [vmem:[%s1226 + $0x10] sm:$0xff] %vm1216, %v2324
      %2329 = vst.msk [vmem:[%s1226 + $0x18] sm:$0xff] %vm1216, %v2325
      %v2330 = vld [vmem:[%s1231] sm:$0xff]
      %v2331 = vld [vmem:[%s1231 + $0x8] sm:$0xff]
      %v2332 = vld [vmem:[%s1231 + $0x10] sm:$0xff]
      %v2333 = vld [vmem:[%s1231 + $0x18] sm:$0xff]
      %2334 = vrot.lane.b32.xlu0 %v2252, 104
      %v2335 = vpop.permute.xlu0 %2334
      %2336 = vrot.lane.b32.xlu0 %v2255, 104
      %v2337 = vpop.permute.xlu0 %2336
      %2338 = vrot.lane.b32.xlu0 %v2260, 104
      %v2339 = vpop.permute.xlu0 %2338
      %2340 = vrot.lane.b32.xlu0 %v2263, 104
      %v2341 = vpop.permute.xlu0 %2340
      %v2346 = vadd.f32 %v2330, %v2335
      %v2347 = vadd.f32 %v2331, %v2337
      %v2348 = vadd.f32 %v2332, %v2339
      %v2349 = vadd.f32 %v2333, %v2341
      %2350 = vst.msk [vmem:[%s1231] sm:$0xff] %vm1216, %v2346
      %2351 = vst.msk [vmem:[%s1231 + $0x8] sm:$0xff] %vm1216, %v2347
      %2352 = vst.msk [vmem:[%s1231 + $0x10] sm:$0xff] %vm1216, %v2348
      %2353 = vst.msk [vmem:[%s1231 + $0x18] sm:$0xff] %vm1216, %v2349
      %v2354 = vld [vmem:[%s526] sm:$0xe]
      %v2355 = vld [vmem:[%s526 + $0x4] sm:$0x1]
      %v2356 = vld [vmem:[%s526 + $0x8] sm:$0xe]
      %v2357 = vld [vmem:[%s526 + $0xc] sm:$0x1]
      %v2358 = vld [vmem:[%s526 + $0x10] sm:$0xe]
      %v2359 = vld [vmem:[%s526 + $0x14] sm:$0x1]
      %v2360 = vld [vmem:[%s526 + $0x18] sm:$0xe]
      %v2361 = vld [vmem:[%s526 + $0x1c] sm:$0x1]
      %v2370 = vrot.slane %v2354, 5
      %v2371 = vrot.slane %v2370, 4
      %v2372 = vrot.slane %v2355, 5
      %v2373 = vsel %vm1694, %v2371, %v2372
      %v2374 = vrot.slane %v2356, 5
      %v2375 = vrot.slane %v2374, 4
      %v2376 = vrot.slane %v2357, 5
      %v2377 = vsel %vm1694, %v2375, %v2376
      %v2378 = vrot.slane %v2358, 5
      %v2379 = vrot.slane %v2378, 4
      %v2380 = vrot.slane %v2359, 5
      %v2381 = vsel %vm1694, %v2379, %v2380
      %v2382 = vrot.slane %v2360, 5
      %v2383 = vrot.slane %v2382, 4
      %v2384 = vrot.slane %v2361, 5
      %v2385 = vsel %vm1694, %v2383, %v2384
      %s2386 = scalar_lea.vmem %s3, 24
      %v2387 = vld [vmem:[%s2386] sm:$0xf]
      %v2388 = vld [vmem:[%s2386 + $0x4] sm:$0xf]
      %v2389 = vunpack.c.l.b16 %v2373
      %v2390 = vunpack.c.l.b16 %v2377
      %v2391 = vunpack.c.l.b16 %v2381
      %v2392 = vunpack.c.l.b16 %v2385
      %v2393 = vpack.c.b16 %v2390, %v2389
      %v2394 = vpack.c.b16 %v2392, %v2391
      %v2397 = vunpack.c.l.b16 %v2387
      %v2398 = vunpack.c.l.b16 %v2388
      %v2399 = vpack.c.b16 %v2398, %v2397
      %v2402 = vsel %vm1258, %v2393, 0
      %v2405 = vsel %vm1258, %v2394, 0
      %2407 = vmatprep.subr.bf16.mxu0 0
      %2408 = vmatpush1.bf16.msra.mxu0 0
      %2409 = vmatprep.subr.bf16.mxu0 0
      %2410 = vmatpush1.bf16.msra.mxu0 0
      %2411 = vmatprep.subr.bf16.mxu0 0
      %2412 = vmatpush1.bf16.msra.mxu0 0
      %2413 = vmatprep.subr.bf16.mxu0 0
      %2414 = vmatpush1.bf16.msra.mxu0 0
      %2415 = vmatprep.subr.bf16.mxu0 0
      %2416 = vmatpush1.bf16.msra.mxu0 0
      %2417 = vmatprep.subr.bf16.mxu0 0
      %2418 = vmatpush1.bf16.msra.mxu0 0
      %2419 = vmatprep.subr.bf16.mxu0 0
      %2420 = vmatpush1.bf16.msra.mxu0 0
      %2421 = vmatprep.subr.bf16.mxu0 0
      %2422 = vmatpush1.bf16.msra.mxu0 %v2399
      %2423 = vmatprep.subr.bf16.mxu0 0
      %2424 = vmatpush2.bf16.msra.mxu0 0
      %2425 = vmatprep.subr.bf16.mxu0 0
      %2426 = vmatpush2.bf16.msra.mxu0 0
      %2427 = vmatprep.subr.bf16.mxu0 0
      %2428 = vmatpush2.bf16.msra.mxu0 0
      %2429 = vmatprep.subr.bf16.mxu0 0
      %2430 = vmatpush2.bf16.msra.mxu0 0
      %2431 = vmatprep.subr.bf16.mxu0 0
      %2432 = vmatpush2.bf16.msra.mxu0 0
      %2433 = vmatprep.subr.bf16.mxu0 0
      %2434 = vmatpush2.bf16.msra.mxu0 0
      %2435 = vmatprep.subr.bf16.mxu0 0
      %2436 = vmatpush2.bf16.msra.mxu0 0
      %2437 = vmatprep.subr.bf16.mxu0 0
      %2438 = vmatpush2.bf16.msra.mxu0 0
      %2439 = vmatprep.mubr.bf16.mxu0 0
      %2440 = vmatmul.mubr.bf16.gmra.mxu0 %v2402
      %v2441 = vpop.f32.mrf.mxu0
      %v2442 = vadd.f32 0.0, %v2441
      %v2443 = vpop.f32.mrf.mxu0
      %v2444 = vpop.f32.mrf.mxu0
      %v2445 = vadd.f32 0.0, %v2444
      %v2446 = vpop.f32.mrf.mxu0
      %2447 = vmatprep.mubr.bf16.mxu0 0
      %2448 = vmatmul.mubr.bf16.gmra.mxu0 %v2405
      %v2449 = vpop.f32.mrf.mxu0
      %v2450 = vadd.f32 0.0, %v2449
      %v2451 = vpop.f32.mrf.mxu0
      %v2452 = vpop.f32.mrf.mxu0
      %v2453 = vadd.f32 0.0, %v2452
      %v2454 = vpop.f32.mrf.mxu0
      %2455 = vdwg.mxu0
      %v2456 = vld [vmem:[%s1221] sm:$0xff]
      %v2457 = vld [vmem:[%s1221 + $0x8] sm:$0xff]
      %v2458 = vld [vmem:[%s1221 + $0x10] sm:$0xff]
      %v2459 = vld [vmem:[%s1221 + $0x18] sm:$0xff]
      %v2460 = vadd.f32 %v2456, %v2442
      %v2461 = vadd.f32 %v2457, %v2445
      %v2462 = vadd.f32 %v2458, %v2450
      %v2463 = vadd.f32 %v2459, %v2453
      %2464 = vst.msk [vmem:[%s1221] sm:$0xff] %vm1216, %v2460
      %2465 = vst.msk [vmem:[%s1221 + $0x8] sm:$0xff] %vm1216, %v2461
      %2466 = vst.msk [vmem:[%s1221 + $0x10] sm:$0xff] %vm1216, %v2462
      %2467 = vst.msk [vmem:[%s1221 + $0x18] sm:$0xff] %vm1216, %v2463
      %v2468 = vld [vmem:[%s1231] sm:$0xff]
      %v2469 = vld [vmem:[%s1231 + $0x8] sm:$0xff]
      %v2470 = vld [vmem:[%s1231 + $0x10] sm:$0xff]
      %v2471 = vld [vmem:[%s1231 + $0x18] sm:$0xff]
      %2476 = vrot.lane.b32.xlu0 %v2442, 120
      %v2477 = vpop.permute.xlu0 %2476
      %2478 = vrot.lane.b32.xlu0 %v2445, 120
      %v2479 = vpop.permute.xlu0 %2478
      %2480 = vrot.lane.b32.xlu0 %v2450, 120
      %v2481 = vpop.permute.xlu0 %2480
      %2482 = vrot.lane.b32.xlu0 %v2453, 120
      %v2483 = vpop.permute.xlu0 %2482
      %v2488 = vadd.f32 %v2468, %v2477
      %v2489 = vadd.f32 %v2469, %v2479
      %v2490 = vadd.f32 %v2470, %v2481
      %v2491 = vadd.f32 %v2471, %v2483
      %2492 = vst.msk [vmem:[%s1231] sm:$0xff] %vm1216, %v2488
      %2493 = vst.msk [vmem:[%s1231 + $0x8] sm:$0xff] %vm1216, %v2489
      %2494 = vst.msk [vmem:[%s1231 + $0x10] sm:$0xff] %vm1216, %v2490
      %2495 = vst.msk [vmem:[%s1231 + $0x18] sm:$0xff] %vm1216, %v2491
      %v2496 = vld [vmem:[%s904] sm:$0xf]
      %v2497 = vld [vmem:[%s904 + $0x8] sm:$0xf]
      %v2498 = vld [vmem:[%s904 + $0x10] sm:$0xf]
      %v2499 = vld [vmem:[%s904 + $0x18] sm:$0xf]
      %s2500 = scalar_lea.vmem %s3, 32
      %v2501 = vld [vmem:[%s2500] sm:$0xf]
      %v2502 = vld [vmem:[%s2500 + $0x4] sm:$0xf]
      %v2507 = vunpack.c.l.b16 %v2496
      %v2508 = vunpack.c.l.b16 %v2497
      %v2509 = vunpack.c.l.b16 %v2498
      %v2510 = vunpack.c.l.b16 %v2499
      %v2511 = vpack.c.b16 %v2508, %v2507
      %v2512 = vpack.c.b16 %v2510, %v2509
      %v2515 = vunpack.c.l.b16 %v2501
      %v2516 = vunpack.c.l.b16 %v2502
      %v2517 = vpack.c.b16 %v2516, %v2515
      %v2520 = vsel %vm1258, %v2511, 0
      %v2523 = vsel %vm1258, %v2512, 0
      %2525 = vmatprep.subr.bf16.mxu0 0
      %2526 = vmatpush1.bf16.msra.mxu0 0
      %2527 = vmatprep.subr.bf16.mxu0 0
      %2528 = vmatpush1.bf16.msra.mxu0 0
      %2529 = vmatprep.subr.bf16.mxu0 0
      %2530 = vmatpush1.bf16.msra.mxu0 0
      %2531 = vmatprep.subr.bf16.mxu0 0
      %2532 = vmatpush1.bf16.msra.mxu0 0
      %2533 = vmatprep.subr.bf16.mxu0 0
      %2534 = vmatpush1.bf16.msra.mxu0 0
      %2535 = vmatprep.subr.bf16.mxu0 0
      %2536 = vmatpush1.bf16.msra.mxu0 0
      %2537 = vmatprep.subr.bf16.mxu0 0
      %2538 = vmatpush1.bf16.msra.mxu0 0
      %2539 = vmatprep.subr.bf16.mxu0 0
      %2540 = vmatpush1.bf16.msra.mxu0 %v2517
      %2541 = vmatprep.subr.bf16.mxu0 0
      %2542 = vmatpush2.bf16.msra.mxu0 0
      %2543 = vmatprep.subr.bf16.mxu0 0
      %2544 = vmatpush2.bf16.msra.mxu0 0
      %2545 = vmatprep.subr.bf16.mxu0 0
      %2546 = vmatpush2.bf16.msra.mxu0 0
      %2547 = vmatprep.subr.bf16.mxu0 0
      %2548 = vmatpush2.bf16.msra.mxu0 0
      %2549 = vmatprep.subr.bf16.mxu0 0
      %2550 = vmatpush2.bf16.msra.mxu0 0
      %2551 = vmatprep.subr.bf16.mxu0 0
      %2552 = vmatpush2.bf16.msra.mxu0 0
      %2553 = vmatprep.subr.bf16.mxu0 0
      %2554 = vmatpush2.bf16.msra.mxu0 0
      %2555 = vmatprep.subr.bf16.mxu0 0
      %2556 = vmatpush2.bf16.msra.mxu0 0
      %2557 = vmatprep.mubr.bf16.mxu0 0
      %2558 = vmatmul.mubr.bf16.gmra.mxu0 %v2520
      %v2559 = vpop.f32.mrf.mxu0
      %v2560 = vadd.f32 0.0, %v2559
      %v2561 = vpop.f32.mrf.mxu0
      %v2562 = vpop.f32.mrf.mxu0
      %v2563 = vadd.f32 0.0, %v2562
      %v2564 = vpop.f32.mrf.mxu0
      %2565 = vmatprep.mubr.bf16.mxu0 0
      %2566 = vmatmul.mubr.bf16.gmra.mxu0 %v2523
      %v2567 = vpop.f32.mrf.mxu0
      %v2568 = vadd.f32 0.0, %v2567
      %v2569 = vpop.f32.mrf.mxu0
      %v2570 = vpop.f32.mrf.mxu0
      %v2571 = vadd.f32 0.0, %v2570
      %v2572 = vpop.f32.mrf.mxu0
      %2573 = vdwg.mxu0
      %v2574 = vld [vmem:[#allocation3] sm:$0xff]
      %v2575 = vld [vmem:[#allocation3 + $0x8] sm:$0xff]
      %v2576 = vld [vmem:[#allocation3 + $0x10] sm:$0xff]
      %v2577 = vld [vmem:[#allocation3 + $0x18] sm:$0xff]
      %v2578 = vadd.f32 %v2574, %v2560
      %v2579 = vadd.f32 %v2575, %v2563
      %v2580 = vadd.f32 %v2576, %v2568
      %v2581 = vadd.f32 %v2577, %v2571
      %2582 = vst.msk [vmem:[#allocation3] sm:$0xff] %vm1216, %v2578
      %2583 = vst.msk [vmem:[#allocation3 + $0x8] sm:$0xff] %vm1216, %v2579
      %2584 = vst.msk [vmem:[#allocation3 + $0x10] sm:$0xff] %vm1216, %v2580
      %2585 = vst.msk [vmem:[#allocation3 + $0x18] sm:$0xff] %vm1216, %v2581
      %v2586 = vld [vmem:[%s1226] sm:$0xff]
      %v2587 = vld [vmem:[%s1226 + $0x8] sm:$0xff]
      %v2588 = vld [vmem:[%s1226 + $0x10] sm:$0xff]
      %v2589 = vld [vmem:[%s1226 + $0x18] sm:$0xff]
      %2594 = vrot.lane.b32.xlu0 %v2560, 120
      %v2595 = vpop.permute.xlu0 %2594
      %2596 = vrot.lane.b32.xlu0 %v2563, 120
      %v2597 = vpop.permute.xlu0 %2596
      %2598 = vrot.lane.b32.xlu0 %v2568, 120
      %v2599 = vpop.permute.xlu0 %2598
      %2600 = vrot.lane.b32.xlu0 %v2571, 120
      %v2601 = vpop.permute.xlu0 %2600
      %v2606 = vadd.f32 %v2586, %v2595
      %v2607 = vadd.f32 %v2587, %v2597
      %v2608 = vadd.f32 %v2588, %v2599
      %v2609 = vadd.f32 %v2589, %v2601
      %2610 = vst.msk [vmem:[%s1226] sm:$0xff] %vm1216, %v2606
      %2611 = vst.msk [vmem:[%s1226 + $0x8] sm:$0xff] %vm1216, %v2607
      %2612 = vst.msk [vmem:[%s1226 + $0x10] sm:$0xff] %vm1216, %v2608
      %2613 = vst.msk [vmem:[%s1226 + $0x18] sm:$0xff] %vm1216, %v2609
      %v2614 = vld [vmem:[%s795] sm:$0xf]
      %v2615 = vld [vmem:[%s795 + $0x4] sm:$0x1]
      %v2616 = vld [vmem:[%s795 + $0x8] sm:$0xf]
      %v2617 = vld [vmem:[%s795 + $0xc] sm:$0x1]
      %v2618 = vld [vmem:[%s795 + $0x10] sm:$0xf]
      %v2619 = vld [vmem:[%s795 + $0x14] sm:$0x1]
      %v2620 = vld [vmem:[%s795 + $0x18] sm:$0xf]
      %v2621 = vld [vmem:[%s795 + $0x1c] sm:$0x1]
      %v2623 = vshrl.u32 %v2614, 16
      %v2625 = vrot.slane %v2623, 4
      %v2626 = vshll.u32 %v2614, 16
      %v2628 = vrot.slane %v2626, 5
      %v2629 = vor.u32 %v2625, %v2628
      %v2630 = vrot.slane %v2629, 4
      %v2632 = vshll.u32 %v2615, 16
      %v2634 = vrot.slane %v2632, 5
      %v2635 = vsel %vm1336, %v2630, %v2634
      %v2637 = vshrl.u32 %v2616, 16
      %v2639 = vrot.slane %v2637, 4
      %v2640 = vshll.u32 %v2616, 16
      %v2642 = vrot.slane %v2640, 5
      %v2643 = vor.u32 %v2639, %v2642
      %v2644 = vrot.slane %v2643, 4
      %v2646 = vshll.u32 %v2617, 16
      %v2648 = vrot.slane %v2646, 5
      %v2649 = vsel %vm1336, %v2644, %v2648
      %v2651 = vshrl.u32 %v2618, 16
      %v2653 = vrot.slane %v2651, 4
      %v2654 = vshll.u32 %v2618, 16
      %v2656 = vrot.slane %v2654, 5
      %v2657 = vor.u32 %v2653, %v2656
      %v2658 = vrot.slane %v2657, 4
      %v2660 = vshll.u32 %v2619, 16
      %v2662 = vrot.slane %v2660, 5
      %v2663 = vsel %vm1336, %v2658, %v2662
      %v2665 = vshrl.u32 %v2620, 16
      %v2667 = vrot.slane %v2665, 4
      %v2668 = vshll.u32 %v2620, 16
      %v2670 = vrot.slane %v2668, 5
      %v2671 = vor.u32 %v2667, %v2670
      %v2672 = vrot.slane %v2671, 4
      %v2674 = vshll.u32 %v2621, 16
      %v2676 = vrot.slane %v2674, 5
      %v2677 = vsel %vm1336, %v2672, %v2676
      %s2678 = scalar_lea.vmem %s4, 16
      %v2679 = vld [vmem:[%s2678] sm:$0xf]
      %v2680 = vld [vmem:[%s2678 + $0x4] sm:$0xf]
      %v2681 = vunpack.c.l.b16 %v2635
      %v2682 = vunpack.c.l.b16 %v2649
      %v2683 = vunpack.c.l.b16 %v2663
      %v2684 = vunpack.c.l.b16 %v2677
      %v2685 = vpack.c.b16 %v2682, %v2681
      %v2686 = vpack.c.b16 %v2684, %v2683
      %v2689 = vunpack.c.l.b16 %v2679
      %v2690 = vunpack.c.l.b16 %v2680
      %v2691 = vpack.c.b16 %v2690, %v2689
      %v2694 = vsel %vm1258, %v2685, 0
      %v2697 = vsel %vm1258, %v2686, 0
      %2699 = vmatprep.subr.bf16.mxu0 0
      %2700 = vmatpush1.bf16.msra.mxu0 0
      %2701 = vmatprep.subr.bf16.mxu0 0
      %2702 = vmatpush1.bf16.msra.mxu0 0
      %2703 = vmatprep.subr.bf16.mxu0 0
      %2704 = vmatpush1.bf16.msra.mxu0 0
      %2705 = vmatprep.subr.bf16.mxu0 0
      %2706 = vmatpush1.bf16.msra.mxu0 0
      %2707 = vmatprep.subr.bf16.mxu0 0
      %2708 = vmatpush1.bf16.msra.mxu0 0
      %2709 = vmatprep.subr.bf16.mxu0 0
      %2710 = vmatpush1.bf16.msra.mxu0 0
      %2711 = vmatprep.subr.bf16.mxu0 0
      %2712 = vmatpush1.bf16.msra.mxu0 0
      %2713 = vmatprep.subr.bf16.mxu0 0
      %2714 = vmatpush1.bf16.msra.mxu0 %v2691
      %2715 = vmatprep.subr.bf16.mxu0 0
      %2716 = vmatpush2.bf16.msra.mxu0 0
      %2717 = vmatprep.subr.bf16.mxu0 0
      %2718 = vmatpush2.bf16.msra.mxu0 0
      %2719 = vmatprep.subr.bf16.mxu0 0
      %2720 = vmatpush2.bf16.msra.mxu0 0
      %2721 = vmatprep.subr.bf16.mxu0 0
      %2722 = vmatpush2.bf16.msra.mxu0 0
      %2723 = vmatprep.subr.bf16.mxu0 0
      %2724 = vmatpush2.bf16.msra.mxu0 0
      %2725 = vmatprep.subr.bf16.mxu0 0
      %2726 = vmatpush2.bf16.msra.mxu0 0
      %2727 = vmatprep.subr.bf16.mxu0 0
      %2728 = vmatpush2.bf16.msra.mxu0 0
      %2729 = vmatprep.subr.bf16.mxu0 0
      %2730 = vmatpush2.bf16.msra.mxu0 0
      %2731 = vmatprep.mubr.bf16.mxu0 0
      %2732 = vmatmul.mubr.bf16.gmra.mxu0 %v2694
      %v2733 = vpop.f32.mrf.mxu0
      %v2734 = vadd.f32 0.0, %v2733
      %v2735 = vpop.f32.mrf.mxu0
      %v2736 = vpop.f32.mrf.mxu0
      %v2737 = vadd.f32 0.0, %v2736
      %v2738 = vpop.f32.mrf.mxu0
      %2739 = vmatprep.mubr.bf16.mxu0 0
      %2740 = vmatmul.mubr.bf16.gmra.mxu0 %v2697
      %v2741 = vpop.f32.mrf.mxu0
      %v2742 = vadd.f32 0.0, %v2741
      %v2743 = vpop.f32.mrf.mxu0
      %v2744 = vpop.f32.mrf.mxu0
      %v2745 = vadd.f32 0.0, %v2744
      %v2746 = vpop.f32.mrf.mxu0
      %2747 = vdwg.mxu0
      %v2748 = vld [vmem:[#allocation3] sm:$0xff]
      %v2749 = vld [vmem:[#allocation3 + $0x8] sm:$0xff]
      %v2750 = vld [vmem:[#allocation3 + $0x10] sm:$0xff]
      %v2751 = vld [vmem:[#allocation3 + $0x18] sm:$0xff]
      %v2752 = vadd.f32 %v2748, %v2734
      %v2753 = vadd.f32 %v2749, %v2737
      %v2754 = vadd.f32 %v2750, %v2742
      %v2755 = vadd.f32 %v2751, %v2745
      %2756 = vst.msk [vmem:[#allocation3] sm:$0xff] %vm1216, %v2752
      %2757 = vst.msk [vmem:[#allocation3 + $0x8] sm:$0xff] %vm1216, %v2753
      %2758 = vst.msk [vmem:[#allocation3 + $0x10] sm:$0xff] %vm1216, %v2754
      %2759 = vst.msk [vmem:[#allocation3 + $0x18] sm:$0xff] %vm1216, %v2755
      %v2760 = vld [vmem:[%s1221] sm:$0xff]
      %v2761 = vld [vmem:[%s1221 + $0x8] sm:$0xff]
      %v2762 = vld [vmem:[%s1221 + $0x10] sm:$0xff]
      %v2763 = vld [vmem:[%s1221 + $0x18] sm:$0xff]
      %2768 = vrot.lane.b32.xlu0 %v2734, 120
      %v2769 = vpop.permute.xlu0 %2768
      %2770 = vrot.lane.b32.xlu0 %v2737, 120
      %v2771 = vpop.permute.xlu0 %2770
      %2772 = vrot.lane.b32.xlu0 %v2742, 120
      %v2773 = vpop.permute.xlu0 %2772
      %2774 = vrot.lane.b32.xlu0 %v2745, 120
      %v2775 = vpop.permute.xlu0 %2774
      %v2780 = vadd.f32 %v2760, %v2769
      %v2781 = vadd.f32 %v2761, %v2771
      %v2782 = vadd.f32 %v2762, %v2773
      %v2783 = vadd.f32 %v2763, %v2775
      %2784 = vst.msk [vmem:[%s1221] sm:$0xff] %vm1216, %v2780
      %2785 = vst.msk [vmem:[%s1221 + $0x8] sm:$0xff] %vm1216, %v2781
      %2786 = vst.msk [vmem:[%s1221 + $0x10] sm:$0xff] %vm1216, %v2782
      %2787 = vst.msk [vmem:[%s1221 + $0x18] sm:$0xff] %vm1216, %v2783
      %v2788 = vld [vmem:[%s1226] sm:$0xff]
      %v2789 = vld [vmem:[%s1226 + $0x8] sm:$0xff]
      %v2790 = vld [vmem:[%s1226 + $0x10] sm:$0xff]
      %v2791 = vld [vmem:[%s1226 + $0x18] sm:$0xff]
      %2792 = vrot.lane.b32.xlu0 %v2734, 112
      %v2793 = vpop.permute.xlu0 %2792
      %2794 = vrot.lane.b32.xlu0 %v2737, 112
      %v2795 = vpop.permute.xlu0 %2794
      %2796 = vrot.lane.b32.xlu0 %v2742, 112
      %v2797 = vpop.permute.xlu0 %2796
      %2798 = vrot.lane.b32.xlu0 %v2745, 112
      %v2799 = vpop.permute.xlu0 %2798
      %v2804 = vadd.f32 %v2788, %v2793
      %v2805 = vadd.f32 %v2789, %v2795
      %v2806 = vadd.f32 %v2790, %v2797
      %v2807 = vadd.f32 %v2791, %v2799
      %2808 = vst.msk [vmem:[%s1226] sm:$0xff] %vm1216, %v2804
      %2809 = vst.msk [vmem:[%s1226 + $0x8] sm:$0xff] %vm1216, %v2805
      %2810 = vst.msk [vmem:[%s1226 + $0x10] sm:$0xff] %vm1216, %v2806
      %2811 = vst.msk [vmem:[%s1226 + $0x18] sm:$0xff] %vm1216, %v2807
      %v2812 = vld [vmem:[%s1231] sm:$0xff]
      %v2813 = vld [vmem:[%s1231 + $0x8] sm:$0xff]
      %v2814 = vld [vmem:[%s1231 + $0x10] sm:$0xff]
      %v2815 = vld [vmem:[%s1231 + $0x18] sm:$0xff]
      %2816 = vrot.lane.b32.xlu0 %v2734, 104
      %v2817 = vpop.permute.xlu0 %2816
      %2818 = vrot.lane.b32.xlu0 %v2737, 104
      %v2819 = vpop.permute.xlu0 %2818
      %2820 = vrot.lane.b32.xlu0 %v2742, 104
      %v2821 = vpop.permute.xlu0 %2820
      %2822 = vrot.lane.b32.xlu0 %v2745, 104
      %v2823 = vpop.permute.xlu0 %2822
      %v2828 = vadd.f32 %v2812, %v2817
      %v2829 = vadd.f32 %v2813, %v2819
      %v2830 = vadd.f32 %v2814, %v2821
      %v2831 = vadd.f32 %v2815, %v2823
      %2832 = vst.msk [vmem:[%s1231] sm:$0xff] %vm1216, %v2828
      %2833 = vst.msk [vmem:[%s1231 + $0x8] sm:$0xff] %vm1216, %v2829
      %2834 = vst.msk [vmem:[%s1231 + $0x10] sm:$0xff] %vm1216, %v2830
      %2835 = vst.msk [vmem:[%s1231 + $0x18] sm:$0xff] %vm1216, %v2831
      %v2836 = vld [vmem:[%s904] sm:$0xf]
      %v2837 = vld [vmem:[%s904 + $0x4] sm:$0x1]
      %v2838 = vld [vmem:[%s904 + $0x8] sm:$0xf]
      %v2839 = vld [vmem:[%s904 + $0xc] sm:$0x1]
      %v2840 = vld [vmem:[%s904 + $0x10] sm:$0xf]
      %v2841 = vld [vmem:[%s904 + $0x14] sm:$0x1]
      %v2842 = vld [vmem:[%s904 + $0x18] sm:$0xf]
      %v2843 = vld [vmem:[%s904 + $0x1c] sm:$0x1]
      %v2845 = vshrl.u32 %v2836, 16
      %v2847 = vrot.slane %v2845, 4
      %v2848 = vshll.u32 %v2836, 16
      %v2850 = vrot.slane %v2848, 5
      %v2851 = vor.u32 %v2847, %v2850
      %v2852 = vrot.slane %v2851, 4
      %v2854 = vshll.u32 %v2837, 16
      %v2856 = vrot.slane %v2854, 5
      %v2857 = vsel %vm1336, %v2852, %v2856
      %v2859 = vshrl.u32 %v2838, 16
      %v2861 = vrot.slane %v2859, 4
      %v2862 = vshll.u32 %v2838, 16
      %v2864 = vrot.slane %v2862, 5
      %v2865 = vor.u32 %v2861, %v2864
      %v2866 = vrot.slane %v2865, 4
      %v2868 = vshll.u32 %v2839, 16
      %v2870 = vrot.slane %v2868, 5
      %v2871 = vsel %vm1336, %v2866, %v2870
      %v2873 = vshrl.u32 %v2840, 16
      %v2875 = vrot.slane %v2873, 4
      %v2876 = vshll.u32 %v2840, 16
      %v2878 = vrot.slane %v2876, 5
      %v2879 = vor.u32 %v2875, %v2878
      %v2880 = vrot.slane %v2879, 4
      %v2882 = vshll.u32 %v2841, 16
      %v2884 = vrot.slane %v2882, 5
      %v2885 = vsel %vm1336, %v2880, %v2884
      %v2887 = vshrl.u32 %v2842, 16
      %v2889 = vrot.slane %v2887, 4
      %v2890 = vshll.u32 %v2842, 16
      %v2892 = vrot.slane %v2890, 5
      %v2893 = vor.u32 %v2889, %v2892
      %v2894 = vrot.slane %v2893, 4
      %v2896 = vshll.u32 %v2843, 16
      %v2898 = vrot.slane %v2896, 5
      %v2899 = vsel %vm1336, %v2894, %v2898
      %s2900 = scalar_lea.vmem %s4, 24
      %v2901 = vld [vmem:[%s2900] sm:$0xf]
      %v2902 = vld [vmem:[%s2900 + $0x4] sm:$0xf]
      %v2903 = vunpack.c.l.b16 %v2857
      %v2904 = vunpack.c.l.b16 %v2871
      %v2905 = vunpack.c.l.b16 %v2885
      %v2906 = vunpack.c.l.b16 %v2899
      %v2907 = vpack.c.b16 %v2904, %v2903
      %v2908 = vpack.c.b16 %v2906, %v2905
      %v2911 = vunpack.c.l.b16 %v2901
      %v2912 = vunpack.c.l.b16 %v2902
      %v2913 = vpack.c.b16 %v2912, %v2911
      %v2916 = vsel %vm1258, %v2907, 0
      %v2919 = vsel %vm1258, %v2908, 0
      %2921 = vmatprep.subr.bf16.mxu0 0
      %2922 = vmatpush1.bf16.msra.mxu0 0
      %2923 = vmatprep.subr.bf16.mxu0 0
      %2924 = vmatpush1.bf16.msra.mxu0 0
      %2925 = vmatprep.subr.bf16.mxu0 0
      %2926 = vmatpush1.bf16.msra.mxu0 0
      %2927 = vmatprep.subr.bf16.mxu0 0
      %2928 = vmatpush1.bf16.msra.mxu0 0
      %2929 = vmatprep.subr.bf16.mxu0 0
      %2930 = vmatpush1.bf16.msra.mxu0 0
      %2931 = vmatprep.subr.bf16.mxu0 0
      %2932 = vmatpush1.bf16.msra.mxu0 0
      %2933 = vmatprep.subr.bf16.mxu0 0
      %2934 = vmatpush1.bf16.msra.mxu0 0
      %2935 = vmatprep.subr.bf16.mxu0 0
      %2936 = vmatpush1.bf16.msra.mxu0 %v2913
      %2937 = vmatprep.subr.bf16.mxu0 0
      %2938 = vmatpush2.bf16.msra.mxu0 0
      %2939 = vmatprep.subr.bf16.mxu0 0
      %2940 = vmatpush2.bf16.msra.mxu0 0
      %2941 = vmatprep.subr.bf16.mxu0 0
      %2942 = vmatpush2.bf16.msra.mxu0 0
      %2943 = vmatprep.subr.bf16.mxu0 0
      %2944 = vmatpush2.bf16.msra.mxu0 0
      %2945 = vmatprep.subr.bf16.mxu0 0
      %2946 = vmatpush2.bf16.msra.mxu0 0
      %2947 = vmatprep.subr.bf16.mxu0 0
      %2948 = vmatpush2.bf16.msra.mxu0 0
      %2949 = vmatprep.subr.bf16.mxu0 0
      %2950 = vmatpush2.bf16.msra.mxu0 0
      %2951 = vmatprep.subr.bf16.mxu0 0
      %2952 = vmatpush2.bf16.msra.mxu0 0
      %2953 = vmatprep.mubr.bf16.mxu0 0
      %2954 = vmatmul.mubr.bf16.gmra.mxu0 %v2916
      %v2955 = vpop.f32.mrf.mxu0
      %v2956 = vadd.f32 0.0, %v2955
      %v2957 = vpop.f32.mrf.mxu0
      %v2958 = vpop.f32.mrf.mxu0
      %v2959 = vadd.f32 0.0, %v2958
      %v2960 = vpop.f32.mrf.mxu0
      %2961 = vmatprep.mubr.bf16.mxu0 0
      %2962 = vmatmul.mubr.bf16.gmra.mxu0 %v2919
      %v2963 = vpop.f32.mrf.mxu0
      %v2964 = vadd.f32 0.0, %v2963
      %v2965 = vpop.f32.mrf.mxu0
      %v2966 = vpop.f32.mrf.mxu0
      %v2967 = vadd.f32 0.0, %v2966
      %v2968 = vpop.f32.mrf.mxu0
      %2969 = vdwg.mxu0
      %v2970 = vld [vmem:[#allocation3] sm:$0xff]
      %v2971 = vld [vmem:[#allocation3 + $0x8] sm:$0xff]
      %v2972 = vld [vmem:[#allocation3 + $0x10] sm:$0xff]
      %v2973 = vld [vmem:[#allocation3 + $0x18] sm:$0xff]
      %v2974 = vadd.f32 %v2970, %v2956
      %v2975 = vadd.f32 %v2971, %v2959
      %v2976 = vadd.f32 %v2972, %v2964
      %v2977 = vadd.f32 %v2973, %v2967
      %2978 = vst.msk [vmem:[#allocation3] sm:$0xff] %vm1216, %v2974
      %2979 = vst.msk [vmem:[#allocation3 + $0x8] sm:$0xff] %vm1216, %v2975
      %2980 = vst.msk [vmem:[#allocation3 + $0x10] sm:$0xff] %vm1216, %v2976
      %2981 = vst.msk [vmem:[#allocation3 + $0x18] sm:$0xff] %vm1216, %v2977
      %v2982 = vld [vmem:[%s1221] sm:$0xff]
      %v2983 = vld [vmem:[%s1221 + $0x8] sm:$0xff]
      %v2984 = vld [vmem:[%s1221 + $0x10] sm:$0xff]
      %v2985 = vld [vmem:[%s1221 + $0x18] sm:$0xff]
      %2990 = vrot.lane.b32.xlu0 %v2956, 120
      %v2991 = vpop.permute.xlu0 %2990
      %2992 = vrot.lane.b32.xlu0 %v2959, 120
      %v2993 = vpop.permute.xlu0 %2992
      %2994 = vrot.lane.b32.xlu0 %v2964, 120
      %v2995 = vpop.permute.xlu0 %2994
      %2996 = vrot.lane.b32.xlu0 %v2967, 120
      %v2997 = vpop.permute.xlu0 %2996
      %v3002 = vadd.f32 %v2982, %v2991
      %v3003 = vadd.f32 %v2983, %v2993
      %v3004 = vadd.f32 %v2984, %v2995
      %v3005 = vadd.f32 %v2985, %v2997
      %3006 = vst.msk [vmem:[%s1221] sm:$0xff] %vm1216, %v3002
      %3007 = vst.msk [vmem:[%s1221 + $0x8] sm:$0xff] %vm1216, %v3003
      %3008 = vst.msk [vmem:[%s1221 + $0x10] sm:$0xff] %vm1216, %v3004
      %3009 = vst.msk [vmem:[%s1221 + $0x18] sm:$0xff] %vm1216, %v3005
      %v3010 = vld [vmem:[%s1226] sm:$0xff]
      %v3011 = vld [vmem:[%s1226 + $0x8] sm:$0xff]
      %v3012 = vld [vmem:[%s1226 + $0x10] sm:$0xff]
      %v3013 = vld [vmem:[%s1226 + $0x18] sm:$0xff]
      %3014 = vrot.lane.b32.xlu0 %v2956, 112
      %v3015 = vpop.permute.xlu0 %3014
      %3016 = vrot.lane.b32.xlu0 %v2959, 112
      %v3017 = vpop.permute.xlu0 %3016
      %3018 = vrot.lane.b32.xlu0 %v2964, 112
      %v3019 = vpop.permute.xlu0 %3018
      %3020 = vrot.lane.b32.xlu0 %v2967, 112
      %v3021 = vpop.permute.xlu0 %3020
      %v3026 = vadd.f32 %v3010, %v3015
      %v3027 = vadd.f32 %v3011, %v3017
      %v3028 = vadd.f32 %v3012, %v3019
      %v3029 = vadd.f32 %v3013, %v3021
      %3030 = vst.msk [vmem:[%s1226] sm:$0xff] %vm1216, %v3026
      %3031 = vst.msk [vmem:[%s1226 + $0x8] sm:$0xff] %vm1216, %v3027
      %3032 = vst.msk [vmem:[%s1226 + $0x10] sm:$0xff] %vm1216, %v3028
      %3033 = vst.msk [vmem:[%s1226 + $0x18] sm:$0xff] %vm1216, %v3029
      %v3034 = vld [vmem:[%s1231] sm:$0xff]
      %v3035 = vld [vmem:[%s1231 + $0x8] sm:$0xff]
      %v3036 = vld [vmem:[%s1231 + $0x10] sm:$0xff]
      %v3037 = vld [vmem:[%s1231 + $0x18] sm:$0xff]
      %3038 = vrot.lane.b32.xlu0 %v2956, 104
      %v3039 = vpop.permute.xlu0 %3038
      %3040 = vrot.lane.b32.xlu0 %v2959, 104
      %v3041 = vpop.permute.xlu0 %3040
      %3042 = vrot.lane.b32.xlu0 %v2964, 104
      %v3043 = vpop.permute.xlu0 %3042
      %3044 = vrot.lane.b32.xlu0 %v2967, 104
      %v3045 = vpop.permute.xlu0 %3044
      %v3050 = vadd.f32 %v3034, %v3039
      %v3051 = vadd.f32 %v3035, %v3041
      %v3052 = vadd.f32 %v3036, %v3043
      %v3053 = vadd.f32 %v3037, %v3045
      %3054 = vst.msk [vmem:[%s1231] sm:$0xff] %vm1216, %v3050
      %3055 = vst.msk [vmem:[%s1231 + $0x8] sm:$0xff] %vm1216, %v3051
      %3056 = vst.msk [vmem:[%s1231 + $0x10] sm:$0xff] %vm1216, %v3052
      %3057 = vst.msk [vmem:[%s1231 + $0x18] sm:$0xff] %vm1216, %v3053
      %v3058 = vld [vmem:[%s795] sm:$0xe]
      %v3059 = vld [vmem:[%s795 + $0x4] sm:$0x1]
      %v3060 = vld [vmem:[%s795 + $0x8] sm:$0xe]
      %v3061 = vld [vmem:[%s795 + $0xc] sm:$0x1]
      %v3062 = vld [vmem:[%s795 + $0x10] sm:$0xe]
      %v3063 = vld [vmem:[%s795 + $0x14] sm:$0x1]
      %v3064 = vld [vmem:[%s795 + $0x18] sm:$0xe]
      %v3065 = vld [vmem:[%s795 + $0x1c] sm:$0x1]
      %v3074 = vrot.slane %v3058, 5
      %v3075 = vrot.slane %v3074, 4
      %v3076 = vrot.slane %v3059, 5
      %v3077 = vsel %vm1694, %v3075, %v3076
      %v3078 = vrot.slane %v3060, 5
      %v3079 = vrot.slane %v3078, 4
      %v3080 = vrot.slane %v3061, 5
      %v3081 = vsel %vm1694, %v3079, %v3080
      %v3082 = vrot.slane %v3062, 5
      %v3083 = vrot.slane %v3082, 4
      %v3084 = vrot.slane %v3063, 5
      %v3085 = vsel %vm1694, %v3083, %v3084
      %v3086 = vrot.slane %v3064, 5
      %v3087 = vrot.slane %v3086, 4
      %v3088 = vrot.slane %v3065, 5
      %v3089 = vsel %vm1694, %v3087, %v3088
      %s3090 = scalar_lea.vmem %s3, 40
      %v3091 = vld [vmem:[%s3090] sm:$0xf]
      %v3092 = vld [vmem:[%s3090 + $0x4] sm:$0xf]
      %v3093 = vunpack.c.l.b16 %v3077
      %v3094 = vunpack.c.l.b16 %v3081
      %v3095 = vunpack.c.l.b16 %v3085
      %v3096 = vunpack.c.l.b16 %v3089
      %v3097 = vpack.c.b16 %v3094, %v3093
      %v3098 = vpack.c.b16 %v3096, %v3095
      %v3101 = vunpack.c.l.b16 %v3091
      %v3102 = vunpack.c.l.b16 %v3092
      %v3103 = vpack.c.b16 %v3102, %v3101
      %v3106 = vsel %vm1258, %v3097, 0
      %v3109 = vsel %vm1258, %v3098, 0
      %3111 = vmatprep.subr.bf16.mxu0 0
      %3112 = vmatpush1.bf16.msra.mxu0 0
      %3113 = vmatprep.subr.bf16.mxu0 0
      %3114 = vmatpush1.bf16.msra.mxu0 0
      %3115 = vmatprep.subr.bf16.mxu0 0
      %3116 = vmatpush1.bf16.msra.mxu0 0
      %3117 = vmatprep.subr.bf16.mxu0 0
      %3118 = vmatpush1.bf16.msra.mxu0 0
      %3119 = vmatprep.subr.bf16.mxu0 0
      %3120 = vmatpush1.bf16.msra.mxu0 0
      %3121 = vmatprep.subr.bf16.mxu0 0
      %3122 = vmatpush1.bf16.msra.mxu0 0
      %3123 = vmatprep.subr.bf16.mxu0 0
      %3124 = vmatpush1.bf16.msra.mxu0 0
      %3125 = vmatprep.subr.bf16.mxu0 0
      %3126 = vmatpush1.bf16.msra.mxu0 %v3103
      %3127 = vmatprep.subr.bf16.mxu0 0
      %3128 = vmatpush2.bf16.msra.mxu0 0
      %3129 = vmatprep.subr.bf16.mxu0 0
      %3130 = vmatpush2.bf16.msra.mxu0 0
      %3131 = vmatprep.subr.bf16.mxu0 0
      %3132 = vmatpush2.bf16.msra.mxu0 0
      %3133 = vmatprep.subr.bf16.mxu0 0
      %3134 = vmatpush2.bf16.msra.mxu0 0
      %3135 = vmatprep.subr.bf16.mxu0 0
      %3136 = vmatpush2.bf16.msra.mxu0 0
      %3137 = vmatprep.subr.bf16.mxu0 0
      %3138 = vmatpush2.bf16.msra.mxu0 0
      %3139 = vmatprep.subr.bf16.mxu0 0
      %3140 = vmatpush2.bf16.msra.mxu0 0
      %3141 = vmatprep.subr.bf16.mxu0 0
      %3142 = vmatpush2.bf16.msra.mxu0 0
      %3143 = vmatprep.mubr.bf16.mxu0 0
      %3144 = vmatmul.mubr.bf16.gmra.mxu0 %v3106
      %v3145 = vpop.f32.mrf.mxu0
      %v3146 = vadd.f32 0.0, %v3145
      %v3147 = vpop.f32.mrf.mxu0
      %v3148 = vpop.f32.mrf.mxu0
      %v3149 = vadd.f32 0.0, %v3148
      %v3150 = vpop.f32.mrf.mxu0
      %3151 = vmatprep.mubr.bf16.mxu0 0
      %3152 = vmatmul.mubr.bf16.gmra.mxu0 %v3109
      %v3153 = vpop.f32.mrf.mxu0
      %v3154 = vadd.f32 0.0, %v3153
      %v3155 = vpop.f32.mrf.mxu0
      %v3156 = vpop.f32.mrf.mxu0
      %v3157 = vadd.f32 0.0, %v3156
      %v3158 = vpop.f32.mrf.mxu0
      %3159 = vdwg.mxu0
      %v3160 = vld [vmem:[%s1221] sm:$0xff]
      %v3161 = vld [vmem:[%s1221 + $0x8] sm:$0xff]
      %v3162 = vld [vmem:[%s1221 + $0x10] sm:$0xff]
      %v3163 = vld [vmem:[%s1221 + $0x18] sm:$0xff]
      %v3164 = vadd.f32 %v3160, %v3146
      %v3165 = vadd.f32 %v3161, %v3149
      %v3166 = vadd.f32 %v3162, %v3154
      %v3167 = vadd.f32 %v3163, %v3157
      %3168 = vst.msk [vmem:[%s1221] sm:$0xff] %vm1216, %v3164
      %3169 = vst.msk [vmem:[%s1221 + $0x8] sm:$0xff] %vm1216, %v3165
      %3170 = vst.msk [vmem:[%s1221 + $0x10] sm:$0xff] %vm1216, %v3166
      %3171 = vst.msk [vmem:[%s1221 + $0x18] sm:$0xff] %vm1216, %v3167
      %v3172 = vld [vmem:[%s1231] sm:$0xff]
      %v3173 = vld [vmem:[%s1231 + $0x8] sm:$0xff]
      %v3174 = vld [vmem:[%s1231 + $0x10] sm:$0xff]
      %v3175 = vld [vmem:[%s1231 + $0x18] sm:$0xff]
      %3180 = vrot.lane.b32.xlu0 %v3146, 120
      %v3181 = vpop.permute.xlu0 %3180
      %3182 = vrot.lane.b32.xlu0 %v3149, 120
      %v3183 = vpop.permute.xlu0 %3182
      %3184 = vrot.lane.b32.xlu0 %v3154, 120
      %v3185 = vpop.permute.xlu0 %3184
      %3186 = vrot.lane.b32.xlu0 %v3157, 120
      %v3187 = vpop.permute.xlu0 %3186
      %v3192 = vadd.f32 %v3172, %v3181
      %v3193 = vadd.f32 %v3173, %v3183
      %v3194 = vadd.f32 %v3174, %v3185
      %v3195 = vadd.f32 %v3175, %v3187
      %3196 = vst.msk [vmem:[%s1231] sm:$0xff] %vm1216, %v3192
      %3197 = vst.msk [vmem:[%s1231 + $0x8] sm:$0xff] %vm1216, %v3193
      %3198 = vst.msk [vmem:[%s1231 + $0x10] sm:$0xff] %vm1216, %v3194
      %3199 = vst.msk [vmem:[%s1231 + $0x18] sm:$0xff] %vm1216, %v3195
      %s3200 = scalar_lea.vmem [#allocation2], 64
      %v3201 = vld [vmem:[%s3200] sm:$0xf]
      %v3202 = vld [vmem:[%s3200 + $0x8] sm:$0xf]
      %v3203 = vld [vmem:[%s3200 + $0x10] sm:$0xf]
      %v3204 = vld [vmem:[%s3200 + $0x18] sm:$0xf]
      %s3205 = scalar_lea.vmem %s2, 16
      %v3206 = vld [vmem:[%s3205] sm:$0xf]
      %v3207 = vld [vmem:[%s3205 + $0x4] sm:$0xf]
      %v3212 = vunpack.c.l.b16 %v3201
      %v3213 = vunpack.c.l.b16 %v3202
      %v3214 = vunpack.c.l.b16 %v3203
      %v3215 = vunpack.c.l.b16 %v3204
      %v3216 = vpack.c.b16 %v3213, %v3212
      %v3217 = vpack.c.b16 %v3215, %v3214
      %v3220 = vunpack.c.l.b16 %v3206
      %v3221 = vunpack.c.l.b16 %v3207
      %v3222 = vpack.c.b16 %v3221, %v3220
      %v3225 = vsel %vm1258, %v3216, 0
      %v3228 = vsel %vm1258, %v3217, 0
      %3230 = vmatprep.subr.bf16.mxu0 0
      %3231 = vmatpush1.bf16.msra.mxu0 0
      %3232 = vmatprep.subr.bf16.mxu0 0
      %3233 = vmatpush1.bf16.msra.mxu0 0
      %3234 = vmatprep.subr.bf16.mxu0 0
      %3235 = vmatpush1.bf16.msra.mxu0 0
      %3236 = vmatprep.subr.bf16.mxu0 0
      %3237 = vmatpush1.bf16.msra.mxu0 0
      %3238 = vmatprep.subr.bf16.mxu0 0
      %3239 = vmatpush1.bf16.msra.mxu0 0
      %3240 = vmatprep.subr.bf16.mxu0 0
      %3241 = vmatpush1.bf16.msra.mxu0 0
      %3242 = vmatprep.subr.bf16.mxu0 0
      %3243 = vmatpush1.bf16.msra.mxu0 0
      %3244 = vmatprep.subr.bf16.mxu0 0
      %3245 = vmatpush1.bf16.msra.mxu0 %v3222
      %3246 = vmatprep.subr.bf16.mxu0 0
      %3247 = vmatpush2.bf16.msra.mxu0 0
      %3248 = vmatprep.subr.bf16.mxu0 0
      %3249 = vmatpush2.bf16.msra.mxu0 0
      %3250 = vmatprep.subr.bf16.mxu0 0
      %3251 = vmatpush2.bf16.msra.mxu0 0
      %3252 = vmatprep.subr.bf16.mxu0 0
      %3253 = vmatpush2.bf16.msra.mxu0 0
      %3254 = vmatprep.subr.bf16.mxu0 0
      %3255 = vmatpush2.bf16.msra.mxu0 0
      %3256 = vmatprep.subr.bf16.mxu0 0
      %3257 = vmatpush2.bf16.msra.mxu0 0
      %3258 = vmatprep.subr.bf16.mxu0 0
      %3259 = vmatpush2.bf16.msra.mxu0 0
      %3260 = vmatprep.subr.bf16.mxu0 0
      %3261 = vmatpush2.bf16.msra.mxu0 0
      %3262 = vmatprep.mubr.bf16.mxu0 0
      %3263 = vmatmul.mubr.bf16.gmra.mxu0 %v3225
      %v3264 = vpop.f32.mrf.mxu0
      %v3265 = vadd.f32 0.0, %v3264
      %v3266 = vpop.f32.mrf.mxu0
      %v3267 = vpop.f32.mrf.mxu0
      %v3268 = vadd.f32 0.0, %v3267
      %v3269 = vpop.f32.mrf.mxu0
      %3270 = vmatprep.mubr.bf16.mxu0 0
      %3271 = vmatmul.mubr.bf16.gmra.mxu0 %v3228
      %v3272 = vpop.f32.mrf.mxu0
      %v3273 = vadd.f32 0.0, %v3272
      %v3274 = vpop.f32.mrf.mxu0
      %v3275 = vpop.f32.mrf.mxu0
      %v3276 = vadd.f32 0.0, %v3275
      %v3277 = vpop.f32.mrf.mxu0
      %3278 = vdwg.mxu0
      %v3279 = vld [vmem:[%s1226] sm:$0xff]
      %v3280 = vld [vmem:[%s1226 + $0x8] sm:$0xff]
      %v3281 = vld [vmem:[%s1226 + $0x10] sm:$0xff]
      %v3282 = vld [vmem:[%s1226 + $0x18] sm:$0xff]
      %v3283 = vadd.f32 %v3279, %v3265
      %v3284 = vadd.f32 %v3280, %v3268
      %v3285 = vadd.f32 %v3281, %v3273
      %v3286 = vadd.f32 %v3282, %v3276
      %3287 = vst.msk [vmem:[%s1226] sm:$0xff] %vm1216, %v3283
      %3288 = vst.msk [vmem:[%s1226 + $0x8] sm:$0xff] %vm1216, %v3284
      %3289 = vst.msk [vmem:[%s1226 + $0x10] sm:$0xff] %vm1216, %v3285
      %3290 = vst.msk [vmem:[%s1226 + $0x18] sm:$0xff] %vm1216, %v3286
      %s3291 = scalar_lea.vmem [#allocation2], 16
      %v3292 = vld [vmem:[%s3291] sm:$0xf]
      %v3293 = vld [vmem:[%s3291 + $0x4] sm:$0x1]
      %v3294 = vld [vmem:[%s3291 + $0x8] sm:$0xf]
      %v3295 = vld [vmem:[%s3291 + $0xc] sm:$0x1]
      %v3296 = vld [vmem:[%s3291 + $0x10] sm:$0xf]
      %v3297 = vld [vmem:[%s3291 + $0x14] sm:$0x1]
      %v3298 = vld [vmem:[%s3291 + $0x18] sm:$0xf]
      %v3299 = vld [vmem:[%s3291 + $0x1c] sm:$0x1]
      %v3301 = vshrl.u32 %v3292, 16
      %v3303 = vrot.slane %v3301, 4
      %v3304 = vshll.u32 %v3292, 16
      %v3306 = vrot.slane %v3304, 5
      %v3307 = vor.u32 %v3303, %v3306
      %v3308 = vrot.slane %v3307, 4
      %v3310 = vshll.u32 %v3293, 16
      %v3312 = vrot.slane %v3310, 5
      %v3313 = vsel %vm1336, %v3308, %v3312
      %v3315 = vshrl.u32 %v3294, 16
      %v3317 = vrot.slane %v3315, 4
      %v3318 = vshll.u32 %v3294, 16
      %v3320 = vrot.slane %v3318, 5
      %v3321 = vor.u32 %v3317, %v3320
      %v3322 = vrot.slane %v3321, 4
      %v3324 = vshll.u32 %v3295, 16
      %v3326 = vrot.slane %v3324, 5
      %v3327 = vsel %vm1336, %v3322, %v3326
      %v3329 = vshrl.u32 %v3296, 16
      %v3331 = vrot.slane %v3329, 4
      %v3332 = vshll.u32 %v3296, 16
      %v3334 = vrot.slane %v3332, 5
      %v3335 = vor.u32 %v3331, %v3334
      %v3336 = vrot.slane %v3335, 4
      %v3338 = vshll.u32 %v3297, 16
      %v3340 = vrot.slane %v3338, 5
      %v3341 = vsel %vm1336, %v3336, %v3340
      %v3343 = vshrl.u32 %v3298, 16
      %v3345 = vrot.slane %v3343, 4
      %v3346 = vshll.u32 %v3298, 16
      %v3348 = vrot.slane %v3346, 5
      %v3349 = vor.u32 %v3345, %v3348
      %v3350 = vrot.slane %v3349, 4
      %v3352 = vshll.u32 %v3299, 16
      %v3354 = vrot.slane %v3352, 5
      %v3355 = vsel %vm1336, %v3350, %v3354
      %s3356 = scalar_lea.vmem %s3, 48
      %v3357 = vld [vmem:[%s3356] sm:$0xf]
      %v3358 = vld [vmem:[%s3356 + $0x4] sm:$0xf]
      %v3359 = vunpack.c.l.b16 %v3313
      %v3360 = vunpack.c.l.b16 %v3327
      %v3361 = vunpack.c.l.b16 %v3341
      %v3362 = vunpack.c.l.b16 %v3355
      %v3363 = vpack.c.b16 %v3360, %v3359
      %v3364 = vpack.c.b16 %v3362, %v3361
      %v3367 = vunpack.c.l.b16 %v3357
      %v3368 = vunpack.c.l.b16 %v3358
      %v3369 = vpack.c.b16 %v3368, %v3367
      %v3372 = vsel %vm1258, %v3363, 0
      %v3375 = vsel %vm1258, %v3364, 0
      %3377 = vmatprep.subr.bf16.mxu0 0
      %3378 = vmatpush1.bf16.msra.mxu0 0
      %3379 = vmatprep.subr.bf16.mxu0 0
      %3380 = vmatpush1.bf16.msra.mxu0 0
      %3381 = vmatprep.subr.bf16.mxu0 0
      %3382 = vmatpush1.bf16.msra.mxu0 0
      %3383 = vmatprep.subr.bf16.mxu0 0
      %3384 = vmatpush1.bf16.msra.mxu0 0
      %3385 = vmatprep.subr.bf16.mxu0 0
      %3386 = vmatpush1.bf16.msra.mxu0 0
      %3387 = vmatprep.subr.bf16.mxu0 0
      %3388 = vmatpush1.bf16.msra.mxu0 0
      %3389 = vmatprep.subr.bf16.mxu0 0
      %3390 = vmatpush1.bf16.msra.mxu0 0
      %3391 = vmatprep.subr.bf16.mxu0 0
      %3392 = vmatpush1.bf16.msra.mxu0 %v3369
      %3393 = vmatprep.subr.bf16.mxu0 0
      %3394 = vmatpush2.bf16.msra.mxu0 0
      %3395 = vmatprep.subr.bf16.mxu0 0
      %3396 = vmatpush2.bf16.msra.mxu0 0
      %3397 = vmatprep.subr.bf16.mxu0 0
      %3398 = vmatpush2.bf16.msra.mxu0 0
      %3399 = vmatprep.subr.bf16.mxu0 0
      %3400 = vmatpush2.bf16.msra.mxu0 0
      %3401 = vmatprep.subr.bf16.mxu0 0
      %3402 = vmatpush2.bf16.msra.mxu0 0
      %3403 = vmatprep.subr.bf16.mxu0 0
      %3404 = vmatpush2.bf16.msra.mxu0 0
      %3405 = vmatprep.subr.bf16.mxu0 0
      %3406 = vmatpush2.bf16.msra.mxu0 0
      %3407 = vmatprep.subr.bf16.mxu0 0
      %3408 = vmatpush2.bf16.msra.mxu0 0
      %3409 = vmatprep.mubr.bf16.mxu0 0
      %3410 = vmatmul.mubr.bf16.gmra.mxu0 %v3372
      %v3411 = vpop.f32.mrf.mxu0
      %v3412 = vadd.f32 0.0, %v3411
      %v3413 = vpop.f32.mrf.mxu0
      %v3414 = vpop.f32.mrf.mxu0
      %v3415 = vadd.f32 0.0, %v3414
      %v3416 = vpop.f32.mrf.mxu0
      %3417 = vmatprep.mubr.bf16.mxu0 0
      %3418 = vmatmul.mubr.bf16.gmra.mxu0 %v3375
      %v3419 = vpop.f32.mrf.mxu0
      %v3420 = vadd.f32 0.0, %v3419
      %v3421 = vpop.f32.mrf.mxu0
      %v3422 = vpop.f32.mrf.mxu0
      %v3423 = vadd.f32 0.0, %v3422
      %v3424 = vpop.f32.mrf.mxu0
      %3425 = vdwg.mxu0
      %v3426 = vld [vmem:[%s1226] sm:$0xff]
      %v3427 = vld [vmem:[%s1226 + $0x8] sm:$0xff]
      %v3428 = vld [vmem:[%s1226 + $0x10] sm:$0xff]
      %v3429 = vld [vmem:[%s1226 + $0x18] sm:$0xff]
      %v3430 = vadd.f32 %v3426, %v3412
      %v3431 = vadd.f32 %v3427, %v3415
      %v3432 = vadd.f32 %v3428, %v3420
      %v3433 = vadd.f32 %v3429, %v3423
      %3434 = vst.msk [vmem:[%s1226] sm:$0xff] %vm1216, %v3430
      %3435 = vst.msk [vmem:[%s1226 + $0x8] sm:$0xff] %vm1216, %v3431
      %3436 = vst.msk [vmem:[%s1226 + $0x10] sm:$0xff] %vm1216, %v3432
      %3437 = vst.msk [vmem:[%s1226 + $0x18] sm:$0xff] %vm1216, %v3433
      %v3438 = vld [vmem:[%s1231] sm:$0xff]
      %v3439 = vld [vmem:[%s1231 + $0x8] sm:$0xff]
      %v3440 = vld [vmem:[%s1231 + $0x10] sm:$0xff]
      %v3441 = vld [vmem:[%s1231 + $0x18] sm:$0xff]
      %3446 = vrot.lane.b32.xlu0 %v3412, 120
      %v3447 = vpop.permute.xlu0 %3446
      %3448 = vrot.lane.b32.xlu0 %v3415, 120
      %v3449 = vpop.permute.xlu0 %3448
      %3450 = vrot.lane.b32.xlu0 %v3420, 120
      %v3451 = vpop.permute.xlu0 %3450
      %3452 = vrot.lane.b32.xlu0 %v3423, 120
      %v3453 = vpop.permute.xlu0 %3452
      %v3458 = vadd.f32 %v3438, %v3447
      %v3459 = vadd.f32 %v3439, %v3449
      %v3460 = vadd.f32 %v3440, %v3451
      %v3461 = vadd.f32 %v3441, %v3453
      %3462 = vst.msk [vmem:[%s1231] sm:$0xff] %vm1216, %v3458
      %3463 = vst.msk [vmem:[%s1231 + $0x8] sm:$0xff] %vm1216, %v3459
      %3464 = vst.msk [vmem:[%s1231 + $0x10] sm:$0xff] %vm1216, %v3460
      %3465 = vst.msk [vmem:[%s1231 + $0x18] sm:$0xff] %vm1216, %v3461
      %v3466 = vld [vmem:[%s3200] sm:$0xf]
      %v3467 = vld [vmem:[%s3200 + $0x4] sm:$0x1]
      %v3468 = vld [vmem:[%s3200 + $0x8] sm:$0xf]
      %v3469 = vld [vmem:[%s3200 + $0xc] sm:$0x1]
      %v3470 = vld [vmem:[%s3200 + $0x10] sm:$0xf]
      %v3471 = vld [vmem:[%s3200 + $0x14] sm:$0x1]
      %v3472 = vld [vmem:[%s3200 + $0x18] sm:$0xf]
      %v3473 = vld [vmem:[%s3200 + $0x1c] sm:$0x1]
      %v3475 = vshrl.u32 %v3466, 16
      %v3477 = vrot.slane %v3475, 4
      %v3478 = vshll.u32 %v3466, 16
      %v3480 = vrot.slane %v3478, 5
      %v3481 = vor.u32 %v3477, %v3480
      %v3482 = vrot.slane %v3481, 4
      %v3484 = vshll.u32 %v3467, 16
      %v3486 = vrot.slane %v3484, 5
      %v3487 = vsel %vm1336, %v3482, %v3486
      %v3489 = vshrl.u32 %v3468, 16
      %v3491 = vrot.slane %v3489, 4
      %v3492 = vshll.u32 %v3468, 16
      %v3494 = vrot.slane %v3492, 5
      %v3495 = vor.u32 %v3491, %v3494
      %v3496 = vrot.slane %v3495, 4
      %v3498 = vshll.u32 %v3469, 16
      %v3500 = vrot.slane %v3498, 5
      %v3501 = vsel %vm1336, %v3496, %v3500
      %v3503 = vshrl.u32 %v3470, 16
      %v3505 = vrot.slane %v3503, 4
      %v3506 = vshll.u32 %v3470, 16
      %v3508 = vrot.slane %v3506, 5
      %v3509 = vor.u32 %v3505, %v3508
      %v3510 = vrot.slane %v3509, 4
      %v3512 = vshll.u32 %v3471, 16
      %v3514 = vrot.slane %v3512, 5
      %v3515 = vsel %vm1336, %v3510, %v3514
      %v3517 = vshrl.u32 %v3472, 16
      %v3519 = vrot.slane %v3517, 4
      %v3520 = vshll.u32 %v3472, 16
      %v3522 = vrot.slane %v3520, 5
      %v3523 = vor.u32 %v3519, %v3522
      %v3524 = vrot.slane %v3523, 4
      %v3526 = vshll.u32 %v3473, 16
      %v3528 = vrot.slane %v3526, 5
      %v3529 = vsel %vm1336, %v3524, %v3528
      %s3530 = scalar_lea.vmem %s3, 56
      %v3531 = vld [vmem:[%s3530] sm:$0xf]
      %v3532 = vld [vmem:[%s3530 + $0x4] sm:$0xf]
      %v3533 = vunpack.c.l.b16 %v3487
      %v3534 = vunpack.c.l.b16 %v3501
      %v3535 = vunpack.c.l.b16 %v3515
      %v3536 = vunpack.c.l.b16 %v3529
      %v3537 = vpack.c.b16 %v3534, %v3533
      %v3538 = vpack.c.b16 %v3536, %v3535
      %v3541 = vunpack.c.l.b16 %v3531
      %v3542 = vunpack.c.l.b16 %v3532
      %v3543 = vpack.c.b16 %v3542, %v3541
      %v3546 = vsel %vm1258, %v3537, 0
      %v3549 = vsel %vm1258, %v3538, 0
      %3551 = vmatprep.subr.bf16.mxu0 0
      %3552 = vmatpush1.bf16.msra.mxu0 0
      %3553 = vmatprep.subr.bf16.mxu0 0
      %3554 = vmatpush1.bf16.msra.mxu0 0
      %3555 = vmatprep.subr.bf16.mxu0 0
      %3556 = vmatpush1.bf16.msra.mxu0 0
      %3557 = vmatprep.subr.bf16.mxu0 0
      %3558 = vmatpush1.bf16.msra.mxu0 0
      %3559 = vmatprep.subr.bf16.mxu0 0
      %3560 = vmatpush1.bf16.msra.mxu0 0
      %3561 = vmatprep.subr.bf16.mxu0 0
      %3562 = vmatpush1.bf16.msra.mxu0 0
      %3563 = vmatprep.subr.bf16.mxu0 0
      %3564 = vmatpush1.bf16.msra.mxu0 0
      %3565 = vmatprep.subr.bf16.mxu0 0
      %3566 = vmatpush1.bf16.msra.mxu0 %v3543
      %3567 = vmatprep.subr.bf16.mxu0 0
      %3568 = vmatpush2.bf16.msra.mxu0 0
      %3569 = vmatprep.subr.bf16.mxu0 0
      %3570 = vmatpush2.bf16.msra.mxu0 0
      %3571 = vmatprep.subr.bf16.mxu0 0
      %3572 = vmatpush2.bf16.msra.mxu0 0
      %3573 = vmatprep.subr.bf16.mxu0 0
      %3574 = vmatpush2.bf16.msra.mxu0 0
      %3575 = vmatprep.subr.bf16.mxu0 0
      %3576 = vmatpush2.bf16.msra.mxu0 0
      %3577 = vmatprep.subr.bf16.mxu0 0
      %3578 = vmatpush2.bf16.msra.mxu0 0
      %3579 = vmatprep.subr.bf16.mxu0 0
      %3580 = vmatpush2.bf16.msra.mxu0 0
      %3581 = vmatprep.subr.bf16.mxu0 0
      %3582 = vmatpush2.bf16.msra.mxu0 0
      %3583 = vmatprep.mubr.bf16.mxu0 0
      %3584 = vmatmul.mubr.bf16.gmra.mxu0 %v3546
      %v3585 = vpop.f32.mrf.mxu0
      %v3586 = vadd.f32 0.0, %v3585
      %v3587 = vpop.f32.mrf.mxu0
      %v3588 = vpop.f32.mrf.mxu0
      %v3589 = vadd.f32 0.0, %v3588
      %v3590 = vpop.f32.mrf.mxu0
      %3591 = vmatprep.mubr.bf16.mxu0 0
      %3592 = vmatmul.mubr.bf16.gmra.mxu0 %v3549
      %v3593 = vpop.f32.mrf.mxu0
      %v3594 = vadd.f32 0.0, %v3593
      %v3595 = vpop.f32.mrf.mxu0
      %v3596 = vpop.f32.mrf.mxu0
      %v3597 = vadd.f32 0.0, %v3596
      %v3598 = vpop.f32.mrf.mxu0
      %3599 = vdwg.mxu0
      %v3600 = vld [vmem:[%s1226] sm:$0xff]
      %v3601 = vld [vmem:[%s1226 + $0x8] sm:$0xff]
      %v3602 = vld [vmem:[%s1226 + $0x10] sm:$0xff]
      %v3603 = vld [vmem:[%s1226 + $0x18] sm:$0xff]
      %v3604 = vadd.f32 %v3600, %v3586
      %v3605 = vadd.f32 %v3601, %v3589
      %v3606 = vadd.f32 %v3602, %v3594
      %v3607 = vadd.f32 %v3603, %v3597
      %3608 = vst.msk [vmem:[%s1226] sm:$0xff] %vm1216, %v3604
      %3609 = vst.msk [vmem:[%s1226 + $0x8] sm:$0xff] %vm1216, %v3605
      %3610 = vst.msk [vmem:[%s1226 + $0x10] sm:$0xff] %vm1216, %v3606
      %3611 = vst.msk [vmem:[%s1226 + $0x18] sm:$0xff] %vm1216, %v3607
      %v3612 = vld [vmem:[%s1231] sm:$0xff]
      %v3613 = vld [vmem:[%s1231 + $0x8] sm:$0xff]
      %v3614 = vld [vmem:[%s1231 + $0x10] sm:$0xff]
      %v3615 = vld [vmem:[%s1231 + $0x18] sm:$0xff]
      %3620 = vrot.lane.b32.xlu0 %v3586, 120
      %v3621 = vpop.permute.xlu0 %3620
      %3622 = vrot.lane.b32.xlu0 %v3589, 120
      %v3623 = vpop.permute.xlu0 %3622
      %3624 = vrot.lane.b32.xlu0 %v3594, 120
      %v3625 = vpop.permute.xlu0 %3624
      %3626 = vrot.lane.b32.xlu0 %v3597, 120
      %v3627 = vpop.permute.xlu0 %3626
      %v3632 = vadd.f32 %v3612, %v3621
      %v3633 = vadd.f32 %v3613, %v3623
      %v3634 = vadd.f32 %v3614, %v3625
      %v3635 = vadd.f32 %v3615, %v3627
      %3636 = vst.msk [vmem:[%s1231] sm:$0xff] %vm1216, %v3632
      %3637 = vst.msk [vmem:[%s1231 + $0x8] sm:$0xff] %vm1216, %v3633
      %3638 = vst.msk [vmem:[%s1231 + $0x10] sm:$0xff] %vm1216, %v3634
      %3639 = vst.msk [vmem:[%s1231 + $0x18] sm:$0xff] %vm1216, %v3635
      %v3640 = vld [vmem:[%s3291] sm:$0xe]
      %v3641 = vld [vmem:[%s3291 + $0x4] sm:$0x1]
      %v3642 = vld [vmem:[%s3291 + $0x8] sm:$0xe]
      %v3643 = vld [vmem:[%s3291 + $0xc] sm:$0x1]
      %v3644 = vld [vmem:[%s3291 + $0x10] sm:$0xe]
      %v3645 = vld [vmem:[%s3291 + $0x14] sm:$0x1]
      %v3646 = vld [vmem:[%s3291 + $0x18] sm:$0xe]
      %v3647 = vld [vmem:[%s3291 + $0x1c] sm:$0x1]
      %v3656 = vrot.slane %v3640, 5
      %v3657 = vrot.slane %v3656, 4
      %v3658 = vrot.slane %v3641, 5
      %v3659 = vsel %vm1694, %v3657, %v3658
      %v3660 = vrot.slane %v3642, 5
      %v3661 = vrot.slane %v3660, 4
      %v3662 = vrot.slane %v3643, 5
      %v3663 = vsel %vm1694, %v3661, %v3662
      %v3664 = vrot.slane %v3644, 5
      %v3665 = vrot.slane %v3664, 4
      %v3666 = vrot.slane %v3645, 5
      %v3667 = vsel %vm1694, %v3665, %v3666
      %v3668 = vrot.slane %v3646, 5
      %v3669 = vrot.slane %v3668, 4
      %v3670 = vrot.slane %v3647, 5
      %v3671 = vsel %vm1694, %v3669, %v3670
      %s3672 = scalar_lea.vmem %s2, 24
      %v3673 = vld [vmem:[%s3672] sm:$0xf]
      %v3674 = vld [vmem:[%s3672 + $0x4] sm:$0xf]
      %v3675 = vunpack.c.l.b16 %v3659
      %v3676 = vunpack.c.l.b16 %v3663
      %v3677 = vunpack.c.l.b16 %v3667
      %v3678 = vunpack.c.l.b16 %v3671
      %v3679 = vpack.c.b16 %v3676, %v3675
      %v3680 = vpack.c.b16 %v3678, %v3677
      %v3683 = vunpack.c.l.b16 %v3673
      %v3684 = vunpack.c.l.b16 %v3674
      %v3685 = vpack.c.b16 %v3684, %v3683
      %v3688 = vsel %vm1258, %v3679, 0
      %v3691 = vsel %vm1258, %v3680, 0
      %3693 = vmatprep.subr.bf16.mxu0 0
      %3694 = vmatpush1.bf16.msra.mxu0 0
      %3695 = vmatprep.subr.bf16.mxu0 0
      %3696 = vmatpush1.bf16.msra.mxu0 0
      %3697 = vmatprep.subr.bf16.mxu0 0
      %3698 = vmatpush1.bf16.msra.mxu0 0
      %3699 = vmatprep.subr.bf16.mxu0 0
      %3700 = vmatpush1.bf16.msra.mxu0 0
      %3701 = vmatprep.subr.bf16.mxu0 0
      %3702 = vmatpush1.bf16.msra.mxu0 0
      %3703 = vmatprep.subr.bf16.mxu0 0
      %3704 = vmatpush1.bf16.msra.mxu0 0
      %3705 = vmatprep.subr.bf16.mxu0 0
      %3706 = vmatpush1.bf16.msra.mxu0 0
      %3707 = vmatprep.subr.bf16.mxu0 0
      %3708 = vmatpush1.bf16.msra.mxu0 %v3685
      %3709 = vmatprep.subr.bf16.mxu0 0
      %3710 = vmatpush2.bf16.msra.mxu0 0
      %3711 = vmatprep.subr.bf16.mxu0 0
      %3712 = vmatpush2.bf16.msra.mxu0 0
      %3713 = vmatprep.subr.bf16.mxu0 0
      %3714 = vmatpush2.bf16.msra.mxu0 0
      %3715 = vmatprep.subr.bf16.mxu0 0
      %3716 = vmatpush2.bf16.msra.mxu0 0
      %3717 = vmatprep.subr.bf16.mxu0 0
      %3718 = vmatpush2.bf16.msra.mxu0 0
      %3719 = vmatprep.subr.bf16.mxu0 0
      %3720 = vmatpush2.bf16.msra.mxu0 0
      %3721 = vmatprep.subr.bf16.mxu0 0
      %3722 = vmatpush2.bf16.msra.mxu0 0
      %3723 = vmatprep.subr.bf16.mxu0 0
      %3724 = vmatpush2.bf16.msra.mxu0 0
      %3725 = vmatprep.mubr.bf16.mxu0 0
      %3726 = vmatmul.mubr.bf16.gmra.mxu0 %v3688
      %v3727 = vpop.f32.mrf.mxu0
      %v3728 = vadd.f32 0.0, %v3727
      %v3729 = vpop.f32.mrf.mxu0
      %v3730 = vpop.f32.mrf.mxu0
      %v3731 = vadd.f32 0.0, %v3730
      %v3732 = vpop.f32.mrf.mxu0
      %3733 = vmatprep.mubr.bf16.mxu0 0
      %3734 = vmatmul.mubr.bf16.gmra.mxu0 %v3691
      %v3735 = vpop.f32.mrf.mxu0
      %v3736 = vadd.f32 0.0, %v3735
      %v3737 = vpop.f32.mrf.mxu0
      %v3738 = vpop.f32.mrf.mxu0
      %v3739 = vadd.f32 0.0, %v3738
      %v3740 = vpop.f32.mrf.mxu0
      %3741 = vdwg.mxu0
      %v3742 = vld [vmem:[%s1231] sm:$0xff]
      %v3743 = vld [vmem:[%s1231 + $0x8] sm:$0xff]
      %v3744 = vld [vmem:[%s1231 + $0x10] sm:$0xff]
      %v3745 = vld [vmem:[%s1231 + $0x18] sm:$0xff]
      %v3746 = vadd.f32 %v3742, %v3728
      %v3747 = vadd.f32 %v3743, %v3731
      %v3748 = vadd.f32 %v3744, %v3736
      %v3749 = vadd.f32 %v3745, %v3739
      %3750 = vst.msk [vmem:[%s1231] sm:$0xff] %vm1216, %v3746
      %3751 = vst.msk [vmem:[%s1231 + $0x8] sm:$0xff] %vm1216, %v3747
      %3752 = vst.msk [vmem:[%s1231 + $0x10] sm:$0xff] %vm1216, %v3748
      %3753 = vst.msk [vmem:[%s1231 + $0x18] sm:$0xff] %vm1216, %v3749
      %v3754 = vld [vmem:[#allocation3] sm:$0xff]
      %v3755 = vld [vmem:[#allocation3 + $0x8] sm:$0xff]
      %v3756 = vld [vmem:[#allocation3 + $0x10] sm:$0xff]
      %v3757 = vld [vmem:[#allocation3 + $0x18] sm:$0xff]
      %v3758 = vmax.f32 %v3754, 0.0
      %v3759 = vmax.f32 %v3755, 0.0
      %v3760 = vmax.f32 %v3756, 0.0
      %v3761 = vmax.f32 %v3757, 0.0
      %v3762 = vld [vmem:[%s1221] sm:$0xff]
      %v3763 = vld [vmem:[%s1221 + $0x8] sm:$0xff]
      %v3764 = vld [vmem:[%s1221 + $0x10] sm:$0xff]
      %v3765 = vld [vmem:[%s1221 + $0x18] sm:$0xff]
      %v3766 = vmax.f32 %v3762, 0.0
      %v3767 = vmax.f32 %v3763, 0.0
      %v3768 = vmax.f32 %v3764, 0.0
      %v3769 = vmax.f32 %v3765, 0.0
      %3774 = vrot.lane.b32.xlu0 %v3766, 8
      %v3775 = vpop.permute.xlu0 %3774
      %3776 = vrot.lane.b32.xlu0 %v3767, 8
      %v3777 = vpop.permute.xlu0 %3776
      %3778 = vrot.lane.b32.xlu0 %v3768, 8
      %v3779 = vpop.permute.xlu0 %3778
      %3780 = vrot.lane.b32.xlu0 %v3769, 8
      %v3781 = vpop.permute.xlu0 %3780
      %v3786 = vsel %vm1216, %v3758, %v3775
      %v3787 = vsel %vm1216, %v3759, %v3777
      %v3788 = vsel %vm1216, %v3760, %v3779
      %v3789 = vsel %vm1216, %v3761, %v3781
      %3790 = vst.msk [vmem:[%s295] sm:$0xff] %vm1258, %v3786
      %3791 = vst.msk [vmem:[%s295 + $0x10] sm:$0xff] %vm1258, %v3787
      %3792 = vst.msk [vmem:[%s295 + $0x20] sm:$0xff] %vm1258, %v3788
      %3793 = vst.msk [vmem:[%s295 + $0x30] sm:$0xff] %vm1258, %v3789
      %v3794 = vld [vmem:[%s1226] sm:$0xff]
      %v3795 = vld [vmem:[%s1226 + $0x8] sm:$0xff]
      %v3796 = vld [vmem:[%s1226 + $0x10] sm:$0xff]
      %v3797 = vld [vmem:[%s1226 + $0x18] sm:$0xff]
      %v3798 = vmax.f32 %v3794, 0.0
      %v3799 = vmax.f32 %v3795, 0.0
      %v3800 = vmax.f32 %v3796, 0.0
      %v3801 = vmax.f32 %v3797, 0.0
      %v3802 = vld [vmem:[%s1231] sm:$0xff]
      %v3803 = vld [vmem:[%s1231 + $0x8] sm:$0xff]
      %v3804 = vld [vmem:[%s1231 + $0x10] sm:$0xff]
      %v3805 = vld [vmem:[%s1231 + $0x18] sm:$0xff]
      %v3806 = vmax.f32 %v3802, 0.0
      %v3807 = vmax.f32 %v3803, 0.0
      %v3808 = vmax.f32 %v3804, 0.0
      %v3809 = vmax.f32 %v3805, 0.0
      %3814 = vrot.lane.b32.xlu0 %v3806, 8
      %v3815 = vpop.permute.xlu0 %3814
      %3816 = vrot.lane.b32.xlu0 %v3807, 8
      %v3817 = vpop.permute.xlu0 %3816
      %3818 = vrot.lane.b32.xlu0 %v3808, 8
      %v3819 = vpop.permute.xlu0 %3818
      %3820 = vrot.lane.b32.xlu0 %v3809, 8
      %v3821 = vpop.permute.xlu0 %3820
      %v3826 = vsel %vm1216, %v3798, %v3815
      %v3827 = vsel %vm1216, %v3799, %v3817
      %v3828 = vsel %vm1216, %v3800, %v3819
      %v3829 = vsel %vm1216, %v3801, %v3821
      %s3830 = scalar_lea.vmem %s295, 8
      %3831 = vst.msk [vmem:[%s3830] sm:$0xff] %vm1258, %v3826
      %3832 = vst.msk [vmem:[%s3830 + $0x10] sm:$0xff] %vm1258, %v3827
      %3833 = vst.msk [vmem:[%s3830 + $0x20] sm:$0xff] %vm1258, %v3828
      %3834 = vst.msk [vmem:[%s3830 + $0x30] sm:$0xff] %vm1258, %v3829
      %s3835 = smul.u32 4, %s22
      %p3836 = scmp.lt.s32.totalorder %s21, 1
      %s3837 = scalar_select %p3836, %s21, 1
      %p3838 = scmp.lt.s32.totalorder %s3835, 7
      %s3839 = scalar_select %p3838, %s3835, 7
      %s3840 = smul.addr %s3839, 2
      %s3841 = smul.addr %s3837, 16
      %s3842 = sadd.s32 %s3840, %s3841
      %s3843 = smul.addr %s3842, 8
      %s3844 = scalar_lea.vmem %s6, %s3843
      // Predicated region
      $region53: #{up_forward.1} parent=43 // pred_check
        %p3845 = pneg %p185
      $region54: #{up_forward.1} parent=43 // pred_check_branch
        %3847 = sbr.rel (%p3845) target = $region56
      $region55: #{up_forward.1} parent=43 // pred_region
        %s3848 = smul.u32 4, %s22
      $region56: #{up_forward.1} parent=43 // pred_fallthru
        _
    $region44: #{up_forward.1} parent=5 // pred_fallthru
      _
    %p3849 = scmp.le.s32.totalorder 2, %s12
    // Predicated region
    $region57: #{up_forward.1} parent=5 // pred_check
      %p3850 = pneg %p3849
    $region58: #{up_forward.1} parent=5 // pred_check_branch
      %3852 = sbr.rel (%p3850) target = $region60
    $region59: #{up_forward.1} parent=5 // pred_region
      %s3853 = ssub.s32 %s12, 2
      // Predicated region
      $region61: #{up_forward.1} parent=59 // pred_check
        %p3854 = pneg %p191
      $region62: #{up_forward.1} parent=59 // pred_check_branch
        %3856 = sbr.rel (%p3854) target = $region64
      $region63: #{up_forward.1} parent=59 // pred_region
        %s3857 = smul.u32 4, %s24
        %p3858 = scmp.lt.s32.totalorder %s23, 1
        %s3859 = scalar_select %p3858, %s23, 1
        %p3860 = scmp.lt.s32.totalorder %s3857, 7
        %s3861 = scalar_select %p3860, %s3857, 7
        %s3862 = smul.addr %s3861, 2
        %s3863 = smul.addr %s3859, 16
        %s3864 = sadd.s32 %s3862, %s3863
        %s3865 = smul.addr %s3864, 8
        %s3866 = scalar_lea.vmem %s6, %s3865
      $region64: #{up_forward.1} parent=59 // pred_fallthru
        _
    $region60: #{up_forward.1} parent=5 // pred_fallthru
      _
  $region6: #{up_forward.1} parent=0 // loop_footer
    %s16 = sadd.s32 1, %s12
  $region7: #{up_forward.1} parent=0 // loop_footer_branch
    %11 = sbr.rel target = $region3
  $region8: #{up_forward.1} parent=0 // loop_exit
    _

</llo_original>
